<compile_context>
chip_gen: v7x
topology: tpu7x:2x2x1
jax: 0.10.0
libtpu: 0.0.40
codegen_flags: <defaults>
</compile_context>

<pallas_src>
import jax
import jax.numpy as jnp
from jax.experimental import pallas as pl
from jax.experimental.pallas import tpu as pltpu


def _roll_right(x, s):
    """Cyclic lane roll with static shift: out[..., l] = x[..., (l - s) mod width]."""
    return jnp.concatenate([x[..., -s:], x[..., :-s]], axis=-1)


def make_tts_block_kernel(T, S, NH, NKV, HD, I, TILE_T, eps):
    """Builds the fused kernel body with all static shape constants closed over."""
    scaling = HD ** -0.5
    KVS = NKV * HD
    half = HD // 2
    G = NH // NKV

    bf16 = jnp.bfloat16
    f32 = jnp.float32

    def rmsnorm(x, w):
        var = jnp.mean(x * x, axis=-1, keepdims=True)
        return x * jax.lax.rsqrt(var + eps) * w

    def rope(x, cos_w, sin_a, sin_b):
        # Vectorized neox rotation across all heads at once.
        # Tables have the same lane width as x; sin_a is -sin on first-half lanes
        # (0 elsewhere), sin_b is +sin on second-half lanes (0 elsewhere), so the
        # cyclic-roll wraparound lands only where the table is zero.
        w = x.shape[-1]
        x_plus = _roll_right(x, w - half)   # lane l <- x[l + half]
        x_minus = _roll_right(x, half)      # lane l <- x[l - half]
        return x * cos_w + x_plus * sin_a + x_minus * sin_b

    def attend(q, k, v, Tq, Tk, causal, row0):
        # q: [Tq, NH*HD] bf16; k, v: [Tk, NKV*HD] bf16.
        # GQA: stack the G query heads of each kv group along the M (sublane)
        # axis -> one QK^T and one PV matmul per kv group.
        mask = None
        if causal:
            q_idx = jnp.concatenate(
                [jax.lax.broadcasted_iota(jnp.int32, (Tq, Tk), 0)] * G, axis=0) + row0
            k_idx = jax.lax.broadcasted_iota(jnp.int32, (G * Tq, Tk), 1)
            mask = k_idx <= q_idx                      # built once per call
        head_out = [None] * NH
        for g in range(NKV):
            qg = jnp.concatenate(
                [q[:, (g * G + j) * HD:(g * G + j + 1) * HD] for j in range(G)],
                axis=0)                                 # [G*Tq, HD]
            kg = k[:, g * HD:(g + 1) * HD]              # [Tk, HD]
            vg = v[:, g * HD:(g + 1) * HD]              # [Tk, HD]
            s = jax.lax.dot_general(                    # q @ k^T (NT layout)
                qg, kg, (((1,), (1,)), ((), ())),
                preferred_element_type=f32) * scaling   # [G*Tq, Tk]
            if causal:
                s = jnp.where(mask, s, -1e30)           # finite mask (NaN-safe)
            m = jnp.max(s, axis=-1, keepdims=True)
            p = jnp.exp(s - m)
            denom = jnp.sum(p, axis=-1, keepdims=True)
            p = p * pl.reciprocal(denom, approx=True)
            og = jnp.dot(p.astype(bf16), vg, preferred_element_type=f32)  # [G*Tq, HD]
            for j in range(G):
                head_out[g * G + j] = og[j * Tq:(j + 1) * Tq, :]
        return jnp.concatenate(head_out, axis=-1)       # [Tq, NH*HD] f32

    def kernel(x_ref, enc_ref, cos_ref, sina_ref, sinb_ref,
               ln1_ref, wq1_ref, wkv1_ref, wo1_ref,
               ln2_ref, wq2_ref, wkv2_ref, wo2_ref,
               ln3_ref, wgu_ref, wdn_ref,
               out_ref,
               kself_ref, vself_ref, kcross_ref, vcross_ref):
        i = pl.program_id(0)

        # ---- one-time prep (grid step 0): self-attn K/V over all T, cross K/V ----
        @pl.when(i == 0)
        def _prep():
            x_all = x_ref[...]
            h_all = rmsnorm(x_all, ln1_ref[...]).astype(bf16)
            kv = jnp.dot(h_all, wkv1_ref[...], preferred_element_type=f32)  # [T, 2*KVS]
            cos_all = cos_ref[...]
            sina_all = sina_ref[...]
            sinb_all = sinb_ref[...]
            k_rot = rope(kv[:, :KVS], cos_all[:, :KVS],
                         sina_all[:, :KVS], sinb_all[:, :KVS])
            kself_ref[...] = k_rot.astype(bf16)
            vself_ref[...] = kv[:, KVS:].astype(bf16)

            kvc = jnp.dot(enc_ref[...].astype(bf16), wkv2_ref[...],
                          preferred_element_type=f32)                        # [S, 2*KVS]
            kcross_ref[...] = kvc[:, :KVS].astype(bf16)
            vcross_ref[...] = kvc[:, KVS:].astype(bf16)

        # ---- per-tile decoder path ----
        row0 = pl.multiple_of(i * TILE_T, TILE_T)
        x = x_ref[pl.ds(row0, TILE_T), :]               # [TILE_T, D] f32 (residual)
        cos_t = cos_ref[pl.ds(row0, TILE_T), :]
        sina_t = sina_ref[pl.ds(row0, TILE_T), :]
        sinb_t = sinb_ref[pl.ds(row0, TILE_T), :]

        # ---------------- self-attention sub-block ----------------
        h = rmsnorm(x, ln1_ref[...]).astype(bf16)
        q = jnp.dot(h, wq1_ref[...], preferred_element_type=f32)            # [TILE_T, D]
        q = rope(q, cos_t, sina_t, sinb_t).astype(bf16)
        attn = attend(q, kself_ref[...], vself_ref[...], TILE_T, T,
                      causal=True, row0=row0)
        o = jnp.dot(attn.astype(bf16), wo1_ref[...], preferred_element_type=f32)
        x = x + o

        # ---------------- cross-attention sub-block (block_idx == 0) ----------------
        h = rmsnorm(x, ln2_ref[...]).astype(bf16)
        qc = jnp.dot(h, wq2_ref[...], preferred_element_type=f32).astype(bf16)
        attn = attend(qc, kcross_ref[...], vcross_ref[...], TILE_T, S,
                      causal=False, row0=0)
        o = jnp.dot(attn.astype(bf16), wo2_ref[...], preferred_element_type=f32)
        x = x + o

        # ---------------- MLP sub-block ----------------
        h = rmsnorm(x, ln3_ref[...]).astype(bf16)
        gu = jnp.dot(h, wgu_ref[...], preferred_element_type=f32)           # [TILE_T, 2I]
        gate = gu[:, :I]
        up = gu[:, I:]
        act = (gate * jax.nn.sigmoid(gate) * up).astype(bf16)               # SiluAndMul
        o = jnp.dot(act, wdn_ref[...], preferred_element_type=f32)
        out_ref[...] = x + o

    return kernel


def tts_adapter_block(hidden, enc_hidden, positions, params, *,
                      num_heads, num_kv_heads, rope_theta, eps, block_t=128):
    T, D = hidden.shape
    S, E = enc_hidden.shape
    NH, NKV = num_heads, num_kv_heads
    assert D % NH == 0 and NH % NKV == 0
    HD = D // NH
    KVS = NKV * HD
    I = params["w_gate_up"].shape[1] // 2

    # Query tile: largest multiple of 8 that divides T and is <= block_t.
    assert T % 8 == 0, "flattened token count must be a multiple of 8"
    TILE_T = 8
    for cand in range(8, min(block_t, T) + 1, 8):
        if T % cand == 0:
            TILE_T = cand
    n_tiles = T // TILE_T

    # RoPE tables (glue): full-width per-head-periodic cos + masked-sign sin tables
    # for the roll-based vectorized neox rotation inside the kernel.
    inv_freq = 1.0 / (rope_theta ** (jnp.arange(0, HD, 2, dtype=jnp.float32) / HD))
    ang = positions.astype(jnp.float32)[:, None] * inv_freq[None, :]        # [T, HD//2]
    cos, sin = jnp.cos(ang), jnp.sin(ang)
    zeros = jnp.zeros_like(sin)
    COS = jnp.tile(jnp.concatenate([cos, cos], axis=-1), (1, NH))            # [T, D]
    SIN_A = jnp.tile(jnp.concatenate([-sin, zeros], axis=-1), (1, NH))       # first halves
    SIN_B = jnp.tile(jnp.concatenate([zeros, sin], axis=-1), (1, NH))        # second halves

    # Lane-dense encoder contraction: pad hidden_size up to a multiple of 128
    # (zero rows in the weight keep the math identical).
    E_pad = ((E + 127) // 128) * 128
    enc_p = jnp.pad(enc_hidden, ((0, 0), (0, E_pad - E)))
    w_kv_cross_p = jnp.pad(params["w_kv_cross"], ((0, E_pad - E), (0, 0)))

    bf16 = jnp.bfloat16
    # MXU operands in bf16 (f32 accumulation inside the kernel).
    w_q_self = params["w_qkv"][:, :D].astype(bf16)
    w_kv_self = params["w_qkv"][:, D:].astype(bf16)
    w_o_self = params["w_o_self"].astype(bf16)
    w_q_cross = params["w_q_cross"].astype(bf16)
    w_kv_cross = w_kv_cross_p.astype(bf16)
    w_o_cross = params["w_o_cross"].astype(bf16)
    w_gate_up = params["w_gate_up"].astype(bf16)
    w_down = params["w_down"].astype(bf16)

    kernel = make_tts_block_kernel(T, S, NH, NKV, HD, I, TILE_T, eps)

    args = (hidden, enc_p, COS, SIN_A, SIN_B,
            params["ln1"], w_q_self, w_kv_self, w_o_self,
            params["ln2"], w_q_cross, w_kv_cross, w_o_cross,
            params["ln3"], w_gate_up, w_down)

    def resident(a):
        # Whole array resident in VMEM; same block for every grid step.
        nd = a.ndim
        return pl.BlockSpec(a.shape, lambda i: (0,) * nd)

    grid_spec = pltpu.PrefetchScalarGridSpec(
        num_scalar_prefetch=0,
        grid=(n_tiles,),
        in_specs=[resident(a) for a in args],
        out_specs=pl.BlockSpec((TILE_T, D), lambda i: (i, 0)),
        scratch_shapes=[
            pltpu.VMEM((T, KVS), bf16),    # self-attn K (RoPE applied), persists across steps
            pltpu.VMEM((T, KVS), bf16),    # self-attn V
            pltpu.VMEM((S, KVS), bf16),    # cross-attn K
            pltpu.VMEM((S, KVS), bf16),    # cross-attn V
        ],
    )

    return pl.pallas_call(
        kernel,
        out_shape=jax.ShapeDtypeStruct((T, D), jnp.float32),
        grid_spec=grid_spec,
        compiler_params=pltpu.CompilerParams(
            # Step 0 fills the K/V scratch that later steps read, so the grid
            # axis must stay sequential ("arbitrary").
            dimension_semantics=("arbitrary",),
            vmem_limit_bytes=32 * 1024 * 1024,
        ),
    )(*args)


# ------------------------ pure-JAX reference (for verification) ------------------------
def reference_block(hidden, enc_hidden, positions, params, *,
                    num_heads, num_kv_heads, rope_theta, eps):
    T, D = hidden.shape
    HD = D // num_heads
    KVS = num_kv_heads * HD
    I = params["w_gate_up"].shape[1] // 2
    scaling = HD ** -0.5
    half = HD // 2
    group = num_heads // num_kv_heads

    inv_freq = 1.0 / (rope_theta ** (jnp.arange(0, HD, 2, dtype=jnp.float32) / HD))
    ang = positions.astype(jnp.float32)[:, None] * inv_freq[None, :]
    cos, sin = jnp.cos(ang), jnp.sin(ang)

    def rmsnorm(x, w):
        return x * jax.lax.rsqrt(jnp.mean(x * x, -1, keepdims=True) + eps) * w

    def rope(x):  # x: [L, n, HD]
        x1, x2 = x[..., :half], x[..., half:]
        c, s = cos[:, None, :], sin[:, None, :]
        return jnp.concatenate([x1 * c - x2 * s, x2 * c + x1 * s], axis=-1)

    def attn(q, k, v, causal):
        qh = q.reshape(q.shape[0], num_heads, HD)
        kh = jnp.repeat(k.reshape(k.shape[0], num_kv_heads, HD), group, axis=1)
        vh = jnp.repeat(v.reshape(v.shape[0], num_kv_heads, HD), group, axis=1)
        s = jnp.einsum("qhd,khd->hqk", qh, kh) * scaling
        if causal:
            mask = jnp.tril(jnp.ones((q.shape[0], k.shape[0]), bool))
            s = jnp.where(mask[None], s, -jnp.inf)
        p = jax.nn.softmax(s, axis=-1)
        o = jnp.einsum("hqk,khd->qhd", p, vh)
        return o.reshape(q.shape[0], num_heads * HD)

    x = hidden
    # self attn
    r = x
    h = rmsnorm(x, params["ln1"])
    qkv = h @ params["w_qkv"]
    q, k, v = qkv[:, :D], qkv[:, D:D + KVS], qkv[:, D + KVS:]
    q = rope(q.reshape(T, num_heads, HD)).reshape(T, D)
    k = rope(k.reshape(T, num_kv_heads, HD)).reshape(T, KVS)
    x = r + attn(q, k, v, True) @ params["w_o_self"]
    # cross attn
    r = x
    h = rmsnorm(x, params["ln2"])
    q = h @ params["w_q_cross"]
    kv = enc_hidden @ params["w_kv_cross"]
    x = r + attn(q, kv[:, :KVS], kv[:, KVS:], False) @ params["w_o_cross"]
    # mlp
    r = x
    h = rmsnorm(x, params["ln3"])
    gu = h @ params["w_gate_up"]
    act = jax.nn.silu(gu[:, :I]) * gu[:, I:]
    return r + act @ params["w_down"]


if __name__ == "__main__":
    # Small synthetic config (AvatarVoiceConfig stand-in).
    T = 32           # flattened decoder tokens (2 grid steps at TILE_T=16)
    S = 16           # encoder tokens
    D = 128          # tts_adapter_hidden_size
    E = 96           # config.hidden_size (encoder hidden size feeding kv_proj)
    NH = 8           # tts_adapter_attention_heads
    NKV = NH // 4    # num_key_value_groups = 4  -> 2 kv heads
    I = 256          # tts_adapter_intermediate_size
    eps = 1e-6
    rope_theta = 10000.0

    key = jax.random.PRNGKey(0)
    ks = jax.random.split(key, 12)
    scale = 0.02
    KVS = NKV * (D // NH)

    params = {
        "ln1": jnp.ones((1, D), jnp.float32),
        "ln2": jnp.ones((1, D), jnp.float32),
        "ln3": jnp.ones((1, D), jnp.float32),
        "w_qkv": scale * jax.random.normal(ks[0], (D, D + 2 * KVS), jnp.float32),
        "w_o_self": scale * jax.random.normal(ks[1], (D, D), jnp.float32),
        "w_q_cross": scale * jax.random.normal(ks[2], (D, D), jnp.float32),
        "w_kv_cross": scale * jax.random.normal(ks[3], (E, 2 * KVS), jnp.float32),
        "w_o_cross": scale * jax.random.normal(ks[4], (D, D), jnp.float32),
        "w_gate_up": scale * jax.random.normal(ks[5], (D, 2 * I), jnp.float32),
        "w_down": scale * jax.random.normal(ks[6], (I, D), jnp.float32),
    }

    hidden = jax.random.normal(ks[7], (T, D), jnp.float32)
    enc_hidden = jax.random.normal(ks[8], (S, E), jnp.float32)
    positions = jnp.arange(T, dtype=jnp.int32)

    out = tts_adapter_block(hidden, enc_hidden, positions, params,
                            num_heads=NH, num_kv_heads=NKV,
                            rope_theta=rope_theta, eps=eps, block_t=16)
    out = jax.block_until_ready(out)

    ref = reference_block(hidden, enc_hidden, positions, params,
                          num_heads=NH, num_kv_heads=NKV,
                          rope_theta=rope_theta, eps=eps)
    assert out.shape == (T, D)
    # bf16 MXU operands with f32 accumulation -> compare against f32 reference
    # with a correspondingly loose tolerance.
    assert jnp.allclose(out, ref, atol=3e-2, rtol=3e-2), "mismatch vs JAX reference"

    print("KERNEL_OK")
</pallas_src>

<mosaic_0001>
module attributes {stable_mosaic.version = 11 : i64} {
  func.func @kernel(%arg0: i32, %arg1: memref<32x128xf32, #tpu.memory_space<vmem>>, %arg2: memref<16x128xf32, #tpu.memory_space<vmem>>, %arg3: memref<32x128xf32, #tpu.memory_space<vmem>>, %arg4: memref<32x128xf32, #tpu.memory_space<vmem>>, %arg5: memref<32x128xf32, #tpu.memory_space<vmem>>, %arg6: memref<1x128xf32, #tpu.memory_space<vmem>>, %arg7: memref<128x128xbf16, #tpu.memory_space<vmem>>, %arg8: memref<128x64xbf16, #tpu.memory_space<vmem>>, %arg9: memref<128x128xbf16, #tpu.memory_space<vmem>>, %arg10: memref<1x128xf32, #tpu.memory_space<vmem>>, %arg11: memref<128x128xbf16, #tpu.memory_space<vmem>>, %arg12: memref<128x64xbf16, #tpu.memory_space<vmem>>, %arg13: memref<128x128xbf16, #tpu.memory_space<vmem>>, %arg14: memref<1x128xf32, #tpu.memory_space<vmem>>, %arg15: memref<128x512xbf16, #tpu.memory_space<vmem>>, %arg16: memref<256x128xbf16, #tpu.memory_space<vmem>>, %arg17: memref<16x128xf32, #tpu.memory_space<vmem>>, %arg18: memref<32x32xbf16, #tpu.memory_space<vmem>>, %arg19: memref<32x32xbf16, #tpu.memory_space<vmem>>, %arg20: memref<16x32xbf16, #tpu.memory_space<vmem>>, %arg21: memref<16x32xbf16, #tpu.memory_space<vmem>>) attributes {dimension_semantics = [#tpu.dimension_semantics<arbitrary>], iteration_bounds = array<i64: 2>, scalar_prefetch = 0 : i64, scratch_operands = 4 : i64, tpu.core_type = #tpu.core_type<tc>, window_params = [{pipeline_mode = #tpu.pipeline_mode<synchronous>, transform_indices = @transform_0, window_bounds = array<i64: 32, 128>}, {pipeline_mode = #tpu.pipeline_mode<synchronous>, transform_indices = @transform_1, window_bounds = array<i64: 16, 128>}, {pipeline_mode = #tpu.pipeline_mode<synchronous>, transform_indices = @transform_2, window_bounds = array<i64: 32, 128>}, {pipeline_mode = #tpu.pipeline_mode<synchronous>, transform_indices = @transform_3, window_bounds = array<i64: 32, 128>}, {pipeline_mode = #tpu.pipeline_mode<synchronous>, transform_indices = @transform_4, window_bounds = array<i64: 32, 128>}, {pipeline_mode = #tpu.pipeline_mode<synchronous>, transform_indices = @transform_5, window_bounds = array<i64: 1, 128>}, {pipeline_mode = #tpu.pipeline_mode<synchronous>, transform_indices = @transform_6, window_bounds = array<i64: 128, 128>}, {pipeline_mode = #tpu.pipeline_mode<synchronous>, transform_indices = @transform_7, window_bounds = array<i64: 128, 64>}, {pipeline_mode = #tpu.pipeline_mode<synchronous>, transform_indices = @transform_8, window_bounds = array<i64: 128, 128>}, {pipeline_mode = #tpu.pipeline_mode<synchronous>, transform_indices = @transform_9, window_bounds = array<i64: 1, 128>}, {pipeline_mode = #tpu.pipeline_mode<synchronous>, transform_indices = @transform_10, window_bounds = array<i64: 128, 128>}, {pipeline_mode = #tpu.pipeline_mode<synchronous>, transform_indices = @transform_11, window_bounds = array<i64: 128, 64>}, {pipeline_mode = #tpu.pipeline_mode<synchronous>, transform_indices = @transform_12, window_bounds = array<i64: 128, 128>}, {pipeline_mode = #tpu.pipeline_mode<synchronous>, transform_indices = @transform_13, window_bounds = array<i64: 1, 128>}, {pipeline_mode = #tpu.pipeline_mode<synchronous>, transform_indices = @transform_14, window_bounds = array<i64: 128, 512>}, {pipeline_mode = #tpu.pipeline_mode<synchronous>, transform_indices = @transform_15, window_bounds = array<i64: 256, 128>}, {transform_indices = @transform_16, window_bounds = array<i64: 16, 128>}]} {
    %c0_i32 = arith.constant 0 : i32
    %0 = arith.cmpi eq, %arg0, %c0_i32 : i32
    %1 = arith.extui %0 : i1 to i32
    %c0_i32_0 = arith.constant 0 : i32
    %2 = arith.cmpi ne, %1, %c0_i32_0 : i32
    scf.if %2 {
      %c0_69 = arith.constant 0 : index
      %c0_70 = arith.constant 0 : index
      %216 = vector.load %arg1[%c0_69, %c0_70] : memref<32x128xf32, #tpu.memory_space<vmem>>, vector<32x128xf32>
      %c0_71 = arith.constant 0 : index
      %c0_72 = arith.constant 0 : index
      %217 = vector.load %arg6[%c0_71, %c0_72] : memref<1x128xf32, #tpu.memory_space<vmem>>, vector<1x128xf32>
      %218 = arith.mulf %216, %216 : vector<32x128xf32>
      %cst_73 = arith.constant dense<0.000000e+00> : vector<32xf32>
      %219 = vector.multi_reduction <add>, %218, %cst_73 [1] : vector<32x128xf32> to vector<32xf32>
      %220 = vector.shape_cast %219 : vector<32xf32> to vector<32x1xf32>
      %cst_74 = arith.constant 1.280000e+02 : f32
      %221 = vector.broadcast %cst_74 : f32 to vector<32x1xf32>
      %222 = arith.divf %220, %221 : vector<32x1xf32>
      %cst_75 = arith.constant 9.99999997E-7 : f32
      %223 = vector.broadcast %cst_75 : f32 to vector<32x1xf32>
      %224 = arith.addf %222, %223 : vector<32x1xf32>
      %225 = math.rsqrt %224 : vector<32x1xf32>
      %226 = vector.broadcast %225 : vector<32x1xf32> to vector<32x128xf32>
      %227 = arith.mulf %216, %226 : vector<32x128xf32>
      %228 = vector.broadcast %217 : vector<1x128xf32> to vector<32x128xf32>
      %229 = arith.mulf %227, %228 : vector<32x128xf32>
      %230 = arith.truncf %229 : vector<32x128xf32> to vector<32x128xbf16>
      %c0_76 = arith.constant 0 : index
      %c0_77 = arith.constant 0 : index
      %231 = vector.load %arg8[%c0_76, %c0_77] : memref<128x64xbf16, #tpu.memory_space<vmem>>, vector<128x64xbf16>
      %cst_78 = arith.constant dense<0.000000e+00> : vector<32x64xf32>
      %232 = tpu.matmul %230, %231, %cst_78 {dimension_numbers = #tpu.dot_dimension_numbers<[1], [0], [0], [1], [0, 0, 1, 1], [], []>} : vector<32x128xbf16>, vector<128x64xbf16>, vector<32x64xf32> -> vector<32x64xf32>
      %c0_79 = arith.constant 0 : index
      %c0_80 = arith.constant 0 : index
      %233 = vector.load %arg3[%c0_79, %c0_80] : memref<32x128xf32, #tpu.memory_space<vmem>>, vector<32x128xf32>
      %c0_81 = arith.constant 0 : index
      %c0_82 = arith.constant 0 : index
      %234 = vector.load %arg4[%c0_81, %c0_82] : memref<32x128xf32, #tpu.memory_space<vmem>>, vector<32x128xf32>
      %c0_83 = arith.constant 0 : index
      %c0_84 = arith.constant 0 : index
      %235 = vector.load %arg5[%c0_83, %c0_84] : memref<32x128xf32, #tpu.memory_space<vmem>>, vector<32x128xf32>
      %236 = vector.extract_strided_slice %232 {offsets = [0, 0], sizes = [32, 32], strides = [1, 1]} : vector<32x64xf32> to vector<32x32xf32>
      %237 = vector.extract_strided_slice %233 {offsets = [0, 0], sizes = [32, 32], strides = [1, 1]} : vector<32x128xf32> to vector<32x32xf32>
      %238 = vector.extract_strided_slice %234 {offsets = [0, 0], sizes = [32, 32], strides = [1, 1]} : vector<32x128xf32> to vector<32x32xf32>
      %239 = vector.extract_strided_slice %235 {offsets = [0, 0], sizes = [32, 32], strides = [1, 1]} : vector<32x128xf32> to vector<32x32xf32>
      %240 = vector.extract_strided_slice %236 {offsets = [0, 8], sizes = [32, 24], strides = [1, 1]} : vector<32x32xf32> to vector<32x24xf32>
      %241 = vector.extract_strided_slice %236 {offsets = [0, 0], sizes = [32, 8], strides = [1, 1]} : vector<32x32xf32> to vector<32x8xf32>
      %242 = tpu.concatenate %240, %241 in 1 : vector<32x24xf32>, vector<32x8xf32> -> vector<32x32xf32>
      %243 = vector.extract_strided_slice %236 {offsets = [0, 24], sizes = [32, 8], strides = [1, 1]} : vector<32x32xf32> to vector<32x8xf32>
      %244 = vector.extract_strided_slice %236 {offsets = [0, 0], sizes = [32, 24], strides = [1, 1]} : vector<32x32xf32> to vector<32x24xf32>
      %245 = tpu.concatenate %243, %244 in 1 : vector<32x8xf32>, vector<32x24xf32> -> vector<32x32xf32>
      %246 = arith.mulf %236, %237 : vector<32x32xf32>
      %247 = arith.mulf %242, %238 : vector<32x32xf32>
      %248 = arith.addf %246, %247 : vector<32x32xf32>
      %249 = arith.mulf %245, %239 : vector<32x32xf32>
      %250 = arith.addf %248, %249 : vector<32x32xf32>
      %251 = arith.truncf %250 : vector<32x32xf32> to vector<32x32xbf16>
      %c0_85 = arith.constant 0 : index
      %c0_86 = arith.constant 0 : index
      %252 = vector.load %arg18[%c0_85, %c0_86] : memref<32x32xbf16, #tpu.memory_space<vmem>>, vector<32x32xbf16>
      tpu.vector_store %arg18[%c0_85, %c0_86], %251 {strides = array<i32>} : memref<32x32xbf16, #tpu.memory_space<vmem>>, vector<32x32xbf16>,
      %253 = vector.extract_strided_slice %232 {offsets = [0, 32], sizes = [32, 32], strides = [1, 1]} : vector<32x64xf32> to vector<32x32xf32>
      %254 = arith.truncf %253 : vector<32x32xf32> to vector<32x32xbf16>
      %c0_87 = arith.constant 0 : index
      %c0_88 = arith.constant 0 : index
      %255 = vector.load %arg19[%c0_87, %c0_88] : memref<32x32xbf16, #tpu.memory_space<vmem>>, vector<32x32xbf16>
      tpu.vector_store %arg19[%c0_87, %c0_88], %254 {strides = array<i32>} : memref<32x32xbf16, #tpu.memory_space<vmem>>, vector<32x32xbf16>,
      %c0_89 = arith.constant 0 : index
      %c0_90 = arith.constant 0 : index
      %256 = vector.load %arg2[%c0_89, %c0_90] : memref<16x128xf32, #tpu.memory_space<vmem>>, vector<16x128xf32>
      %257 = arith.truncf %256 : vector<16x128xf32> to vector<16x128xbf16>
      %c0_91 = arith.constant 0 : index
      %c0_92 = arith.constant 0 : index
      %258 = vector.load %arg12[%c0_91, %c0_92] : memref<128x64xbf16, #tpu.memory_space<vmem>>, vector<128x64xbf16>
      %cst_93 = arith.constant dense<0.000000e+00> : vector<16x64xf32>
      %259 = tpu.matmul %257, %258, %cst_93 {dimension_numbers = #tpu.dot_dimension_numbers<[1], [0], [0], [1], [0, 0, 1, 1], [], []>} : vector<16x128xbf16>, vector<128x64xbf16>, vector<16x64xf32> -> vector<16x64xf32>
      %260 = vector.extract_strided_slice %259 {offsets = [0, 0], sizes = [16, 32], strides = [1, 1]} : vector<16x64xf32> to vector<16x32xf32>
      %261 = arith.truncf %260 : vector<16x32xf32> to vector<16x32xbf16>
      %c0_94 = arith.constant 0 : index
      %c0_95 = arith.constant 0 : index
      %262 = vector.load %arg20[%c0_94, %c0_95] : memref<16x32xbf16, #tpu.memory_space<vmem>>, vector<16x32xbf16>
      tpu.vector_store %arg20[%c0_94, %c0_95], %261 {strides = array<i32>} : memref<16x32xbf16, #tpu.memory_space<vmem>>, vector<16x32xbf16>,
      %263 = vector.extract_strided_slice %259 {offsets = [0, 32], sizes = [16, 32], strides = [1, 1]} : vector<16x64xf32> to vector<16x32xf32>
      %264 = arith.truncf %263 : vector<16x32xf32> to vector<16x32xbf16>
      %c0_96 = arith.constant 0 : index
      %c0_97 = arith.constant 0 : index
      %265 = vector.load %arg21[%c0_96, %c0_97] : memref<16x32xbf16, #tpu.memory_space<vmem>>, vector<16x32xbf16>
      tpu.vector_store %arg21[%c0_96, %c0_97], %264 {strides = array<i32>} : memref<16x32xbf16, #tpu.memory_space<vmem>>, vector<16x32xbf16>,
    } else {
    }
    %c16_i32 = arith.constant 16 : i32
    %3 = arith.muli %arg0, %c16_i32 : i32
    %4 = tpu.assume_multiple %3, 16 : i32
    %5 = arith.index_cast %4 : i32 to index
    %c0 = arith.constant 0 : index
    %6 = vector.load %arg1[%5, %c0] : memref<32x128xf32, #tpu.memory_space<vmem>>, vector<16x128xf32>
    %7 = arith.index_cast %4 : i32 to index
    %c0_1 = arith.constant 0 : index
    %8 = vector.load %arg3[%7, %c0_1] : memref<32x128xf32, #tpu.memory_space<vmem>>, vector<16x128xf32>
    %9 = arith.index_cast %4 : i32 to index
    %c0_2 = arith.constant 0 : index
    %10 = vector.load %arg4[%9, %c0_2] : memref<32x128xf32, #tpu.memory_space<vmem>>, vector<16x128xf32>
    %11 = arith.index_cast %4 : i32 to index
    %c0_3 = arith.constant 0 : index
    %12 = vector.load %arg5[%11, %c0_3] : memref<32x128xf32, #tpu.memory_space<vmem>>, vector<16x128xf32>
    %c0_4 = arith.constant 0 : index
    %c0_5 = arith.constant 0 : index
    %13 = vector.load %arg6[%c0_4, %c0_5] : memref<1x128xf32, #tpu.memory_space<vmem>>, vector<1x128xf32>
    %14 = arith.mulf %6, %6 : vector<16x128xf32>
    %cst = arith.constant dense<0.000000e+00> : vector<16xf32>
    %15 = vector.multi_reduction <add>, %14, %cst [1] : vector<16x128xf32> to vector<16xf32>
    %16 = vector.shape_cast %15 : vector<16xf32> to vector<16x1xf32>
    %cst_6 = arith.constant 1.280000e+02 : f32
    %17 = vector.broadcast %cst_6 : f32 to vector<16x1xf32>
    %18 = arith.divf %16, %17 : vector<16x1xf32>
    %cst_7 = arith.constant 9.99999997E-7 : f32
    %19 = vector.broadcast %cst_7 : f32 to vector<16x1xf32>
    %20 = arith.addf %18, %19 : vector<16x1xf32>
    %21 = math.rsqrt %20 : vector<16x1xf32>
    %22 = vector.broadcast %21 : vector<16x1xf32> to vector<16x128xf32>
    %23 = arith.mulf %6, %22 : vector<16x128xf32>
    %24 = vector.broadcast %13 : vector<1x128xf32> to vector<16x128xf32>
    %25 = arith.mulf %23, %24 : vector<16x128xf32>
    %26 = arith.truncf %25 : vector<16x128xf32> to vector<16x128xbf16>
    %c0_8 = arith.constant 0 : index
    %c0_9 = arith.constant 0 : index
    %27 = vector.load %arg7[%c0_8, %c0_9] : memref<128x128xbf16, #tpu.memory_space<vmem>>, vector<128x128xbf16>
    %cst_10 = arith.constant dense<0.000000e+00> : vector<16x128xf32>
    %28 = tpu.matmul %26, %27, %cst_10 {dimension_numbers = #tpu.dot_dimension_numbers<[1], [0], [0], [1], [0, 0, 1, 1], [], []>} : vector<16x128xbf16>, vector<128x128xbf16>, vector<16x128xf32> -> vector<16x128xf32>
    %29 = vector.extract_strided_slice %28 {offsets = [0, 8], sizes = [16, 120], strides = [1, 1]} : vector<16x128xf32> to vector<16x120xf32>
    %30 = vector.extract_strided_slice %28 {offsets = [0, 0], sizes = [16, 8], strides = [1, 1]} : vector<16x128xf32> to vector<16x8xf32>
    %31 = tpu.concatenate %29, %30 in 1 : vector<16x120xf32>, vector<16x8xf32> -> vector<16x128xf32>
    %32 = vector.extract_strided_slice %28 {offsets = [0, 120], sizes = [16, 8], strides = [1, 1]} : vector<16x128xf32> to vector<16x8xf32>
    %33 = vector.extract_strided_slice %28 {offsets = [0, 0], sizes = [16, 120], strides = [1, 1]} : vector<16x128xf32> to vector<16x120xf32>
    %34 = tpu.concatenate %32, %33 in 1 : vector<16x8xf32>, vector<16x120xf32> -> vector<16x128xf32>
    %35 = arith.mulf %28, %8 : vector<16x128xf32>
    %36 = arith.mulf %31, %10 : vector<16x128xf32>
    %37 = arith.addf %35, %36 : vector<16x128xf32>
    %38 = arith.mulf %34, %12 : vector<16x128xf32>
    %39 = arith.addf %37, %38 : vector<16x128xf32>
    %40 = arith.truncf %39 : vector<16x128xf32> to vector<16x128xbf16>
    %c0_11 = arith.constant 0 : index
    %c0_12 = arith.constant 0 : index
    %41 = vector.load %arg18[%c0_11, %c0_12] : memref<32x32xbf16, #tpu.memory_space<vmem>>, vector<32x32xbf16>
    %c0_13 = arith.constant 0 : index
    %c0_14 = arith.constant 0 : index
    %42 = vector.load %arg19[%c0_13, %c0_14] : memref<32x32xbf16, #tpu.memory_space<vmem>>, vector<32x32xbf16>
    %43 = tpu.iota {dimensions = array<i32: 0>} : vector<16x32xi32>
    %44 = tpu.concatenate %43, %43, %43, %43 in 0 : vector<16x32xi32>, vector<16x32xi32>, vector<16x32xi32>, vector<16x32xi32> -> vector<64x32xi32>
    %45 = vector.broadcast %4 : i32 to vector<64x32xi32>
    %46 = arith.addi %44, %45 : vector<64x32xi32>
    %47 = tpu.iota {dimensions = array<i32: 1>} : vector<64x32xi32>
    %48 = arith.cmpi sle, %47, %46 : vector<64x32xi32>
    %49 = vector.extract_strided_slice %40 {offsets = [0, 0], sizes = [16, 16], strides = [1, 1]} : vector<16x128xbf16> to vector<16x16xbf16>
    %50 = vector.extract_strided_slice %40 {offsets = [0, 16], sizes = [16, 16], strides = [1, 1]} : vector<16x128xbf16> to vector<16x16xbf16>
    %51 = vector.extract_strided_slice %40 {offsets = [0, 32], sizes = [16, 16], strides = [1, 1]} : vector<16x128xbf16> to vector<16x16xbf16>
    %52 = vector.extract_strided_slice %40 {offsets = [0, 48], sizes = [16, 16], strides = [1, 1]} : vector<16x128xbf16> to vector<16x16xbf16>
    %53 = tpu.concatenate %49, %50, %51, %52 in 0 : vector<16x16xbf16>, vector<16x16xbf16>, vector<16x16xbf16>, vector<16x16xbf16> -> vector<64x16xbf16>
    %54 = vector.extract_strided_slice %41 {offsets = [0, 0], sizes = [32, 16], strides = [1, 1]} : vector<32x32xbf16> to vector<32x16xbf16>
    %55 = vector.extract_strided_slice %42 {offsets = [0, 0], sizes = [32, 16], strides = [1, 1]} : vector<32x32xbf16> to vector<32x16xbf16>
    %cst_15 = arith.constant dense<0.000000e+00> : vector<64x32xf32>
    %56 = tpu.matmul %53, %54, %cst_15 {dimension_numbers = #tpu.dot_dimension_numbers<[1], [1], [0], [0], [0, 0, 1, 0], [], []>} : vector<64x16xbf16>, vector<32x16xbf16>, vector<64x32xf32> -> vector<64x32xf32>
    %cst_16 = arith.constant 2.500000e-01 : f32
    %57 = vector.broadcast %cst_16 : f32 to vector<64x32xf32>
    %58 = arith.mulf %56, %57 : vector<64x32xf32>
    %cst_17 = arith.constant -1.000000e+30 : f32
    %59 = vector.broadcast %cst_17 : f32 to vector<64x32xf32>
    %60 = arith.select %48, %58, %59 : vector<64x32xi1>, vector<64x32xf32>
    %cst_18 = arith.constant dense<0xFF800000> : vector<64xf32>
    %61 = vector.multi_reduction <maximumf>, %60, %cst_18 [1] : vector<64x32xf32> to vector<64xf32>
    %62 = vector.shape_cast %61 : vector<64xf32> to vector<64x1xf32>
    %63 = vector.broadcast %62 : vector<64x1xf32> to vector<64x32xf32>
    %64 = arith.subf %60, %63 : vector<64x32xf32>
    %65 = math.exp %64 : vector<64x32xf32>
    %cst_19 = arith.constant dense<0.000000e+00> : vector<64xf32>
    %66 = vector.multi_reduction <add>, %65, %cst_19 [1] : vector<64x32xf32> to vector<64xf32>
    %67 = vector.shape_cast %66 : vector<64xf32> to vector<64x1xf32>
    %68 = tpu.reciprocal %67 {approx = true} : vector<64x1xf32> -> vector<64x1xf32>
    %69 = vector.broadcast %68 : vector<64x1xf32> to vector<64x32xf32>
    %70 = arith.mulf %65, %69 : vector<64x32xf32>
    %71 = arith.truncf %70 : vector<64x32xf32> to vector<64x32xbf16>
    %cst_20 = arith.constant dense<0.000000e+00> : vector<64x16xf32>
    %72 = tpu.matmul %71, %55, %cst_20 {dimension_numbers = #tpu.dot_dimension_numbers<[1], [0], [0], [1], [0, 0, 1, 1], [], []>} : vector<64x32xbf16>, vector<32x16xbf16>, vector<64x16xf32> -> vector<64x16xf32>
    %73 = vector.extract_strided_slice %72 {offsets = [0, 0], sizes = [16, 16], strides = [1, 1]} : vector<64x16xf32> to vector<16x16xf32>
    %74 = vector.extract_strided_slice %72 {offsets = [16, 0], sizes = [16, 16], strides = [1, 1]} : vector<64x16xf32> to vector<16x16xf32>
    %75 = vector.extract_strided_slice %72 {offsets = [32, 0], sizes = [16, 16], strides = [1, 1]} : vector<64x16xf32> to vector<16x16xf32>
    %76 = vector.extract_strided_slice %72 {offsets = [48, 0], sizes = [16, 16], strides = [1, 1]} : vector<64x16xf32> to vector<16x16xf32>
    %77 = vector.extract_strided_slice %40 {offsets = [0, 64], sizes = [16, 16], strides = [1, 1]} : vector<16x128xbf16> to vector<16x16xbf16>
    %78 = vector.extract_strided_slice %40 {offsets = [0, 80], sizes = [16, 16], strides = [1, 1]} : vector<16x128xbf16> to vector<16x16xbf16>
    %79 = vector.extract_strided_slice %40 {offsets = [0, 96], sizes = [16, 16], strides = [1, 1]} : vector<16x128xbf16> to vector<16x16xbf16>
    %80 = vector.extract_strided_slice %40 {offsets = [0, 112], sizes = [16, 16], strides = [1, 1]} : vector<16x128xbf16> to vector<16x16xbf16>
    %81 = tpu.concatenate %77, %78, %79, %80 in 0 : vector<16x16xbf16>, vector<16x16xbf16>, vector<16x16xbf16>, vector<16x16xbf16> -> vector<64x16xbf16>
    %82 = vector.extract_strided_slice %41 {offsets = [0, 16], sizes = [32, 16], strides = [1, 1]} : vector<32x32xbf16> to vector<32x16xbf16>
    %83 = vector.extract_strided_slice %42 {offsets = [0, 16], sizes = [32, 16], strides = [1, 1]} : vector<32x32xbf16> to vector<32x16xbf16>
    %cst_21 = arith.constant dense<0.000000e+00> : vector<64x32xf32>
    %84 = tpu.matmul %81, %82, %cst_21 {dimension_numbers = #tpu.dot_dimension_numbers<[1], [1], [0], [0], [0, 0, 1, 0], [], []>} : vector<64x16xbf16>, vector<32x16xbf16>, vector<64x32xf32> -> vector<64x32xf32>
    %cst_22 = arith.constant 2.500000e-01 : f32
    %85 = vector.broadcast %cst_22 : f32 to vector<64x32xf32>
    %86 = arith.mulf %84, %85 : vector<64x32xf32>
    %cst_23 = arith.constant -1.000000e+30 : f32
    %87 = vector.broadcast %cst_23 : f32 to vector<64x32xf32>
    %88 = arith.select %48, %86, %87 : vector<64x32xi1>, vector<64x32xf32>
    %cst_24 = arith.constant dense<0xFF800000> : vector<64xf32>
    %89 = vector.multi_reduction <maximumf>, %88, %cst_24 [1] : vector<64x32xf32> to vector<64xf32>
    %90 = vector.shape_cast %89 : vector<64xf32> to vector<64x1xf32>
    %91 = vector.broadcast %90 : vector<64x1xf32> to vector<64x32xf32>
    %92 = arith.subf %88, %91 : vector<64x32xf32>
    %93 = math.exp %92 : vector<64x32xf32>
    %cst_25 = arith.constant dense<0.000000e+00> : vector<64xf32>
    %94 = vector.multi_reduction <add>, %93, %cst_25 [1] : vector<64x32xf32> to vector<64xf32>
    %95 = vector.shape_cast %94 : vector<64xf32> to vector<64x1xf32>
    %96 = tpu.reciprocal %95 {approx = true} : vector<64x1xf32> -> vector<64x1xf32>
    %97 = vector.broadcast %96 : vector<64x1xf32> to vector<64x32xf32>
    %98 = arith.mulf %93, %97 : vector<64x32xf32>
    %99 = arith.truncf %98 : vector<64x32xf32> to vector<64x32xbf16>
    %cst_26 = arith.constant dense<0.000000e+00> : vector<64x16xf32>
    %100 = tpu.matmul %99, %83, %cst_26 {dimension_numbers = #tpu.dot_dimension_numbers<[1], [0], [0], [1], [0, 0, 1, 1], [], []>} : vector<64x32xbf16>, vector<32x16xbf16>, vector<64x16xf32> -> vector<64x16xf32>
    %101 = vector.extract_strided_slice %100 {offsets = [0, 0], sizes = [16, 16], strides = [1, 1]} : vector<64x16xf32> to vector<16x16xf32>
    %102 = vector.extract_strided_slice %100 {offsets = [16, 0], sizes = [16, 16], strides = [1, 1]} : vector<64x16xf32> to vector<16x16xf32>
    %103 = vector.extract_strided_slice %100 {offsets = [32, 0], sizes = [16, 16], strides = [1, 1]} : vector<64x16xf32> to vector<16x16xf32>
    %104 = vector.extract_strided_slice %100 {offsets = [48, 0], sizes = [16, 16], strides = [1, 1]} : vector<64x16xf32> to vector<16x16xf32>
    %105 = tpu.concatenate %73, %74, %75, %76, %101, %102, %103, %104 in 1 : vector<16x16xf32>, vector<16x16xf32>, vector<16x16xf32>, vector<16x16xf32>, vector<16x16xf32>, vector<16x16xf32>, vector<16x16xf32>, vector<16x16xf32> -> vector<16x128xf32>
    %106 = arith.truncf %105 : vector<16x128xf32> to vector<16x128xbf16>
    %c0_27 = arith.constant 0 : index
    %c0_28 = arith.constant 0 : index
    %107 = vector.load %arg9[%c0_27, %c0_28] : memref<128x128xbf16, #tpu.memory_space<vmem>>, vector<128x128xbf16>
    %cst_29 = arith.constant dense<0.000000e+00> : vector<16x128xf32>
    %108 = tpu.matmul %106, %107, %cst_29 {dimension_numbers = #tpu.dot_dimension_numbers<[1], [0], [0], [1], [0, 0, 1, 1], [], []>} : vector<16x128xbf16>, vector<128x128xbf16>, vector<16x128xf32> -> vector<16x128xf32>
    %109 = arith.addf %6, %108 : vector<16x128xf32>
    %c0_30 = arith.constant 0 : index
    %c0_31 = arith.constant 0 : index
    %110 = vector.load %arg10[%c0_30, %c0_31] : memref<1x128xf32, #tpu.memory_space<vmem>>, vector<1x128xf32>
    %111 = arith.mulf %109, %109 : vector<16x128xf32>
    %cst_32 = arith.constant dense<0.000000e+00> : vector<16xf32>
    %112 = vector.multi_reduction <add>, %111, %cst_32 [1] : vector<16x128xf32> to vector<16xf32>
    %113 = vector.shape_cast %112 : vector<16xf32> to vector<16x1xf32>
    %cst_33 = arith.constant 1.280000e+02 : f32
    %114 = vector.broadcast %cst_33 : f32 to vector<16x1xf32>
    %115 = arith.divf %113, %114 : vector<16x1xf32>
    %cst_34 = arith.constant 9.99999997E-7 : f32
    %116 = vector.broadcast %cst_34 : f32 to vector<16x1xf32>
    %117 = arith.addf %115, %116 : vector<16x1xf32>
    %118 = math.rsqrt %117 : vector<16x1xf32>
    %119 = vector.broadcast %118 : vector<16x1xf32> to vector<16x128xf32>
    %120 = arith.mulf %109, %119 : vector<16x128xf32>
    %121 = vector.broadcast %110 : vector<1x128xf32> to vector<16x128xf32>
    %122 = arith.mulf %120, %121 : vector<16x128xf32>
    %123 = arith.truncf %122 : vector<16x128xf32> to vector<16x128xbf16>
    %c0_35 = arith.constant 0 : index
    %c0_36 = arith.constant 0 : index
    %124 = vector.load %arg11[%c0_35, %c0_36] : memref<128x128xbf16, #tpu.memory_space<vmem>>, vector<128x128xbf16>
    %cst_37 = arith.constant dense<0.000000e+00> : vector<16x128xf32>
    %125 = tpu.matmul %123, %124, %cst_37 {dimension_numbers = #tpu.dot_dimension_numbers<[1], [0], [0], [1], [0, 0, 1, 1], [], []>} : vector<16x128xbf16>, vector<128x128xbf16>, vector<16x128xf32> -> vector<16x128xf32>
    %126 = arith.truncf %125 : vector<16x128xf32> to vector<16x128xbf16>
    %c0_38 = arith.constant 0 : index
    %c0_39 = arith.constant 0 : index
    %127 = vector.load %arg20[%c0_38, %c0_39] : memref<16x32xbf16, #tpu.memory_space<vmem>>, vector<16x32xbf16>
    %c0_40 = arith.constant 0 : index
    %c0_41 = arith.constant 0 : index
    %128 = vector.load %arg21[%c0_40, %c0_41] : memref<16x32xbf16, #tpu.memory_space<vmem>>, vector<16x32xbf16>
    %129 = vector.extract_strided_slice %126 {offsets = [0, 0], sizes = [16, 16], strides = [1, 1]} : vector<16x128xbf16> to vector<16x16xbf16>
    %130 = vector.extract_strided_slice %126 {offsets = [0, 16], sizes = [16, 16], strides = [1, 1]} : vector<16x128xbf16> to vector<16x16xbf16>
    %131 = vector.extract_strided_slice %126 {offsets = [0, 32], sizes = [16, 16], strides = [1, 1]} : vector<16x128xbf16> to vector<16x16xbf16>
    %132 = vector.extract_strided_slice %126 {offsets = [0, 48], sizes = [16, 16], strides = [1, 1]} : vector<16x128xbf16> to vector<16x16xbf16>
    %133 = tpu.concatenate %129, %130, %131, %132 in 0 : vector<16x16xbf16>, vector<16x16xbf16>, vector<16x16xbf16>, vector<16x16xbf16> -> vector<64x16xbf16>
    %134 = vector.extract_strided_slice %127 {offsets = [0, 0], sizes = [16, 16], strides = [1, 1]} : vector<16x32xbf16> to vector<16x16xbf16>
    %135 = vector.extract_strided_slice %128 {offsets = [0, 0], sizes = [16, 16], strides = [1, 1]} : vector<16x32xbf16> to vector<16x16xbf16>
    %cst_42 = arith.constant dense<0.000000e+00> : vector<64x16xf32>
    %136 = tpu.matmul %133, %134, %cst_42 {dimension_numbers = #tpu.dot_dimension_numbers<[1], [1], [0], [0], [0, 0, 1, 0], [], []>} : vector<64x16xbf16>, vector<16x16xbf16>, vector<64x16xf32> -> vector<64x16xf32>
    %cst_43 = arith.constant 2.500000e-01 : f32
    %137 = vector.broadcast %cst_43 : f32 to vector<64x16xf32>
    %138 = arith.mulf %136, %137 : vector<64x16xf32>
    %cst_44 = arith.constant dense<0xFF800000> : vector<64xf32>
    %139 = vector.multi_reduction <maximumf>, %138, %cst_44 [1] : vector<64x16xf32> to vector<64xf32>
    %140 = vector.shape_cast %139 : vector<64xf32> to vector<64x1xf32>
    %141 = vector.broadcast %140 : vector<64x1xf32> to vector<64x16xf32>
    %142 = arith.subf %138, %141 : vector<64x16xf32>
    %143 = math.exp %142 : vector<64x16xf32>
    %cst_45 = arith.constant dense<0.000000e+00> : vector<64xf32>
    %144 = vector.multi_reduction <add>, %143, %cst_45 [1] : vector<64x16xf32> to vector<64xf32>
    %145 = vector.shape_cast %144 : vector<64xf32> to vector<64x1xf32>
    %146 = tpu.reciprocal %145 {approx = true} : vector<64x1xf32> -> vector<64x1xf32>
    %147 = vector.broadcast %146 : vector<64x1xf32> to vector<64x16xf32>
    %148 = arith.mulf %143, %147 : vector<64x16xf32>
    %149 = arith.truncf %148 : vector<64x16xf32> to vector<64x16xbf16>
    %cst_46 = arith.constant dense<0.000000e+00> : vector<64x16xf32>
    %150 = tpu.matmul %149, %135, %cst_46 {dimension_numbers = #tpu.dot_dimension_numbers<[1], [0], [0], [1], [0, 0, 1, 1], [], []>} : vector<64x16xbf16>, vector<16x16xbf16>, vector<64x16xf32> -> vector<64x16xf32>
    %151 = vector.extract_strided_slice %150 {offsets = [0, 0], sizes = [16, 16], strides = [1, 1]} : vector<64x16xf32> to vector<16x16xf32>
    %152 = vector.extract_strided_slice %150 {offsets = [16, 0], sizes = [16, 16], strides = [1, 1]} : vector<64x16xf32> to vector<16x16xf32>
    %153 = vector.extract_strided_slice %150 {offsets = [32, 0], sizes = [16, 16], strides = [1, 1]} : vector<64x16xf32> to vector<16x16xf32>
    %154 = vector.extract_strided_slice %150 {offsets = [48, 0], sizes = [16, 16], strides = [1, 1]} : vector<64x16xf32> to vector<16x16xf32>
    %155 = vector.extract_strided_slice %126 {offsets = [0, 64], sizes = [16, 16], strides = [1, 1]} : vector<16x128xbf16> to vector<16x16xbf16>
    %156 = vector.extract_strided_slice %126 {offsets = [0, 80], sizes = [16, 16], strides = [1, 1]} : vector<16x128xbf16> to vector<16x16xbf16>
    %157 = vector.extract_strided_slice %126 {offsets = [0, 96], sizes = [16, 16], strides = [1, 1]} : vector<16x128xbf16> to vector<16x16xbf16>
    %158 = vector.extract_strided_slice %126 {offsets = [0, 112], sizes = [16, 16], strides = [1, 1]} : vector<16x128xbf16> to vector<16x16xbf16>
    %159 = tpu.concatenate %155, %156, %157, %158 in 0 : vector<16x16xbf16>, vector<16x16xbf16>, vector<16x16xbf16>, vector<16x16xbf16> -> vector<64x16xbf16>
    %160 = vector.extract_strided_slice %127 {offsets = [0, 16], sizes = [16, 16], strides = [1, 1]} : vector<16x32xbf16> to vector<16x16xbf16>
    %161 = vector.extract_strided_slice %128 {offsets = [0, 16], sizes = [16, 16], strides = [1, 1]} : vector<16x32xbf16> to vector<16x16xbf16>
    %cst_47 = arith.constant dense<0.000000e+00> : vector<64x16xf32>
    %162 = tpu.matmul %159, %160, %cst_47 {dimension_numbers = #tpu.dot_dimension_numbers<[1], [1], [0], [0], [0, 0, 1, 0], [], []>} : vector<64x16xbf16>, vector<16x16xbf16>, vector<64x16xf32> -> vector<64x16xf32>
    %cst_48 = arith.constant 2.500000e-01 : f32
    %163 = vector.broadcast %cst_48 : f32 to vector<64x16xf32>
    %164 = arith.mulf %162, %163 : vector<64x16xf32>
    %cst_49 = arith.constant dense<0xFF800000> : vector<64xf32>
    %165 = vector.multi_reduction <maximumf>, %164, %cst_49 [1] : vector<64x16xf32> to vector<64xf32>
    %166 = vector.shape_cast %165 : vector<64xf32> to vector<64x1xf32>
    %167 = vector.broadcast %166 : vector<64x1xf32> to vector<64x16xf32>
    %168 = arith.subf %164, %167 : vector<64x16xf32>
    %169 = math.exp %168 : vector<64x16xf32>
    %cst_50 = arith.constant dense<0.000000e+00> : vector<64xf32>
    %170 = vector.multi_reduction <add>, %169, %cst_50 [1] : vector<64x16xf32> to vector<64xf32>
    %171 = vector.shape_cast %170 : vector<64xf32> to vector<64x1xf32>
    %172 = tpu.reciprocal %171 {approx = true} : vector<64x1xf32> -> vector<64x1xf32>
    %173 = vector.broadcast %172 : vector<64x1xf32> to vector<64x16xf32>
    %174 = arith.mulf %169, %173 : vector<64x16xf32>
    %175 = arith.truncf %174 : vector<64x16xf32> to vector<64x16xbf16>
    %cst_51 = arith.constant dense<0.000000e+00> : vector<64x16xf32>
    %176 = tpu.matmul %175, %161, %cst_51 {dimension_numbers = #tpu.dot_dimension_numbers<[1], [0], [0], [1], [0, 0, 1, 1], [], []>} : vector<64x16xbf16>, vector<16x16xbf16>, vector<64x16xf32> -> vector<64x16xf32>
    %177 = vector.extract_strided_slice %176 {offsets = [0, 0], sizes = [16, 16], strides = [1, 1]} : vector<64x16xf32> to vector<16x16xf32>
    %178 = vector.extract_strided_slice %176 {offsets = [16, 0], sizes = [16, 16], strides = [1, 1]} : vector<64x16xf32> to vector<16x16xf32>
    %179 = vector.extract_strided_slice %176 {offsets = [32, 0], sizes = [16, 16], strides = [1, 1]} : vector<64x16xf32> to vector<16x16xf32>
    %180 = vector.extract_strided_slice %176 {offsets = [48, 0], sizes = [16, 16], strides = [1, 1]} : vector<64x16xf32> to vector<16x16xf32>
    %181 = tpu.concatenate %151, %152, %153, %154, %177, %178, %179, %180 in 1 : vector<16x16xf32>, vector<16x16xf32>, vector<16x16xf32>, vector<16x16xf32>, vector<16x16xf32>, vector<16x16xf32>, vector<16x16xf32>, vector<16x16xf32> -> vector<16x128xf32>
    %182 = arith.truncf %181 : vector<16x128xf32> to vector<16x128xbf16>
    %c0_52 = arith.constant 0 : index
    %c0_53 = arith.constant 0 : index
    %183 = vector.load %arg13[%c0_52, %c0_53] : memref<128x128xbf16, #tpu.memory_space<vmem>>, vector<128x128xbf16>
    %cst_54 = arith.constant dense<0.000000e+00> : vector<16x128xf32>
    %184 = tpu.matmul %182, %183, %cst_54 {dimension_numbers = #tpu.dot_dimension_numbers<[1], [0], [0], [1], [0, 0, 1, 1], [], []>} : vector<16x128xbf16>, vector<128x128xbf16>, vector<16x128xf32> -> vector<16x128xf32>
    %185 = arith.addf %109, %184 : vector<16x128xf32>
    %c0_55 = arith.constant 0 : index
    %c0_56 = arith.constant 0 : index
    %186 = vector.load %arg14[%c0_55, %c0_56] : memref<1x128xf32, #tpu.memory_space<vmem>>, vector<1x128xf32>
    %187 = arith.mulf %185, %185 : vector<16x128xf32>
    %cst_57 = arith.constant dense<0.000000e+00> : vector<16xf32>
    %188 = vector.multi_reduction <add>, %187, %cst_57 [1] : vector<16x128xf32> to vector<16xf32>
    %189 = vector.shape_cast %188 : vector<16xf32> to vector<16x1xf32>
    %cst_58 = arith.constant 1.280000e+02 : f32
    %190 = vector.broadcast %cst_58 : f32 to vector<16x1xf32>
    %191 = arith.divf %189, %190 : vector<16x1xf32>
    %cst_59 = arith.constant 9.99999997E-7 : f32
    %192 = vector.broadcast %cst_59 : f32 to vector<16x1xf32>
    %193 = arith.addf %191, %192 : vector<16x1xf32>
    %194 = math.rsqrt %193 : vector<16x1xf32>
    %195 = vector.broadcast %194 : vector<16x1xf32> to vector<16x128xf32>
    %196 = arith.mulf %185, %195 : vector<16x128xf32>
    %197 = vector.broadcast %186 : vector<1x128xf32> to vector<16x128xf32>
    %198 = arith.mulf %196, %197 : vector<16x128xf32>
    %199 = arith.truncf %198 : vector<16x128xf32> to vector<16x128xbf16>
    %c0_60 = arith.constant 0 : index
    %c0_61 = arith.constant 0 : index
    %200 = vector.load %arg15[%c0_60, %c0_61] : memref<128x512xbf16, #tpu.memory_space<vmem>>, vector<128x512xbf16>
    %cst_62 = arith.constant dense<0.000000e+00> : vector<16x512xf32>
    %201 = tpu.matmul %199, %200, %cst_62 {dimension_numbers = #tpu.dot_dimension_numbers<[1], [0], [0], [1], [0, 0, 1, 1], [], []>} : vector<16x128xbf16>, vector<128x512xbf16>, vector<16x512xf32> -> vector<16x512xf32>
    %202 = vector.extract_strided_slice %201 {offsets = [0, 0], sizes = [16, 256], strides = [1, 1]} : vector<16x512xf32> to vector<16x256xf32>
    %203 = vector.extract_strided_slice %201 {offsets = [0, 256], sizes = [16, 256], strides = [1, 1]} : vector<16x512xf32> to vector<16x256xf32>
    %204 = arith.negf %202 : vector<16x256xf32>
    %205 = math.exp %204 : vector<16x256xf32>
    %cst_63 = arith.constant 1.000000e+00 : f32
    %206 = vector.broadcast %cst_63 : f32 to vector<16x256xf32>
    %207 = arith.addf %206, %205 : vector<16x256xf32>
    %208 = arith.divf %206, %207 : vector<16x256xf32>
    %209 = arith.mulf %202, %208 : vector<16x256xf32>
    %210 = arith.mulf %209, %203 : vector<16x256xf32>
    %211 = arith.truncf %210 : vector<16x256xf32> to vector<16x256xbf16>
    %c0_64 = arith.constant 0 : index
    %c0_65 = arith.constant 0 : index
    %212 = vector.load %arg16[%c0_64, %c0_65] : memref<256x128xbf16, #tpu.memory_space<vmem>>, vector<256x128xbf16>
    %cst_66 = arith.constant dense<0.000000e+00> : vector<16x128xf32>
    %213 = tpu.matmul %211, %212, %cst_66 {dimension_numbers = #tpu.dot_dimension_numbers<[1], [0], [0], [1], [0, 0, 1, 1], [], []>} : vector<16x256xbf16>, vector<256x128xbf16>, vector<16x128xf32> -> vector<16x128xf32>
    %214 = arith.addf %185, %213 : vector<16x128xf32>
    %c0_67 = arith.constant 0 : index
    %c0_68 = arith.constant 0 : index
    %215 = vector.load %arg17[%c0_67, %c0_68] : memref<16x128xf32, #tpu.memory_space<vmem>>, vector<16x128xf32>
    tpu.vector_store %arg17[%c0_67, %c0_68], %214 {strides = array<i32>} : memref<16x128xf32, #tpu.memory_space<vmem>>, vector<16x128xf32>,
    return
  }
  func.func @transform_0(%arg0: i32) -> (i32, i32) {
    %c0_i32 = arith.constant 0 : i32
    %c0_i32_0 = arith.constant 0 : i32
    %c0_i32_1 = arith.constant 0 : i32
    return %c0_i32, %c0_i32_0 : i32, i32
  }
  func.func @transform_1(%arg0: i32) -> (i32, i32) {
    %c0_i32 = arith.constant 0 : i32
    %c0_i32_0 = arith.constant 0 : i32
    %c0_i32_1 = arith.constant 0 : i32
    return %c0_i32, %c0_i32_0 : i32, i32
  }
  func.func @transform_2(%arg0: i32) -> (i32, i32) {
    %c0_i32 = arith.constant 0 : i32
    %c0_i32_0 = arith.constant 0 : i32
    %c0_i32_1 = arith.constant 0 : i32
    return %c0_i32, %c0_i32_0 : i32, i32
  }
  func.func @transform_3(%arg0: i32) -> (i32, i32) {
    %c0_i32 = arith.constant 0 : i32
    %c0_i32_0 = arith.constant 0 : i32
    %c0_i32_1 = arith.constant 0 : i32
    return %c0_i32, %c0_i32_0 : i32, i32
  }
  func.func @transform_4(%arg0: i32) -> (i32, i32) {
    %c0_i32 = arith.constant 0 : i32
    %c0_i32_0 = arith.constant 0 : i32
    %c0_i32_1 = arith.constant 0 : i32
    return %c0_i32, %c0_i32_0 : i32, i32
  }
  func.func @transform_5(%arg0: i32) -> (i32, i32) {
    %c0_i32 = arith.constant 0 : i32
    %c0_i32_0 = arith.constant 0 : i32
    %c0_i32_1 = arith.constant 0 : i32
    return %c0_i32, %c0_i32_0 : i32, i32
  }
  func.func @transform_6(%arg0: i32) -> (i32, i32) {
    %c0_i32 = arith.constant 0 : i32
    %c0_i32_0 = arith.constant 0 : i32
    %c0_i32_1 = arith.constant 0 : i32
    return %c0_i32, %c0_i32_0 : i32, i32
  }
  func.func @transform_7(%arg0: i32) -> (i32, i32) {
    %c0_i32 = arith.constant 0 : i32
    %c0_i32_0 = arith.constant 0 : i32
    %c0_i32_1 = arith.constant 0 : i32
    return %c0_i32, %c0_i32_0 : i32, i32
  }
  func.func @transform_8(%arg0: i32) -> (i32, i32) {
    %c0_i32 = arith.constant 0 : i32
    %c0_i32_0 = arith.constant 0 : i32
    %c0_i32_1 = arith.constant 0 : i32
    return %c0_i32, %c0_i32_0 : i32, i32
  }
  func.func @transform_9(%arg0: i32) -> (i32, i32) {
    %c0_i32 = arith.constant 0 : i32
    %c0_i32_0 = arith.constant 0 : i32
    %c0_i32_1 = arith.constant 0 : i32
    return %c0_i32, %c0_i32_0 : i32, i32
  }
  func.func @transform_10(%arg0: i32) -> (i32, i32) {
    %c0_i32 = arith.constant 0 : i32
    %c0_i32_0 = arith.constant 0 : i32
    %c0_i32_1 = arith.constant 0 : i32
    return %c0_i32, %c0_i32_0 : i32, i32
  }
  func.func @transform_11(%arg0: i32) -> (i32, i32) {
    %c0_i32 = arith.constant 0 : i32
    %c0_i32_0 = arith.constant 0 : i32
    %c0_i32_1 = arith.constant 0 : i32
    return %c0_i32, %c0_i32_0 : i32, i32
  }
  func.func @transform_12(%arg0: i32) -> (i32, i32) {
    %c0_i32 = arith.constant 0 : i32
    %c0_i32_0 = arith.constant 0 : i32
    %c0_i32_1 = arith.constant 0 : i32
    return %c0_i32, %c0_i32_0 : i32, i32
  }
  func.func @transform_13(%arg0: i32) -> (i32, i32) {
    %c0_i32 = arith.constant 0 : i32
    %c0_i32_0 = arith.constant 0 : i32
    %c0_i32_1 = arith.constant 0 : i32
    return %c0_i32, %c0_i32_0 : i32, i32
  }
  func.func @transform_14(%arg0: i32) -> (i32, i32) {
    %c0_i32 = arith.constant 0 : i32
    %c0_i32_0 = arith.constant 0 : i32
    %c0_i32_1 = arith.constant 0 : i32
    return %c0_i32, %c0_i32_0 : i32, i32
  }
  func.func @transform_15(%arg0: i32) -> (i32, i32) {
    %c0_i32 = arith.constant 0 : i32
    %c0_i32_0 = arith.constant 0 : i32
    %c0_i32_1 = arith.constant 0 : i32
    return %c0_i32, %c0_i32_0 : i32, i32
  }
  func.func @transform_16(%arg0: i32) -> (i32, i32) {
    %c0_i32 = arith.constant 0 : i32
    %c0_i32_0 = arith.constant 0 : i32
    return %arg0, %c0_i32 : i32, i32
  }
}

</mosaic_0001>

<llo_original>
// kernel: tpu_custom_call.1
$region0: #{tpu_custom_call.1}
  #allocation0 [shape = 'u32[]', space=smem, size = 0x4, offset = 0x4, fixed_abs, tag = 'smem constant byte address 0x4 - core index']
  #allocation1 [shape = 'u32[144,128]{1,0:T(1,128)}', space=vmem, size = 0x12000, scoped, tag = 'internal scratch']
  #allocation2 [shape = 'bf16[32,32]{1,0:T(16,128)(2,1)}', space=vmem, size = 0x2000, scoped, tag = 'scratch operand']
  #allocation3 [shape = 'bf16[32,32]{1,0:T(16,128)(2,1)}', space=vmem, size = 0x2000, scoped, tag = 'scratch operand']
  #allocation4 [shape = 'bf16[16,32]{1,0:T(16,128)(2,1)}', space=vmem, size = 0x1000, scoped, tag = 'scratch operand']
  #allocation5 [shape = 'bf16[16,32]{1,0:T(16,128)(2,1)}', space=vmem, size = 0x1000, scoped, tag = 'scratch operand']
  %s0 = inlined_call_operand.vmem [shape: f32[32,128], index: 0, kind: input, shape index: {}]
  %s1 = inlined_call_operand.vmem [shape: f32[16,128], index: 1, kind: input, shape index: {}]
  %s2 = inlined_call_operand.hbm [shape: f32[32,128], index: 2, kind: input, shape index: {}]
  %s3 = inlined_call_operand.hbm [shape: f32[32,128], index: 3, kind: input, shape index: {}]
  %s4 = inlined_call_operand.hbm [shape: f32[32,128], index: 4, kind: input, shape index: {}]
  %s5 = inlined_call_operand.vmem [shape: f32[1,128], index: 5, kind: input, shape index: {}]
  %s6 = inlined_call_operand.vmem [shape: bf16[128,128], index: 6, kind: input, shape index: {}]
  %s7 = inlined_call_operand.vmem [shape: bf16[128,64], index: 7, kind: input, shape index: {}]
  %s8 = inlined_call_operand.hbm [shape: bf16[128,128], index: 8, kind: input, shape index: {}]
  %s9 = inlined_call_operand.vmem [shape: f32[1,128], index: 9, kind: input, shape index: {}]
  %s10 = inlined_call_operand.hbm [shape: bf16[128,128], index: 10, kind: input, shape index: {}]
  %s11 = inlined_call_operand.vmem [shape: bf16[128,64], index: 11, kind: input, shape index: {}]
  %s12 = inlined_call_operand.hbm [shape: bf16[128,128], index: 12, kind: input, shape index: {}]
  %s13 = inlined_call_operand.vmem [shape: f32[1,128], index: 13, kind: input, shape index: {}]
  %s14 = inlined_call_operand.hbm [shape: bf16[128,512], index: 14, kind: input, shape index: {}]
  %s15 = inlined_call_operand.vmem [shape: bf16[256,128], index: 15, kind: input, shape index: {}]
  %s16 = inlined_call_operand.hbm [shape: f32[32,128], index: 16, kind: output, shape index: {}]
  %s17 = sld [smem:[#allocation0]]
  $region129: #{tpu_custom_call.1} parent=0
    _
  %s19 = ssub.s32 1, %s17
  %s20 = scalar_select 0, %s19, %s17
  $region1: #{tpu_custom_call.1} parent=0
    #allocation6 [shape = 'u8[16384]{0}', space=vmem, size = 0x4000, scoped, tag = 'input window, operand 2, single buffered']
    #allocation7 [shape = 's32[2]{0}', space=sflag, size = 0x8, scoped, tag = 'scoped memory for tpu_custom_call.1']
    #allocation8 [shape = 's32[2]{0}', space=sflag, size = 0x8, scoped, tag = 'scoped memory for tpu_custom_call.1']
    #allocation9 [shape = 'u8[16384]{0}', space=vmem, size = 0x4000, scoped, tag = 'input window, operand 3, single buffered']
    #allocation10 [shape = 's32[1]{0}', space=sflag, size = 0x4, scoped, tag = 'scoped memory for tpu_custom_call.1']
    #allocation11 [shape = 'u8[16384]{0}', space=vmem, size = 0x4000, scoped, tag = 'input window, operand 4, single buffered']
    #allocation12 [shape = 'u8[32768]{0}', space=vmem, size = 0x8000, scoped, tag = 'input window, operand 8, single buffered']
    #allocation13 [shape = 's32[1]{0}', space=sflag, size = 0x4, scoped, tag = 'scoped memory for tpu_custom_call.1']
    #allocation14 [shape = 'u8[32768]{0}', space=vmem, size = 0x8000, scoped, tag = 'input window, operand 10, single buffered']
    #allocation15 [shape = 'u8[32768]{0}', space=vmem, size = 0x8000, scoped, tag = 'input window, operand 12, single buffered']
    #allocation16 [shape = 's32[1]{0}', space=sflag, size = 0x4, scoped, tag = 'scoped memory for tpu_custom_call.1']
    #allocation17 [shape = 'u8[131072]{0}', space=vmem, size = 0x20000, scoped, tag = 'input window, operand 14, single buffered']
    #allocation18 [shape = 'u8[16384]{0}', space=vmem, size = 0x4000, scoped, tag = 'output window, operand 0']
    %21 = vsyncpa [#allocation7], 0
    %22 = vsyncpa [#allocation10], 0
    %23 = vsyncpa [#allocation13], 0
    %24 = vsyncpa [#allocation16], 0
    %25 = vsyncpa [#allocation8], 0
    %s26 = scalar_lea.sflag [#allocation8], 1
    %27 = vsyncpa %s26, 0
    loop: start=0, step=1, limit=4
    $region2: #{tpu_custom_call.1} parent=1 // loop_pre_header
      _
    $region3: #{tpu_custom_call.1} parent=1 // loop_header
      %s29 = sphi 0, %s33
      %p30 = scmp.ge.s32.totalorder %s29, 4
      %s37 = sphi 0, %s37
      %s39 = sphi 0, %s37
      %s40 = sphi 0, %s39
      %s54 = sphi 0, %s40
      %s58 = sphi 0, %s58
      %s60 = sphi 0, %s58
      %s61 = sphi 0, %s60
      %s75 = sphi 0, %s61
      %s79 = sphi 0, %s79
      %s81 = sphi 0, %s79
      %s82 = sphi 0, %s81
      %s96 = sphi 0, %s82
      %s100 = sphi 0, %s100
      %s102 = sphi 0, %s100
      %s103 = sphi 0, %s102
      %s117 = sphi 0, %s103
      %s121 = sphi 0, %s121
      %s123 = sphi 0, %s121
      %s124 = sphi 0, %s123
      %s138 = sphi 0, %s124
      %s142 = sphi 0, %s142
      %s144 = sphi 0, %s142
      %s145 = sphi 0, %s144
      %s159 = sphi 0, %s145
      %s163 = sphi 0, %s163
      %s165 = sphi 0, %s163
      %s166 = sphi 0, %s165
      %s180 = sphi 0, %s166
      %s184 = sphi 0, %s184
      %s186 = sphi 0, %s184
      %s187 = sphi 0, %s186
      %s201 = sphi 0, %s187
      %s205 = sphi 0, %s205
      %s207 = sphi 0, %s205
      %s208 = sphi 0, %s207
      %s222 = sphi 0, %s208
      %s226 = sphi 0, %s226
      %s228 = sphi 0, %s226
      %s229 = sphi 0, %s228
      %s243 = sphi 0, %s229
      %s247 = sphi 0, %s247
      %s249 = sphi 0, %s247
      %s250 = sphi 0, %s249
      %s264 = sphi 0, %s250
      %s268 = sphi 0, %s268
      %s270 = sphi 0, %s268
      %s271 = sphi 0, %s270
      %s285 = sphi 0, %s271
      %s289 = sphi 0, %s289
      %s291 = sphi 0, %s289
      %s292 = sphi 0, %s291
      %s306 = sphi 0, %s292
      %s310 = sphi 0, %s310
      %s312 = sphi 0, %s310
      %s313 = sphi 0, %s312
      %s327 = sphi 0, %s313
      %s331 = sphi 0, %s331
      %s333 = sphi 0, %s331
      %s334 = sphi 0, %s333
      %s348 = sphi 0, %s334
      %s352 = sphi 0, %s352
      %s354 = sphi 0, %s352
      %s355 = sphi 0, %s354
      %s369 = sphi 0, %s355
      %s375 = sphi 0, %s377
      %s378 = sphi 0, %s375
      %s379 = sphi 0, %s378
      %s395 = sphi 0, %s379
    $region4: #{tpu_custom_call.1} parent=1 // loop_header_branch
      %32 = sbr.rel (%p30) target = $region8
    $region5: #{tpu_custom_call.1} parent=1 // loop_body
      %s34 = ssub.s32 %s29, 1
      %s35 = ssub.s32 %s29, 2
      %s36 = sadd.s32 %s29, 1
      %s38 = sadd.s32 %s37, 1
      %p41 = scmp.eq.s32.totalorder %s29, 1
      %p42 = scmp.ne.s32.totalorder %s37, %s39
      %p43 = scmp.eq.s32.totalorder %s29, 0
      %p44 = por %p42, %p43
      %p45 = scmp.ne.s32.totalorder %s37, %s39
      %p46 = scmp.eq.s32.totalorder %s34, 1
      %p47 = por %p45, %p46
      %p48 = scmp.ne.s32.totalorder %s39, %s40
      %p49 = scmp.eq.s32.totalorder %s34, 0
      %p50 = por %p48, %p49
      %p51 = scmp.ne.s32.totalorder %s39, %s40
      %p52 = scmp.eq.s32.totalorder %s35, 1
      %p53 = por %p51, %p52
      %p55 = scmp.ne.s32.totalorder %s40, %s54
      %p56 = scmp.eq.s32.totalorder %s35, 0
      %p57 = por %p55, %p56
      %s59 = sadd.s32 %s58, 1
      %p62 = scmp.eq.s32.totalorder %s29, 1
      %p63 = scmp.ne.s32.totalorder %s58, %s60
      %p64 = scmp.eq.s32.totalorder %s29, 0
      %p65 = por %p63, %p64
      %p66 = scmp.ne.s32.totalorder %s58, %s60
      %p67 = scmp.eq.s32.totalorder %s34, 1
      %p68 = por %p66, %p67
      %p69 = scmp.ne.s32.totalorder %s60, %s61
      %p70 = scmp.eq.s32.totalorder %s34, 0
      %p71 = por %p69, %p70
      %p72 = scmp.ne.s32.totalorder %s60, %s61
      %p73 = scmp.eq.s32.totalorder %s35, 1
      %p74 = por %p72, %p73
      %p76 = scmp.ne.s32.totalorder %s61, %s75
      %p77 = scmp.eq.s32.totalorder %s35, 0
      %p78 = por %p76, %p77
      %s80 = sadd.s32 %s79, 1
      %p83 = scmp.eq.s32.totalorder %s29, 1
      %p84 = scmp.ne.s32.totalorder %s79, %s81
      %p85 = scmp.eq.s32.totalorder %s29, 0
      %p86 = por %p84, %p85
      %p87 = scmp.ne.s32.totalorder %s79, %s81
      %p88 = scmp.eq.s32.totalorder %s34, 1
      %p89 = por %p87, %p88
      %p90 = scmp.ne.s32.totalorder %s81, %s82
      %p91 = scmp.eq.s32.totalorder %s34, 0
      %p92 = por %p90, %p91
      %p93 = scmp.ne.s32.totalorder %s81, %s82
      %p94 = scmp.eq.s32.totalorder %s35, 1
      %p95 = por %p93, %p94
      %p97 = scmp.ne.s32.totalorder %s82, %s96
      %p98 = scmp.eq.s32.totalorder %s35, 0
      %p99 = por %p97, %p98
      %s101 = sadd.s32 %s100, 1
      %p104 = scmp.eq.s32.totalorder %s29, 1
      %p105 = scmp.ne.s32.totalorder %s100, %s102
      %p106 = scmp.eq.s32.totalorder %s29, 0
      %p107 = por %p105, %p106
      %p108 = scmp.ne.s32.totalorder %s100, %s102
      %p109 = scmp.eq.s32.totalorder %s34, 1
      %p110 = por %p108, %p109
      %p111 = scmp.ne.s32.totalorder %s102, %s103
      %p112 = scmp.eq.s32.totalorder %s34, 0
      %p113 = por %p111, %p112
      %p114 = scmp.ne.s32.totalorder %s102, %s103
      %p115 = scmp.eq.s32.totalorder %s35, 1
      %p116 = por %p114, %p115
      %p118 = scmp.ne.s32.totalorder %s103, %s117
      %p119 = scmp.eq.s32.totalorder %s35, 0
      %p120 = por %p118, %p119
      %s122 = sadd.s32 %s121, 1
      %p125 = scmp.eq.s32.totalorder %s29, 1
      %p126 = scmp.ne.s32.totalorder %s121, %s123
      %p127 = scmp.eq.s32.totalorder %s29, 0
      %p128 = por %p126, %p127
      %p129 = scmp.ne.s32.totalorder %s121, %s123
      %p130 = scmp.eq.s32.totalorder %s34, 1
      %p131 = por %p129, %p130
      %p132 = scmp.ne.s32.totalorder %s123, %s124
      %p133 = scmp.eq.s32.totalorder %s34, 0
      %p134 = por %p132, %p133
      %p135 = scmp.ne.s32.totalorder %s123, %s124
      %p136 = scmp.eq.s32.totalorder %s35, 1
      %p137 = por %p135, %p136
      %p139 = scmp.ne.s32.totalorder %s124, %s138
      %p140 = scmp.eq.s32.totalorder %s35, 0
      %p141 = por %p139, %p140
      %s143 = sadd.s32 %s142, 1
      %p146 = scmp.eq.s32.totalorder %s29, 1
      %p147 = scmp.ne.s32.totalorder %s142, %s144
      %p148 = scmp.eq.s32.totalorder %s29, 0
      %p149 = por %p147, %p148
      %p150 = scmp.ne.s32.totalorder %s142, %s144
      %p151 = scmp.eq.s32.totalorder %s34, 1
      %p152 = por %p150, %p151
      %p153 = scmp.ne.s32.totalorder %s144, %s145
      %p154 = scmp.eq.s32.totalorder %s34, 0
      %p155 = por %p153, %p154
      %p156 = scmp.ne.s32.totalorder %s144, %s145
      %p157 = scmp.eq.s32.totalorder %s35, 1
      %p158 = por %p156, %p157
      %p160 = scmp.ne.s32.totalorder %s145, %s159
      %p161 = scmp.eq.s32.totalorder %s35, 0
      %p162 = por %p160, %p161
      %s164 = sadd.s32 %s163, 1
      %p167 = scmp.eq.s32.totalorder %s29, 1
      %p168 = scmp.ne.s32.totalorder %s163, %s165
      %p169 = scmp.eq.s32.totalorder %s29, 0
      %p170 = por %p168, %p169
      %p171 = scmp.ne.s32.totalorder %s163, %s165
      %p172 = scmp.eq.s32.totalorder %s34, 1
      %p173 = por %p171, %p172
      %p174 = scmp.ne.s32.totalorder %s165, %s166
      %p175 = scmp.eq.s32.totalorder %s34, 0
      %p176 = por %p174, %p175
      %p177 = scmp.ne.s32.totalorder %s165, %s166
      %p178 = scmp.eq.s32.totalorder %s35, 1
      %p179 = por %p177, %p178
      %p181 = scmp.ne.s32.totalorder %s166, %s180
      %p182 = scmp.eq.s32.totalorder %s35, 0
      %p183 = por %p181, %p182
      %s185 = sadd.s32 %s184, 1
      %p188 = scmp.eq.s32.totalorder %s29, 1
      %p189 = scmp.ne.s32.totalorder %s184, %s186
      %p190 = scmp.eq.s32.totalorder %s29, 0
      %p191 = por %p189, %p190
      %p192 = scmp.ne.s32.totalorder %s184, %s186
      %p193 = scmp.eq.s32.totalorder %s34, 1
      %p194 = por %p192, %p193
      %p195 = scmp.ne.s32.totalorder %s186, %s187
      %p196 = scmp.eq.s32.totalorder %s34, 0
      %p197 = por %p195, %p196
      %p198 = scmp.ne.s32.totalorder %s186, %s187
      %p199 = scmp.eq.s32.totalorder %s35, 1
      %p200 = por %p198, %p199
      %p202 = scmp.ne.s32.totalorder %s187, %s201
      %p203 = scmp.eq.s32.totalorder %s35, 0
      %p204 = por %p202, %p203
      %s206 = sadd.s32 %s205, 1
      %p209 = scmp.eq.s32.totalorder %s29, 1
      %p210 = scmp.ne.s32.totalorder %s205, %s207
      %p211 = scmp.eq.s32.totalorder %s29, 0
      %p212 = por %p210, %p211
      %p213 = scmp.ne.s32.totalorder %s205, %s207
      %p214 = scmp.eq.s32.totalorder %s34, 1
      %p215 = por %p213, %p214
      %p216 = scmp.ne.s32.totalorder %s207, %s208
      %p217 = scmp.eq.s32.totalorder %s34, 0
      %p218 = por %p216, %p217
      %p219 = scmp.ne.s32.totalorder %s207, %s208
      %p220 = scmp.eq.s32.totalorder %s35, 1
      %p221 = por %p219, %p220
      %p223 = scmp.ne.s32.totalorder %s208, %s222
      %p224 = scmp.eq.s32.totalorder %s35, 0
      %p225 = por %p223, %p224
      %s227 = sadd.s32 %s226, 1
      %p230 = scmp.eq.s32.totalorder %s29, 1
      %p231 = scmp.ne.s32.totalorder %s226, %s228
      %p232 = scmp.eq.s32.totalorder %s29, 0
      %p233 = por %p231, %p232
      %p234 = scmp.ne.s32.totalorder %s226, %s228
      %p235 = scmp.eq.s32.totalorder %s34, 1
      %p236 = por %p234, %p235
      %p237 = scmp.ne.s32.totalorder %s228, %s229
      %p238 = scmp.eq.s32.totalorder %s34, 0
      %p239 = por %p237, %p238
      %p240 = scmp.ne.s32.totalorder %s228, %s229
      %p241 = scmp.eq.s32.totalorder %s35, 1
      %p242 = por %p240, %p241
      %p244 = scmp.ne.s32.totalorder %s229, %s243
      %p245 = scmp.eq.s32.totalorder %s35, 0
      %p246 = por %p244, %p245
      %s248 = sadd.s32 %s247, 1
      %p251 = scmp.eq.s32.totalorder %s29, 1
      %p252 = scmp.ne.s32.totalorder %s247, %s249
      %p253 = scmp.eq.s32.totalorder %s29, 0
      %p254 = por %p252, %p253
      %p255 = scmp.ne.s32.totalorder %s247, %s249
      %p256 = scmp.eq.s32.totalorder %s34, 1
      %p257 = por %p255, %p256
      %p258 = scmp.ne.s32.totalorder %s249, %s250
      %p259 = scmp.eq.s32.totalorder %s34, 0
      %p260 = por %p258, %p259
      %p261 = scmp.ne.s32.totalorder %s249, %s250
      %p262 = scmp.eq.s32.totalorder %s35, 1
      %p263 = por %p261, %p262
      %p265 = scmp.ne.s32.totalorder %s250, %s264
      %p266 = scmp.eq.s32.totalorder %s35, 0
      %p267 = por %p265, %p266
      %s269 = sadd.s32 %s268, 1
      %p272 = scmp.eq.s32.totalorder %s29, 1
      %p273 = scmp.ne.s32.totalorder %s268, %s270
      %p274 = scmp.eq.s32.totalorder %s29, 0
      %p275 = por %p273, %p274
      %p276 = scmp.ne.s32.totalorder %s268, %s270
      %p277 = scmp.eq.s32.totalorder %s34, 1
      %p278 = por %p276, %p277
      %p279 = scmp.ne.s32.totalorder %s270, %s271
      %p280 = scmp.eq.s32.totalorder %s34, 0
      %p281 = por %p279, %p280
      %p282 = scmp.ne.s32.totalorder %s270, %s271
      %p283 = scmp.eq.s32.totalorder %s35, 1
      %p284 = por %p282, %p283
      %p286 = scmp.ne.s32.totalorder %s271, %s285
      %p287 = scmp.eq.s32.totalorder %s35, 0
      %p288 = por %p286, %p287
      %s290 = sadd.s32 %s289, 1
      %p293 = scmp.eq.s32.totalorder %s29, 1
      %p294 = scmp.ne.s32.totalorder %s289, %s291
      %p295 = scmp.eq.s32.totalorder %s29, 0
      %p296 = por %p294, %p295
      %p297 = scmp.ne.s32.totalorder %s289, %s291
      %p298 = scmp.eq.s32.totalorder %s34, 1
      %p299 = por %p297, %p298
      %p300 = scmp.ne.s32.totalorder %s291, %s292
      %p301 = scmp.eq.s32.totalorder %s34, 0
      %p302 = por %p300, %p301
      %p303 = scmp.ne.s32.totalorder %s291, %s292
      %p304 = scmp.eq.s32.totalorder %s35, 1
      %p305 = por %p303, %p304
      %p307 = scmp.ne.s32.totalorder %s292, %s306
      %p308 = scmp.eq.s32.totalorder %s35, 0
      %p309 = por %p307, %p308
      %s311 = sadd.s32 %s310, 1
      %p314 = scmp.eq.s32.totalorder %s29, 1
      %p315 = scmp.ne.s32.totalorder %s310, %s312
      %p316 = scmp.eq.s32.totalorder %s29, 0
      %p317 = por %p315, %p316
      %p318 = scmp.ne.s32.totalorder %s310, %s312
      %p319 = scmp.eq.s32.totalorder %s34, 1
      %p320 = por %p318, %p319
      %p321 = scmp.ne.s32.totalorder %s312, %s313
      %p322 = scmp.eq.s32.totalorder %s34, 0
      %p323 = por %p321, %p322
      %p324 = scmp.ne.s32.totalorder %s312, %s313
      %p325 = scmp.eq.s32.totalorder %s35, 1
      %p326 = por %p324, %p325
      %p328 = scmp.ne.s32.totalorder %s313, %s327
      %p329 = scmp.eq.s32.totalorder %s35, 0
      %p330 = por %p328, %p329
      %s332 = sadd.s32 %s331, 1
      %p335 = scmp.eq.s32.totalorder %s29, 1
      %p336 = scmp.ne.s32.totalorder %s331, %s333
      %p337 = scmp.eq.s32.totalorder %s29, 0
      %p338 = por %p336, %p337
      %p339 = scmp.ne.s32.totalorder %s331, %s333
      %p340 = scmp.eq.s32.totalorder %s34, 1
      %p341 = por %p339, %p340
      %p342 = scmp.ne.s32.totalorder %s333, %s334
      %p343 = scmp.eq.s32.totalorder %s34, 0
      %p344 = por %p342, %p343
      %p345 = scmp.ne.s32.totalorder %s333, %s334
      %p346 = scmp.eq.s32.totalorder %s35, 1
      %p347 = por %p345, %p346
      %p349 = scmp.ne.s32.totalorder %s334, %s348
      %p350 = scmp.eq.s32.totalorder %s35, 0
      %p351 = por %p349, %p350
      %s353 = sadd.s32 %s352, 1
      %p356 = scmp.eq.s32.totalorder %s29, 1
      %p357 = scmp.ne.s32.totalorder %s352, %s354
      %p358 = scmp.eq.s32.totalorder %s29, 0
      %p359 = por %p357, %p358
      %p360 = scmp.ne.s32.totalorder %s352, %s354
      %p361 = scmp.eq.s32.totalorder %s34, 1
      %p362 = por %p360, %p361
      %p363 = scmp.ne.s32.totalorder %s354, %s355
      %p364 = scmp.eq.s32.totalorder %s34, 0
      %p365 = por %p363, %p364
      %p366 = scmp.ne.s32.totalorder %s354, %s355
      %p367 = scmp.eq.s32.totalorder %s35, 1
      %p368 = por %p366, %p367
      %p370 = scmp.ne.s32.totalorder %s355, %s369
      %p371 = scmp.eq.s32.totalorder %s35, 0
      %p372 = por %p370, %p371
      %s373 = ssub.s32 %s29, %s36
      %p374 = scmp.eq.s32.totalorder %s373, 0
      %s376 = sadd.s32 %s375, 1
      %s377 = scalar_select %p374, %s375, %s376
      %p380 = pneg %p374
      %p381 = scmp.eq.s32.totalorder %s29, 1
      %p382 = por %p380, %p381
      %p383 = scmp.ne.s32.totalorder %s375, %s378
      %p384 = scmp.eq.s32.totalorder %s29, 0
      %p385 = por %p383, %p384
      %p386 = scmp.ne.s32.totalorder %s375, %s378
      %p387 = scmp.eq.s32.totalorder %s34, 1
      %p388 = por %p386, %p387
      %p389 = scmp.ne.s32.totalorder %s378, %s379
      %p390 = scmp.eq.s32.totalorder %s34, 0
      %p391 = por %p389, %p390
      %p392 = scmp.ne.s32.totalorder %s378, %s379
      %p393 = scmp.eq.s32.totalorder %s35, 1
      %p394 = por %p392, %p393
      %p396 = scmp.ne.s32.totalorder %s379, %s395
      %p397 = scmp.eq.s32.totalorder %s35, 0
      %p398 = por %p396, %p397
      %p399 = scmp.le.s32.totalorder 1, %s29
      %p400 = scmp.lt.s32.totalorder %s29, 3
      %p401 = pnand %p399, %p400
      %p402 = pneg %p401
      // Predicated region
      $region9: #{tpu_custom_call.1} parent=5 // pred_check
        _
      $region10: #{tpu_custom_call.1} parent=5 // pred_check_branch
        %404 = sbr.rel (%p401) target = $region12
      $region11: #{tpu_custom_call.1} parent=5 // pred_region
        %s405 = ssub.s32 %s29, 1
        // Predicated region
        $region13: #{tpu_custom_call.1} parent=11 // pred_check
          %p406 = pneg %p50
        $region14: #{tpu_custom_call.1} parent=11 // pred_check_branch
          %408 = sbr.rel (%p406) target = $region16
        $region15: #{tpu_custom_call.1} parent=11 // pred_region
          _
        $region16: #{tpu_custom_call.1} parent=11 // pred_fallthru
          _
        // Predicated region
        $region17: #{tpu_custom_call.1} parent=11 // pred_check
          %p409 = pneg %p71
        $region18: #{tpu_custom_call.1} parent=11 // pred_check_branch
          %411 = sbr.rel (%p409) target = $region20
        $region19: #{tpu_custom_call.1} parent=11 // pred_region
          _
        $region20: #{tpu_custom_call.1} parent=11 // pred_fallthru
          _
        // Predicated region
        $region21: #{tpu_custom_call.1} parent=11 // pred_check
          %p412 = pneg %p92
        $region22: #{tpu_custom_call.1} parent=11 // pred_check_branch
          %414 = sbr.rel (%p412) target = $region24
        $region23: #{tpu_custom_call.1} parent=11 // pred_region
          %s416 = ssub.s32 512, 512
          %417 = vsyncadd [#allocation7], %s416
          %s418 = sshll.u32 [#allocation6], 4
          %s419 = int_to_ptr.vmem [resolvable:$true] %s418
          %424 = dma.hbm_to_vmem [thread:$0]  %s2, 512, %s419, [#allocation7], 128, 128, 8
        $region24: #{tpu_custom_call.1} parent=11 // pred_fallthru
          _
        // Predicated region
        $region25: #{tpu_custom_call.1} parent=11 // pred_check
          %p425 = pneg %p113
        $region26: #{tpu_custom_call.1} parent=11 // pred_check_branch
          %427 = sbr.rel (%p425) target = $region28
        $region27: #{tpu_custom_call.1} parent=11 // pred_region
          %s429 = ssub.s32 512, 512
          %430 = vsyncadd [#allocation10], %s429
          %s431 = sshll.u32 [#allocation9], 4
          %s432 = int_to_ptr.vmem [resolvable:$true] %s431
          %437 = dma.hbm_to_vmem [thread:$0]  %s3, 512, %s432, [#allocation10], 128, 128, 8
        $region28: #{tpu_custom_call.1} parent=11 // pred_fallthru
          _
        // Predicated region
        $region29: #{tpu_custom_call.1} parent=11 // pred_check
          %p438 = pneg %p134
        $region30: #{tpu_custom_call.1} parent=11 // pred_check_branch
          %440 = sbr.rel (%p438) target = $region32
        $region31: #{tpu_custom_call.1} parent=11 // pred_region
          %s442 = ssub.s32 512, 512
          %443 = vsyncadd [#allocation10], %s442
          %s444 = sshll.u32 [#allocation11], 4
          %s445 = int_to_ptr.vmem [resolvable:$true] %s444
          %450 = dma.hbm_to_vmem [thread:$0]  %s4, 512, %s445, [#allocation10], 128, 128, 8
        $region32: #{tpu_custom_call.1} parent=11 // pred_fallthru
          _
        // Predicated region
        $region33: #{tpu_custom_call.1} parent=11 // pred_check
          %p451 = pneg %p155
        $region34: #{tpu_custom_call.1} parent=11 // pred_check_branch
          %453 = sbr.rel (%p451) target = $region36
        $region35: #{tpu_custom_call.1} parent=11 // pred_region
          _
        $region36: #{tpu_custom_call.1} parent=11 // pred_fallthru
          _
        // Predicated region
        $region37: #{tpu_custom_call.1} parent=11 // pred_check
          %p454 = pneg %p176
        $region38: #{tpu_custom_call.1} parent=11 // pred_check_branch
          %456 = sbr.rel (%p454) target = $region40
        $region39: #{tpu_custom_call.1} parent=11 // pred_region
          _
        $region40: #{tpu_custom_call.1} parent=11 // pred_fallthru
          _
        // Predicated region
        $region41: #{tpu_custom_call.1} parent=11 // pred_check
          %p457 = pneg %p197
        $region42: #{tpu_custom_call.1} parent=11 // pred_check_branch
          %459 = sbr.rel (%p457) target = $region44
        $region43: #{tpu_custom_call.1} parent=11 // pred_region
          _
        $region44: #{tpu_custom_call.1} parent=11 // pred_fallthru
          _
        // Predicated region
        $region45: #{tpu_custom_call.1} parent=11 // pred_check
          %p460 = pneg %p218
        $region46: #{tpu_custom_call.1} parent=11 // pred_check_branch
          %462 = sbr.rel (%p460) target = $region48
        $region47: #{tpu_custom_call.1} parent=11 // pred_region
          %s464 = ssub.s32 1024, 1024
          %465 = vsyncadd [#allocation13], %s464
          %s466 = sshll.u32 [#allocation12], 4
          %s467 = int_to_ptr.vmem [resolvable:$true] %s466
          %472 = dma.hbm_to_vmem [thread:$0]  %s8, 1024, %s467, [#allocation13], 64, 64, 4
        $region48: #{tpu_custom_call.1} parent=11 // pred_fallthru
          _
        // Predicated region
        $region49: #{tpu_custom_call.1} parent=11 // pred_check
          %p473 = pneg %p239
        $region50: #{tpu_custom_call.1} parent=11 // pred_check_branch
          %475 = sbr.rel (%p473) target = $region52
        $region51: #{tpu_custom_call.1} parent=11 // pred_region
          _
        $region52: #{tpu_custom_call.1} parent=11 // pred_fallthru
          _
        // Predicated region
        $region53: #{tpu_custom_call.1} parent=11 // pred_check
          %p476 = pneg %p260
        $region54: #{tpu_custom_call.1} parent=11 // pred_check_branch
          %478 = sbr.rel (%p476) target = $region56
        $region55: #{tpu_custom_call.1} parent=11 // pred_region
          %s480 = ssub.s32 1024, 1024
          %481 = vsyncadd [#allocation13], %s480
          %s482 = sshll.u32 [#allocation14], 4
          %s483 = int_to_ptr.vmem [resolvable:$true] %s482
          %488 = dma.hbm_to_vmem [thread:$0]  %s10, 1024, %s483, [#allocation13], 64, 64, 4
        $region56: #{tpu_custom_call.1} parent=11 // pred_fallthru
          _
        // Predicated region
        $region57: #{tpu_custom_call.1} parent=11 // pred_check
          %p489 = pneg %p281
        $region58: #{tpu_custom_call.1} parent=11 // pred_check_branch
          %491 = sbr.rel (%p489) target = $region60
        $region59: #{tpu_custom_call.1} parent=11 // pred_region
          _
        $region60: #{tpu_custom_call.1} parent=11 // pred_fallthru
          _
        // Predicated region
        $region61: #{tpu_custom_call.1} parent=11 // pred_check
          %p492 = pneg %p302
        $region62: #{tpu_custom_call.1} parent=11 // pred_check_branch
          %494 = sbr.rel (%p492) target = $region64
        $region63: #{tpu_custom_call.1} parent=11 // pred_region
          %s496 = ssub.s32 1024, 1024
          %497 = vsyncadd [#allocation16], %s496
          %s498 = sshll.u32 [#allocation15], 4
          %s499 = int_to_ptr.vmem [resolvable:$true] %s498
          %504 = dma.hbm_to_vmem [thread:$0]  %s12, 1024, %s499, [#allocation16], 64, 64, 4
        $region64: #{tpu_custom_call.1} parent=11 // pred_fallthru
          _
        // Predicated region
        $region65: #{tpu_custom_call.1} parent=11 // pred_check
          %p505 = pneg %p323
        $region66: #{tpu_custom_call.1} parent=11 // pred_check_branch
          %507 = sbr.rel (%p505) target = $region68
        $region67: #{tpu_custom_call.1} parent=11 // pred_region
          _
        $region68: #{tpu_custom_call.1} parent=11 // pred_fallthru
          _
        // Predicated region
        $region69: #{tpu_custom_call.1} parent=11 // pred_check
          %p508 = pneg %p344
        $region70: #{tpu_custom_call.1} parent=11 // pred_check_branch
          %510 = sbr.rel (%p508) target = $region72
        $region71: #{tpu_custom_call.1} parent=11 // pred_region
          %s512 = ssub.s32 4096, 4096
          %513 = vsyncadd [#allocation16], %s512
          %s514 = sshll.u32 [#allocation17], 4
          %s515 = int_to_ptr.vmem [resolvable:$true] %s514
          %520 = dma.hbm_to_vmem [thread:$0]  %s14, 4096, %s515, [#allocation16], 256, 256, 16
        $region72: #{tpu_custom_call.1} parent=11 // pred_fallthru
          _
        // Predicated region
        $region73: #{tpu_custom_call.1} parent=11 // pred_check
          %p521 = pneg %p365
        $region74: #{tpu_custom_call.1} parent=11 // pred_check_branch
          %523 = sbr.rel (%p521) target = $region76
        $region75: #{tpu_custom_call.1} parent=11 // pred_region
          _
        $region76: #{tpu_custom_call.1} parent=11 // pred_fallthru
          _
      $region12: #{tpu_custom_call.1} parent=5 // pred_fallthru
        _
      %p524 = scmp.lt.s32.totalorder %s29, 2
      // Predicated region
      $region77: #{tpu_custom_call.1} parent=5 // pred_check
        %p525 = pneg %p524
      $region78: #{tpu_custom_call.1} parent=5 // pred_check_branch
        %527 = sbr.rel (%p525) target = $region80
      $region79: #{tpu_custom_call.1} parent=5 // pred_region
        _
      $region80: #{tpu_custom_call.1} parent=5 // pred_fallthru
        _
      %p528 = scmp.le.s32.totalorder 1, %s29
      %p529 = scmp.lt.s32.totalorder %s29, 3
      %p530 = pnand %p528, %p529
      %p531 = pneg %p530
      // Predicated region
      $region81: #{tpu_custom_call.1} parent=5 // pred_check
        _
      $region82: #{tpu_custom_call.1} parent=5 // pred_check_branch
        %533 = sbr.rel (%p530) target = $region84
      $region83: #{tpu_custom_call.1} parent=5 // pred_region
        %s534 = ssub.s32 %s29, 1
        // Predicated region
        $region85: #{tpu_custom_call.1} parent=83 // pred_check
          %p535 = pneg %p92
        $region86: #{tpu_custom_call.1} parent=83 // pred_check_branch
          %537 = sbr.rel (%p535) target = $region88
        $region87: #{tpu_custom_call.1} parent=83 // pred_region
          %538 = dma.done [#allocation7], 512
        $region88: #{tpu_custom_call.1} parent=83 // pred_fallthru
          _
        // Predicated region
        $region89: #{tpu_custom_call.1} parent=83 // pred_check
          %p539 = pneg %p113
        $region90: #{tpu_custom_call.1} parent=83 // pred_check_branch
          %541 = sbr.rel (%p539) target = $region92
        $region91: #{tpu_custom_call.1} parent=83 // pred_region
          %542 = dma.done [#allocation10], 512
        $region92: #{tpu_custom_call.1} parent=83 // pred_fallthru
          _
        // Predicated region
        $region93: #{tpu_custom_call.1} parent=83 // pred_check
          %p543 = pneg %p134
        $region94: #{tpu_custom_call.1} parent=83 // pred_check_branch
          %545 = sbr.rel (%p543) target = $region96
        $region95: #{tpu_custom_call.1} parent=83 // pred_region
          %546 = dma.done [#allocation10], 512
        $region96: #{tpu_custom_call.1} parent=83 // pred_fallthru
          _
        // Predicated region
        $region97: #{tpu_custom_call.1} parent=83 // pred_check
          %p547 = pneg %p218
        $region98: #{tpu_custom_call.1} parent=83 // pred_check_branch
          %549 = sbr.rel (%p547) target = $region100
        $region99: #{tpu_custom_call.1} parent=83 // pred_region
          %550 = dma.done [#allocation13], 1024
        $region100: #{tpu_custom_call.1} parent=83 // pred_fallthru
          _
        // Predicated region
        $region101: #{tpu_custom_call.1} parent=83 // pred_check
          %p551 = pneg %p260
        $region102: #{tpu_custom_call.1} parent=83 // pred_check_branch
          %553 = sbr.rel (%p551) target = $region104
        $region103: #{tpu_custom_call.1} parent=83 // pred_region
          %554 = dma.done [#allocation13], 1024
        $region104: #{tpu_custom_call.1} parent=83 // pred_fallthru
          _
        // Predicated region
        $region105: #{tpu_custom_call.1} parent=83 // pred_check
          %p555 = pneg %p302
        $region106: #{tpu_custom_call.1} parent=83 // pred_check_branch
          %557 = sbr.rel (%p555) target = $region108
        $region107: #{tpu_custom_call.1} parent=83 // pred_region
          %558 = dma.done [#allocation16], 1024
        $region108: #{tpu_custom_call.1} parent=83 // pred_fallthru
          _
        // Predicated region
        $region109: #{tpu_custom_call.1} parent=83 // pred_check
          %p559 = pneg %p344
        $region110: #{tpu_custom_call.1} parent=83 // pred_check_branch
          %561 = sbr.rel (%p559) target = $region112
        $region111: #{tpu_custom_call.1} parent=83 // pred_region
          %562 = dma.done [#allocation16], 4096
        $region112: #{tpu_custom_call.1} parent=83 // pred_fallthru
          _
        %p563 = pneg %p50
        %p564 = pneg %p47
        %p565 = pneg %p71
        %p566 = pneg %p68
        %p567 = pneg %p92
        %p568 = pneg %p89
        %p569 = pneg %p113
        %p570 = pneg %p110
        %p571 = pneg %p134
        %p572 = pneg %p131
        %p573 = pneg %p155
        %p574 = pneg %p152
        %p575 = pneg %p176
        %p576 = pneg %p173
        %p577 = pneg %p197
        %p578 = pneg %p194
        %p579 = pneg %p218
        %p580 = pneg %p215
        %p581 = pneg %p239
        %p582 = pneg %p236
        %p583 = pneg %p260
        %p584 = pneg %p257
        %p585 = pneg %p281
        %p586 = pneg %p278
        %p587 = pneg %p302
        %p588 = pneg %p299
        %p589 = pneg %p323
        %p590 = pneg %p320
        %p591 = pneg %p344
        %p592 = pneg %p341
        %p593 = pneg %p365
        %p594 = pneg %p362
        %p595 = pneg %p391
        %p596 = pneg %p388
        %s597 = sand.u32 %s378, 1
        %s598 = scalar_lea.sflag [#allocation8], %s597
        %s599 = sand.u32 %s378, 1
        %s600 = smul.addr %s599, 16
        %s601 = scalar_lea.vmem [#allocation18], %s600
        %s602 = smul.u32 2, %s34
        %p604 = scmp.eq.s32.totalorder %s34, 0
        // Predicated region
        $region113: #{tpu_custom_call.1} parent=83 // pred_check
          %p605 = pneg %p604
        $region114: #{tpu_custom_call.1} parent=83 // pred_check_branch
          %607 = sbr.rel (%p605) target = $region116
        $region115: #{tpu_custom_call.1} parent=83 // pred_region
          %v608 = vld [vmem:[%s0] sm:$0xff]
          %v609 = vld [vmem:[%s0 + $0x8] sm:$0xff]
          %v610 = vld [vmem:[%s0 + $0x10] sm:$0xff]
          %v611 = vld [vmem:[%s0 + $0x18] sm:$0xff]
          %v612 = vld [vmem:[%s5] sm:$0x1]
          %v613 = vmul.f32 %v608, %v608
          %v614 = vmul.f32 %v609, %v609
          %v615 = vmul.f32 %v610, %v610
          %v616 = vmul.f32 %v611, %v611
          %617 = vadd.xlane.f32.xlu0 %v613
          %v618 = vpop.xlane.xlu0 %617
          %619 = vadd.xlane.f32.xlu0 %v614
          %v620 = vpop.xlane.xlu0 %619
          %621 = vadd.xlane.f32.xlu0 %v615
          %v622 = vpop.xlane.xlu0 %621
          %623 = vadd.xlane.f32.xlu0 %v616
          %v624 = vpop.xlane.xlu0 %623
          %v625 = vrcp.pop 128.0
          %v626 = vmul.f32 %v618, %v625
          %v627 = vmul.f32 %v620, %v625
          %v628 = vmul.f32 %v622, %v625
          %v629 = vmul.f32 %v624, %v625
          %v630 = vadd.f32 %v626, 1e-06
          %v631 = vadd.f32 %v627, 1e-06
          %v632 = vadd.f32 %v628, 1e-06
          %v633 = vadd.f32 %v629, 1e-06
          %v634 = vrsqrt.pop %v630
          %v635 = vrsqrt.pop %v631
          %v636 = vrsqrt.pop %v632
          %v637 = vrsqrt.pop %v633
          %v638 = vmul.f32 %v608, %v634
          %v639 = vmul.f32 %v609, %v635
          %v640 = vmul.f32 %v610, %v636
          %v641 = vmul.f32 %v611, %v637
          %v643 = vlaneseq
          %v644 = vshrl.u32 %v643, 7
          %v645 = vsub.s32 0, %v644
          %v646 = vrot.slane %v612, %v645
          %v648 = vmul.f32 %v638, %v646
          %v649 = vmul.f32 %v639, %v646
          %v650 = vmul.f32 %v640, %v646
          %v651 = vmul.f32 %v641, %v646
          %v652 = vpack.c.bf16 %v649, %v648
          %v653 = vpack.c.bf16 %v651, %v650
          %v654 = vld [vmem:[%s7] sm:$0xf]
          %v655 = vld [vmem:[%s7 + $0x4] sm:$0xf]
          %v656 = vld [vmem:[%s7 + $0x8] sm:$0xf]
          %v657 = vld [vmem:[%s7 + $0xc] sm:$0xf]
          %v658 = vld [vmem:[%s7 + $0x10] sm:$0xf]
          %v659 = vld [vmem:[%s7 + $0x14] sm:$0xf]
          %v660 = vld [vmem:[%s7 + $0x18] sm:$0xf]
          %v661 = vld [vmem:[%s7 + $0x1c] sm:$0xf]
          %v662 = vld [vmem:[%s7 + $0x20] sm:$0xf]
          %v663 = vld [vmem:[%s7 + $0x24] sm:$0xf]
          %v664 = vld [vmem:[%s7 + $0x28] sm:$0xf]
          %v665 = vld [vmem:[%s7 + $0x2c] sm:$0xf]
          %v666 = vld [vmem:[%s7 + $0x30] sm:$0xf]
          %v667 = vld [vmem:[%s7 + $0x34] sm:$0xf]
          %v668 = vld [vmem:[%s7 + $0x38] sm:$0xf]
          %v669 = vld [vmem:[%s7 + $0x3c] sm:$0xf]
          %v686 = vunpack.c.l.b16 %v654
          %v687 = vunpack.c.l.b16 %v655
          %v688 = vunpack.c.l.b16 %v656
          %v689 = vunpack.c.l.b16 %v657
          %v690 = vunpack.c.l.b16 %v658
          %v691 = vunpack.c.l.b16 %v659
          %v692 = vunpack.c.l.b16 %v660
          %v693 = vunpack.c.l.b16 %v661
          %v694 = vunpack.c.l.b16 %v662
          %v695 = vunpack.c.l.b16 %v663
          %v696 = vunpack.c.l.b16 %v664
          %v697 = vunpack.c.l.b16 %v665
          %v698 = vunpack.c.l.b16 %v666
          %v699 = vunpack.c.l.b16 %v667
          %v700 = vunpack.c.l.b16 %v668
          %v701 = vunpack.c.l.b16 %v669
          %v702 = vpack.c.b16 %v687, %v686
          %v703 = vpack.c.b16 %v689, %v688
          %v704 = vpack.c.b16 %v691, %v690
          %v705 = vpack.c.b16 %v693, %v692
          %v706 = vpack.c.b16 %v695, %v694
          %v707 = vpack.c.b16 %v697, %v696
          %v708 = vpack.c.b16 %v699, %v698
          %v709 = vpack.c.b16 %v701, %v700
          %718 = vmatprep.subr.bf16.mxu0 0
          %719 = vmatpush1.bf16.msra.mxu0 %v702
          %720 = vmatprep.subr.bf16.mxu0 0
          %721 = vmatpush1.bf16.msra.mxu0 %v703
          %722 = vmatprep.subr.bf16.mxu0 0
          %723 = vmatpush1.bf16.msra.mxu0 %v704
          %724 = vmatprep.subr.bf16.mxu0 0
          %725 = vmatpush1.bf16.msra.mxu0 %v705
          %726 = vmatprep.subr.bf16.mxu0 0
          %727 = vmatpush1.bf16.msra.mxu0 %v706
          %728 = vmatprep.subr.bf16.mxu0 0
          %729 = vmatpush1.bf16.msra.mxu0 %v707
          %730 = vmatprep.subr.bf16.mxu0 0
          %731 = vmatpush1.bf16.msra.mxu0 %v708
          %732 = vmatprep.subr.bf16.mxu0 0
          %733 = vmatpush1.bf16.msra.mxu0 %v709
          %734 = vmatprep.subr.bf16.mxu0 0
          %735 = vmatpush1.bf16.msra.mxu0 0
          %736 = vmatprep.subr.bf16.mxu0 0
          %737 = vmatpush1.bf16.msra.mxu0 0
          %738 = vmatprep.subr.bf16.mxu0 0
          %739 = vmatpush1.bf16.msra.mxu0 0
          %740 = vmatprep.subr.bf16.mxu0 0
          %741 = vmatpush1.bf16.msra.mxu0 0
          %742 = vmatprep.subr.bf16.mxu0 0
          %743 = vmatpush1.bf16.msra.mxu0 0
          %744 = vmatprep.subr.bf16.mxu0 0
          %745 = vmatpush1.bf16.msra.mxu0 0
          %746 = vmatprep.subr.bf16.mxu0 0
          %747 = vmatpush1.bf16.msra.mxu0 0
          %748 = vmatprep.subr.bf16.mxu0 0
          %749 = vmatpush1.bf16.msra.mxu0 0
          %750 = vmatprep.mubr.bf16.mxu0 0
          %751 = vmatmul.mubr.bf16.gmra.mrb[0].mxu0 %v652
          %v752 = vpop.f32.mrb[0].mxu0
          %v753 = vadd.f32 0.0, %v752
          %v754 = vpop.f32.mrb[0].mxu0
          %v755 = vpop.f32.mrb[0].mxu0
          %v756 = vadd.f32 0.0, %v755
          %v757 = vpop.f32.mrb[0].mxu0
          %758 = vmatprep.mubr.bf16.mxu0 0
          %759 = vmatmul.mubr.bf16.gmra.mrb[0].mxu0 %v653
          %v760 = vpop.f32.mrb[0].mxu0
          %v761 = vadd.f32 0.0, %v760
          %v762 = vpop.f32.mrb[0].mxu0
          %v763 = vpop.f32.mrb[0].mxu0
          %v764 = vadd.f32 0.0, %v763
          %v765 = vpop.f32.mrb[0].mxu0
          %766 = vdwg.mxu0
          %v767 = vld [vmem:[#allocation6] sm:$0xff]
          %v768 = vld [vmem:[#allocation6 + $0x8] sm:$0xff]
          %v769 = vld [vmem:[#allocation6 + $0x10] sm:$0xff]
          %v770 = vld [vmem:[#allocation6 + $0x18] sm:$0xff]
          %v771 = vld [vmem:[#allocation9] sm:$0xff]
          %v772 = vld [vmem:[#allocation9 + $0x8] sm:$0xff]
          %v773 = vld [vmem:[#allocation9 + $0x10] sm:$0xff]
          %v774 = vld [vmem:[#allocation9 + $0x18] sm:$0xff]
          %v775 = vld [vmem:[#allocation11] sm:$0xff]
          %v776 = vld [vmem:[#allocation11 + $0x8] sm:$0xff]
          %v777 = vld [vmem:[#allocation11 + $0x10] sm:$0xff]
          %v778 = vld [vmem:[#allocation11 + $0x18] sm:$0xff]
          %783 = vrot.lane.b32.xlu0 %v753, 120
          %v784 = vpop.permute.xlu0 %783
          %785 = vrot.lane.b32.xlu0 %v756, 120
          %v786 = vpop.permute.xlu0 %785
          %787 = vrot.lane.b32.xlu0 %v761, 120
          %v788 = vpop.permute.xlu0 %787
          %789 = vrot.lane.b32.xlu0 %v764, 120
          %v790 = vpop.permute.xlu0 %789
          %795 = vrot.lane.b32.xlu0 %v753, 24
          %v796 = vpop.permute.xlu0 %795
          %797 = vrot.lane.b32.xlu0 %v756, 24
          %v798 = vpop.permute.xlu0 %797
          %799 = vrot.lane.b32.xlu0 %v761, 24
          %v800 = vpop.permute.xlu0 %799
          %801 = vrot.lane.b32.xlu0 %v764, 24
          %v802 = vpop.permute.xlu0 %801
          %vm807 = vcmask 195584
          %v808 = vsel %vm807, %v784, %v796
          %v809 = vsel %vm807, %v786, %v798
          %v810 = vsel %vm807, %v788, %v800
          %v811 = vsel %vm807, %v790, %v802
          %812 = vrot.lane.b32.xlu0 %v753, 104
          %v813 = vpop.permute.xlu0 %812
          %814 = vrot.lane.b32.xlu0 %v756, 104
          %v815 = vpop.permute.xlu0 %814
          %816 = vrot.lane.b32.xlu0 %v761, 104
          %v817 = vpop.permute.xlu0 %816
          %818 = vrot.lane.b32.xlu0 %v764, 104
          %v819 = vpop.permute.xlu0 %818
          %824 = vrot.lane.b32.xlu0 %v753, 8
          %v825 = vpop.permute.xlu0 %824
          %826 = vrot.lane.b32.xlu0 %v756, 8
          %v827 = vpop.permute.xlu0 %826
          %828 = vrot.lane.b32.xlu0 %v761, 8
          %v829 = vpop.permute.xlu0 %828
          %830 = vrot.lane.b32.xlu0 %v764, 8
          %v831 = vpop.permute.xlu0 %830
          %vm836 = vcmask 64512
          %v837 = vsel %vm836, %v813, %v825
          %v838 = vsel %vm836, %v815, %v827
          %v839 = vsel %vm836, %v817, %v829
          %v840 = vsel %vm836, %v819, %v831
          %v841 = vmul.f32 %v753, %v767
          %v842 = vmul.f32 %v756, %v768
          %v843 = vmul.f32 %v761, %v769
          %v844 = vmul.f32 %v764, %v770
          %v845 = vmul.f32 %v808, %v771
          %v846 = vmul.f32 %v809, %v772
          %v847 = vmul.f32 %v810, %v773
          %v848 = vmul.f32 %v811, %v774
          %v849 = vadd.f32 %v841, %v845
          %v850 = vadd.f32 %v842, %v846
          %v851 = vadd.f32 %v843, %v847
          %v852 = vadd.f32 %v844, %v848
          %v853 = vmul.f32 %v837, %v775
          %v854 = vmul.f32 %v838, %v776
          %v855 = vmul.f32 %v839, %v777
          %v856 = vmul.f32 %v840, %v778
          %v857 = vadd.f32 %v849, %v853
          %v858 = vadd.f32 %v850, %v854
          %v859 = vadd.f32 %v851, %v855
          %v860 = vadd.f32 %v852, %v856
          %v861 = vpack.c.bf16 %v858, %v857
          %v862 = vpack.c.bf16 %v860, %v859
          %vm863 = vcmask 261120
          %864 = vst.msk [vmem:[#allocation2] sm:$0xff] %vm863, %v861
          %865 = vst.msk [vmem:[#allocation2 + $0x8] sm:$0xff] %vm863, %v862
          %v866 = vpack.c.bf16 %v756, %v753
          %v867 = vpack.c.bf16 %v764, %v761
          %870 = vrot.lane.b32.xlu0 %v866, 96
          %v871 = vpop.permute.xlu0 %870
          %872 = vrot.lane.b32.xlu0 %v867, 96
          %v873 = vpop.permute.xlu0 %872
          %876 = vst.msk [vmem:[#allocation3] sm:$0xff] %vm863, %v871
          %877 = vst.msk [vmem:[#allocation3 + $0x8] sm:$0xff] %vm863, %v873
          %v878 = vld [vmem:[%s1] sm:$0xff]
          %v879 = vld [vmem:[%s1 + $0x8] sm:$0xff]
          %v880 = vpack.c.bf16 %v879, %v878
          %v881 = vld [vmem:[%s11] sm:$0xf]
          %v882 = vld [vmem:[%s11 + $0x4] sm:$0xf]
          %v883 = vld [vmem:[%s11 + $0x8] sm:$0xf]
          %v884 = vld [vmem:[%s11 + $0xc] sm:$0xf]
          %v885 = vld [vmem:[%s11 + $0x10] sm:$0xf]
          %v886 = vld [vmem:[%s11 + $0x14] sm:$0xf]
          %v887 = vld [vmem:[%s11 + $0x18] sm:$0xf]
          %v888 = vld [vmem:[%s11 + $0x1c] sm:$0xf]
          %v889 = vld [vmem:[%s11 + $0x20] sm:$0xf]
          %v890 = vld [vmem:[%s11 + $0x24] sm:$0xf]
          %v891 = vld [vmem:[%s11 + $0x28] sm:$0xf]
          %v892 = vld [vmem:[%s11 + $0x2c] sm:$0xf]
          %v893 = vld [vmem:[%s11 + $0x30] sm:$0xf]
          %v894 = vld [vmem:[%s11 + $0x34] sm:$0xf]
          %v895 = vld [vmem:[%s11 + $0x38] sm:$0xf]
          %v896 = vld [vmem:[%s11 + $0x3c] sm:$0xf]
          %v913 = vunpack.c.l.b16 %v881
          %v914 = vunpack.c.l.b16 %v882
          %v915 = vunpack.c.l.b16 %v883
          %v916 = vunpack.c.l.b16 %v884
          %v917 = vunpack.c.l.b16 %v885
          %v918 = vunpack.c.l.b16 %v886
          %v919 = vunpack.c.l.b16 %v887
          %v920 = vunpack.c.l.b16 %v888
          %v921 = vunpack.c.l.b16 %v889
          %v922 = vunpack.c.l.b16 %v890
          %v923 = vunpack.c.l.b16 %v891
          %v924 = vunpack.c.l.b16 %v892
          %v925 = vunpack.c.l.b16 %v893
          %v926 = vunpack.c.l.b16 %v894
          %v927 = vunpack.c.l.b16 %v895
          %v928 = vunpack.c.l.b16 %v896
          %v929 = vpack.c.b16 %v914, %v913
          %v930 = vpack.c.b16 %v916, %v915
          %v931 = vpack.c.b16 %v918, %v917
          %v932 = vpack.c.b16 %v920, %v919
          %v933 = vpack.c.b16 %v922, %v921
          %v934 = vpack.c.b16 %v924, %v923
          %v935 = vpack.c.b16 %v926, %v925
          %v936 = vpack.c.b16 %v928, %v927
          %945 = vmatprep.subr.bf16.mxu0 0
          %946 = vmatpush1.bf16.msra.mxu0 %v929
          %947 = vmatprep.subr.bf16.mxu0 0
          %948 = vmatpush1.bf16.msra.mxu0 %v930
          %949 = vmatprep.subr.bf16.mxu0 0
          %950 = vmatpush1.bf16.msra.mxu0 %v931
          %951 = vmatprep.subr.bf16.mxu0 0
          %952 = vmatpush1.bf16.msra.mxu0 %v932
          %953 = vmatprep.subr.bf16.mxu0 0
          %954 = vmatpush1.bf16.msra.mxu0 %v933
          %955 = vmatprep.subr.bf16.mxu0 0
          %956 = vmatpush1.bf16.msra.mxu0 %v934
          %957 = vmatprep.subr.bf16.mxu0 0
          %958 = vmatpush1.bf16.msra.mxu0 %v935
          %959 = vmatprep.subr.bf16.mxu0 0
          %960 = vmatpush1.bf16.msra.mxu0 %v936
          %961 = vmatprep.subr.bf16.mxu0 0
          %962 = vmatpush1.bf16.msra.mxu0 0
          %963 = vmatprep.subr.bf16.mxu0 0
          %964 = vmatpush1.bf16.msra.mxu0 0
          %965 = vmatprep.subr.bf16.mxu0 0
          %966 = vmatpush1.bf16.msra.mxu0 0
          %967 = vmatprep.subr.bf16.mxu0 0
          %968 = vmatpush1.bf16.msra.mxu0 0
          %969 = vmatprep.subr.bf16.mxu0 0
          %970 = vmatpush1.bf16.msra.mxu0 0
          %971 = vmatprep.subr.bf16.mxu0 0
          %972 = vmatpush1.bf16.msra.mxu0 0
          %973 = vmatprep.subr.bf16.mxu0 0
          %974 = vmatpush1.bf16.msra.mxu0 0
          %975 = vmatprep.subr.bf16.mxu0 0
          %976 = vmatpush1.bf16.msra.mxu0 0
          %977 = vmatprep.mubr.bf16.mxu0 0
          %978 = vmatmul.mubr.bf16.gmra.mrb[0].mxu0 %v880
          %v979 = vpop.f32.mrb[0].mxu0
          %v980 = vadd.f32 0.0, %v979
          %v981 = vpop.f32.mrb[0].mxu0
          %v982 = vpop.f32.mrb[0].mxu0
          %v983 = vadd.f32 0.0, %v982
          %v984 = vpop.f32.mrb[0].mxu0
          %985 = vdwg.mxu0
          %v986 = vpack.c.bf16 %v983, %v980
          %987 = vst.msk [vmem:[#allocation4] sm:$0xff] %vm863, %v986
          %989 = vrot.lane.b32.xlu0 %v986, 96
          %v990 = vpop.permute.xlu0 %989
          %992 = vst.msk [vmem:[#allocation5] sm:$0xff] %vm863, %v990
        $region116: #{tpu_custom_call.1} parent=83 // pred_fallthru
          _
        %s993 = smul.u32 %s34, 16
        %s994 = scalar_lea.vmem %s0, %s993
        %v995 = vld [vmem:[%s994] sm:$0xff]
        %v996 = vld [vmem:[%s994 + $0x8] sm:$0xff]
        %s997 = scalar_lea.vmem [#allocation6], %s993
        %v998 = vld [vmem:[%s997] sm:$0xff]
        %v999 = vld [vmem:[%s997 + $0x8] sm:$0xff]
        %s1000 = scalar_lea.vmem [#allocation9], %s993
        %v1001 = vld [vmem:[%s1000] sm:$0xff]
        %v1002 = vld [vmem:[%s1000 + $0x8] sm:$0xff]
        %s1003 = scalar_lea.vmem [#allocation11], %s993
        %v1004 = vld [vmem:[%s1003] sm:$0xff]
        %v1005 = vld [vmem:[%s1003 + $0x8] sm:$0xff]
        %v1006 = vld [vmem:[%s5] sm:$0x1]
        %v1007 = vmul.f32 %v995, %v995
        %v1008 = vmul.f32 %v996, %v996
        %1009 = vadd.xlane.f32.xlu0 %v1007
        %v1010 = vpop.xlane.xlu0 %1009
        %1011 = vadd.xlane.f32.xlu0 %v1008
        %v1012 = vpop.xlane.xlu0 %1011
        %v1013 = vrcp.pop 128.0
        %v1014 = vmul.f32 %v1010, %v1013
        %v1015 = vmul.f32 %v1012, %v1013
        %v1016 = vadd.f32 %v1014, 1e-06
        %v1017 = vadd.f32 %v1015, 1e-06
        %v1018 = vrsqrt.pop %v1016
        %v1019 = vrsqrt.pop %v1017
        %v1020 = vmul.f32 %v995, %v1018
        %v1021 = vmul.f32 %v996, %v1019
        %v1023 = vlaneseq
        %v1024 = vshrl.u32 %v1023, 7
        %v1025 = vsub.s32 0, %v1024
        %v1026 = vrot.slane %v1006, %v1025
        %v1028 = vmul.f32 %v1020, %v1026
        %v1029 = vmul.f32 %v1021, %v1026
        %v1030 = vpack.c.bf16 %v1029, %v1028
        %v1031 = vld [vmem:[%s6] sm:$0xf]
        %v1032 = vld [vmem:[%s6 + $0x4] sm:$0xf]
        %v1033 = vld [vmem:[%s6 + $0x8] sm:$0xf]
        %v1034 = vld [vmem:[%s6 + $0xc] sm:$0xf]
        %v1035 = vld [vmem:[%s6 + $0x10] sm:$0xf]
        %v1036 = vld [vmem:[%s6 + $0x14] sm:$0xf]
        %v1037 = vld [vmem:[%s6 + $0x18] sm:$0xf]
        %v1038 = vld [vmem:[%s6 + $0x1c] sm:$0xf]
        %v1039 = vld [vmem:[%s6 + $0x20] sm:$0xf]
        %v1040 = vld [vmem:[%s6 + $0x24] sm:$0xf]
        %v1041 = vld [vmem:[%s6 + $0x28] sm:$0xf]
        %v1042 = vld [vmem:[%s6 + $0x2c] sm:$0xf]
        %v1043 = vld [vmem:[%s6 + $0x30] sm:$0xf]
        %v1044 = vld [vmem:[%s6 + $0x34] sm:$0xf]
        %v1045 = vld [vmem:[%s6 + $0x38] sm:$0xf]
        %v1046 = vld [vmem:[%s6 + $0x3c] sm:$0xf]
        %v1063 = vunpack.c.l.b16 %v1031
        %v1064 = vunpack.c.l.b16 %v1032
        %v1065 = vunpack.c.l.b16 %v1033
        %v1066 = vunpack.c.l.b16 %v1034
        %v1067 = vunpack.c.l.b16 %v1035
        %v1068 = vunpack.c.l.b16 %v1036
        %v1069 = vunpack.c.l.b16 %v1037
        %v1070 = vunpack.c.l.b16 %v1038
        %v1071 = vunpack.c.l.b16 %v1039
        %v1072 = vunpack.c.l.b16 %v1040
        %v1073 = vunpack.c.l.b16 %v1041
        %v1074 = vunpack.c.l.b16 %v1042
        %v1075 = vunpack.c.l.b16 %v1043
        %v1076 = vunpack.c.l.b16 %v1044
        %v1077 = vunpack.c.l.b16 %v1045
        %v1078 = vunpack.c.l.b16 %v1046
        %v1079 = vpack.c.b16 %v1064, %v1063
        %v1080 = vpack.c.b16 %v1066, %v1065
        %v1081 = vpack.c.b16 %v1068, %v1067
        %v1082 = vpack.c.b16 %v1070, %v1069
        %v1083 = vpack.c.b16 %v1072, %v1071
        %v1084 = vpack.c.b16 %v1074, %v1073
        %v1085 = vpack.c.b16 %v1076, %v1075
        %v1086 = vpack.c.b16 %v1078, %v1077
        %1095 = vmatprep.subr.bf16.mxu0 0
        %1096 = vmatpush1.bf16.msra.mxu0 %v1079
        %1097 = vmatprep.subr.bf16.mxu0 0
        %1098 = vmatpush1.bf16.msra.mxu0 %v1080
        %1099 = vmatprep.subr.bf16.mxu0 0
        %1100 = vmatpush1.bf16.msra.mxu0 %v1081
        %1101 = vmatprep.subr.bf16.mxu0 0
        %1102 = vmatpush1.bf16.msra.mxu0 %v1082
        %1103 = vmatprep.subr.bf16.mxu0 0
        %1104 = vmatpush1.bf16.msra.mxu0 %v1083
        %1105 = vmatprep.subr.bf16.mxu0 0
        %1106 = vmatpush1.bf16.msra.mxu0 %v1084
        %1107 = vmatprep.subr.bf16.mxu0 0
        %1108 = vmatpush1.bf16.msra.mxu0 %v1085
        %1109 = vmatprep.subr.bf16.mxu0 0
        %1110 = vmatpush1.bf16.msra.mxu0 %v1086
        %1111 = vmatprep.subr.bf16.mxu0 0
        %1112 = vmatpush1.bf16.msra.mxu0 0
        %1113 = vmatprep.subr.bf16.mxu0 0
        %1114 = vmatpush1.bf16.msra.mxu0 0
        %1115 = vmatprep.subr.bf16.mxu0 0
        %1116 = vmatpush1.bf16.msra.mxu0 0
        %1117 = vmatprep.subr.bf16.mxu0 0
        %1118 = vmatpush1.bf16.msra.mxu0 0
        %1119 = vmatprep.subr.bf16.mxu0 0
        %1120 = vmatpush1.bf16.msra.mxu0 0
        %1121 = vmatprep.subr.bf16.mxu0 0
        %1122 = vmatpush1.bf16.msra.mxu0 0
        %1123 = vmatprep.subr.bf16.mxu0 0
        %1124 = vmatpush1.bf16.msra.mxu0 0
        %1125 = vmatprep.subr.bf16.mxu0 0
        %1126 = vmatpush1.bf16.msra.mxu0 0
        %1127 = vmatprep.mubr.bf16.mxu0 0
        %1128 = vmatmul.mubr.bf16.gmra.mrb[0].mxu0 %v1030
        %v1129 = vpop.f32.mrb[0].mxu0
        %v1130 = vadd.f32 0.0, %v1129
        %v1131 = vpop.f32.mrb[0].mxu0
        %v1132 = vpop.f32.mrb[0].mxu0
        %v1133 = vadd.f32 0.0, %v1132
        %v1134 = vpop.f32.mrb[0].mxu0
        %1135 = vdwg.mxu0
        %1138 = vrot.lane.b32.xlu0 %v1130, 120
        %v1139 = vpop.permute.xlu0 %1138
        %1140 = vrot.lane.b32.xlu0 %v1133, 120
        %v1141 = vpop.permute.xlu0 %1140
        %1144 = vrot.lane.b32.xlu0 %v1130, 8
        %v1145 = vpop.permute.xlu0 %1144
        %1146 = vrot.lane.b32.xlu0 %v1133, 8
        %v1147 = vpop.permute.xlu0 %1146
        %v1150 = vmul.f32 %v1130, %v998
        %v1151 = vmul.f32 %v1133, %v999
        %v1152 = vmul.f32 %v1139, %v1001
        %v1153 = vmul.f32 %v1141, %v1002
        %v1154 = vadd.f32 %v1150, %v1152
        %v1155 = vadd.f32 %v1151, %v1153
        %v1156 = vmul.f32 %v1145, %v1004
        %v1157 = vmul.f32 %v1147, %v1005
        %v1158 = vadd.f32 %v1154, %v1156
        %v1159 = vadd.f32 %v1155, %v1157
        %v1160 = vpack.c.bf16 %v1159, %v1158
        %v1161 = vld [vmem:[#allocation2] sm:$0xff]
        %v1162 = vld [vmem:[#allocation2 + $0x8] sm:$0xff]
        %v1163 = vld [vmem:[#allocation3] sm:$0xff]
        %v1164 = vld [vmem:[#allocation3 + $0x8] sm:$0xff]
        %v1165 = vlaneseq
        %v1166 = vshrl.u32 %v1165, 7
        %v1167 = vadd.s32 %v1166, 8
        %v1168 = vstv %s993
        %v1169 = vadd.s32 %v1166, %v1168
        %v1170 = vadd.s32 %v1167, %v1168
        %v1171 = vlaneseq
        %v1172 = vand.u32 %v1171, 127
        %vm1173 = vcmp.le.s32.totalorder %v1172, %v1169
        %vm1174 = vcmp.le.s32.totalorder %v1172, %v1170
        %1176 = vrot.lane.b32.xlu0 %v1160, 112
        %v1177 = vpop.permute.xlu0 %1176
        %1178 = vrot.lane.b32.xlu0 %v1160, 96
        %v1179 = vpop.permute.xlu0 %1178
        %1180 = vrot.lane.b32.xlu0 %v1160, 80
        %v1181 = vpop.permute.xlu0 %1180
        %vm1182 = vcmask 130048
        %v1184 = vsel %vm1182, %v1160, 0
        %v1187 = vsel %vm1182, %v1177, 0
        %v1190 = vsel %vm1182, %v1179, 0
        %v1193 = vsel %vm1182, %v1181, 0
        %v1196 = vsel %vm1182, %v1161, 0
        %v1199 = vsel %vm1182, %v1162, 0
        %1201 = vmatprep.subr.bf16.mxu0 0
        %1202 = vmatpush1.bf16.xpose.msra.mxu0 %v1196
        %1203 = vmatprep.subr.bf16.mxu0 0
        %1204 = vmatpush1.bf16.xpose.msra.mxu0 %v1199
        %1205 = vmatprep.subr.bf16.mxu0 0
        %1206 = vmatpush1.bf16.xpose.msra.mxu0 0
        %1207 = vmatprep.subr.bf16.mxu0 0
        %1208 = vmatpush1.bf16.xpose.msra.mxu0 0
        %1209 = vmatprep.subr.bf16.mxu0 0
        %1210 = vmatpush1.bf16.xpose.msra.mxu0 0
        %1211 = vmatprep.subr.bf16.mxu0 0
        %1212 = vmatpush1.bf16.xpose.msra.mxu0 0
        %1213 = vmatprep.subr.bf16.mxu0 0
        %1214 = vmatpush1.bf16.xpose.msra.mxu0 0
        %1215 = vmatprep.subr.bf16.mxu0 0
        %1216 = vmatpush1.bf16.xpose.msra.mxu0 0
        %1217 = vmatprep.subr.bf16.mxu0 0
        %1218 = vmatpush1.bf16.xpose.msra.mxu0 0
        %1219 = vmatprep.subr.bf16.mxu0 0
        %1220 = vmatpush1.bf16.xpose.msra.mxu0 0
        %1221 = vmatprep.subr.bf16.mxu0 0
        %1222 = vmatpush1.bf16.xpose.msra.mxu0 0
        %1223 = vmatprep.subr.bf16.mxu0 0
        %1224 = vmatpush1.bf16.xpose.msra.mxu0 0
        %1225 = vmatprep.subr.bf16.mxu0 0
        %1226 = vmatpush1.bf16.xpose.msra.mxu0 0
        %1227 = vmatprep.subr.bf16.mxu0 0
        %1228 = vmatpush1.bf16.xpose.msra.mxu0 0
        %1229 = vmatprep.subr.bf16.mxu0 0
        %1230 = vmatpush1.bf16.xpose.msra.mxu0 0
        %1231 = vmatprep.subr.bf16.mxu0 0
        %1232 = vmatpush1.bf16.xpose.msra.mxu0 0
        %1233 = vmatprep.mubr.bf16.mxu0 0
        %1234 = vmatmul.mubr.bf16.gmra.mrb[0].mxu0 %v1184
        %v1235 = vpop.f32.mrb[0].mxu0
        %v1236 = vadd.f32 0.0, %v1235
        %v1237 = vpop.f32.mrb[0].mxu0
        %v1238 = vpop.f32.mrb[0].mxu0
        %v1239 = vadd.f32 0.0, %v1238
        %v1240 = vpop.f32.mrb[0].mxu0
        %1241 = vmatprep.mubr.bf16.mxu0 0
        %1242 = vmatmul.mubr.bf16.gmra.mrb[0].mxu0 %v1187
        %v1243 = vpop.f32.mrb[0].mxu0
        %v1244 = vadd.f32 0.0, %v1243
        %v1245 = vpop.f32.mrb[0].mxu0
        %v1246 = vpop.f32.mrb[0].mxu0
        %v1247 = vadd.f32 0.0, %v1246
        %v1248 = vpop.f32.mrb[0].mxu0
        %1249 = vmatprep.mubr.bf16.mxu0 0
        %1250 = vmatmul.mubr.bf16.gmra.mrb[0].mxu0 %v1190
        %v1251 = vpop.f32.mrb[0].mxu0
        %v1252 = vadd.f32 0.0, %v1251
        %v1253 = vpop.f32.mrb[0].mxu0
        %v1254 = vpop.f32.mrb[0].mxu0
        %v1255 = vadd.f32 0.0, %v1254
        %v1256 = vpop.f32.mrb[0].mxu0
        %1257 = vmatprep.mubr.bf16.mxu0 0
        %1258 = vmatmul.mubr.bf16.gmra.mrb[0].mxu0 %v1193
        %v1259 = vpop.f32.mrb[0].mxu0
        %v1260 = vadd.f32 0.0, %v1259
        %v1261 = vpop.f32.mrb[0].mxu0
        %v1262 = vpop.f32.mrb[0].mxu0
        %v1263 = vadd.f32 0.0, %v1262
        %v1264 = vpop.f32.mrb[0].mxu0
        %1265 = vdwg.mxu0
        %v1266 = vmul.f32 %v1236, 0.25
        %v1267 = vmul.f32 %v1239, 0.25
        %v1268 = vmul.f32 %v1244, 0.25
        %v1269 = vmul.f32 %v1247, 0.25
        %v1270 = vmul.f32 %v1252, 0.25
        %v1271 = vmul.f32 %v1255, 0.25
        %v1272 = vmul.f32 %v1260, 0.25
        %v1273 = vmul.f32 %v1263, 0.25
        %v1274 = vsel %vm1173, %v1266, -1e+30
        %v1275 = vsel %vm1174, %v1267, -1e+30
        %v1276 = vsel %vm1173, %v1268, -1e+30
        %v1277 = vsel %vm1174, %v1269, -1e+30
        %v1278 = vsel %vm1173, %v1270, -1e+30
        %v1279 = vsel %vm1174, %v1271, -1e+30
        %v1280 = vsel %vm1173, %v1272, -1e+30
        %v1281 = vsel %vm1174, %v1273, -1e+30
        %vm1282 = vcmask 261120
        %v1283 = vsel %vm1282, %v1274, -inf
        %1284 = vmax.xlane.f32.xlu0 %v1283
        %v1285 = vpop.xlane.xlu0 %1284
        %v1286 = vsel %vm1282, %v1275, -inf
        %1287 = vmax.xlane.f32.xlu0 %v1286
        %v1288 = vpop.xlane.xlu0 %1287
        %v1289 = vsel %vm1282, %v1276, -inf
        %1290 = vmax.xlane.f32.xlu0 %v1289
        %v1291 = vpop.xlane.xlu0 %1290
        %v1292 = vsel %vm1282, %v1277, -inf
        %1293 = vmax.xlane.f32.xlu0 %v1292
        %v1294 = vpop.xlane.xlu0 %1293
        %v1295 = vsel %vm1282, %v1278, -inf
        %1296 = vmax.xlane.f32.xlu0 %v1295
        %v1297 = vpop.xlane.xlu0 %1296
        %v1298 = vsel %vm1282, %v1279, -inf
        %1299 = vmax.xlane.f32.xlu0 %v1298
        %v1300 = vpop.xlane.xlu0 %1299
        %v1301 = vsel %vm1282, %v1280, -inf
        %1302 = vmax.xlane.f32.xlu0 %v1301
        %v1303 = vpop.xlane.xlu0 %1302
        %v1304 = vsel %vm1282, %v1281, -inf
        %1305 = vmax.xlane.f32.xlu0 %v1304
        %v1306 = vpop.xlane.xlu0 %1305
        %v1307 = vsub.f32 %v1274, %v1285
        %v1308 = vsub.f32 %v1275, %v1288
        %v1309 = vsub.f32 %v1276, %v1291
        %v1310 = vsub.f32 %v1277, %v1294
        %v1311 = vsub.f32 %v1278, %v1297
        %v1312 = vsub.f32 %v1279, %v1300
        %v1313 = vsub.f32 %v1280, %v1303
        %v1314 = vsub.f32 %v1281, %v1306
        %v1315 = vmul.f32 %v1307, 1.442695
        %v1316 = vpow.pop %v1315
        %v1317 = vmul.f32 %v1308, 1.442695
        %v1318 = vpow.pop %v1317
        %v1319 = vmul.f32 %v1309, 1.442695
        %v1320 = vpow.pop %v1319
        %v1321 = vmul.f32 %v1310, 1.442695
        %v1322 = vpow.pop %v1321
        %v1323 = vmul.f32 %v1311, 1.442695
        %v1324 = vpow.pop %v1323
        %v1325 = vmul.f32 %v1312, 1.442695
        %v1326 = vpow.pop %v1325
        %v1327 = vmul.f32 %v1313, 1.442695
        %v1328 = vpow.pop %v1327
        %v1329 = vmul.f32 %v1314, 1.442695
        %v1330 = vpow.pop %v1329
        %v1331 = vsel %vm1282, %v1316, 0.0
        %1332 = vadd.xlane.f32.xlu0 %v1331
        %v1333 = vpop.xlane.xlu0 %1332
        %v1334 = vsel %vm1282, %v1318, 0.0
        %1335 = vadd.xlane.f32.xlu0 %v1334
        %v1336 = vpop.xlane.xlu0 %1335
        %v1337 = vsel %vm1282, %v1320, 0.0
        %1338 = vadd.xlane.f32.xlu0 %v1337
        %v1339 = vpop.xlane.xlu0 %1338
        %v1340 = vsel %vm1282, %v1322, 0.0
        %1341 = vadd.xlane.f32.xlu0 %v1340
        %v1342 = vpop.xlane.xlu0 %1341
        %v1343 = vsel %vm1282, %v1324, 0.0
        %1344 = vadd.xlane.f32.xlu0 %v1343
        %v1345 = vpop.xlane.xlu0 %1344
        %v1346 = vsel %vm1282, %v1326, 0.0
        %1347 = vadd.xlane.f32.xlu0 %v1346
        %v1348 = vpop.xlane.xlu0 %1347
        %v1349 = vsel %vm1282, %v1328, 0.0
        %1350 = vadd.xlane.f32.xlu0 %v1349
        %v1351 = vpop.xlane.xlu0 %1350
        %v1352 = vsel %vm1282, %v1330, 0.0
        %1353 = vadd.xlane.f32.xlu0 %v1352
        %v1354 = vpop.xlane.xlu0 %1353
        %v1355 = vrcp.pop %v1333
        %v1356 = vrcp.pop %v1336
        %v1357 = vrcp.pop %v1339
        %v1358 = vrcp.pop %v1342
        %v1359 = vrcp.pop %v1345
        %v1360 = vrcp.pop %v1348
        %v1361 = vrcp.pop %v1351
        %v1362 = vrcp.pop %v1354
        %v1363 = vmul.f32 %v1316, %v1355
        %v1364 = vmul.f32 %v1318, %v1356
        %v1365 = vmul.f32 %v1320, %v1357
        %v1366 = vmul.f32 %v1322, %v1358
        %v1367 = vmul.f32 %v1324, %v1359
        %v1368 = vmul.f32 %v1326, %v1360
        %v1369 = vmul.f32 %v1328, %v1361
        %v1370 = vmul.f32 %v1330, %v1362
        %v1371 = vpack.c.bf16 %v1364, %v1363
        %v1372 = vpack.c.bf16 %v1366, %v1365
        %v1373 = vpack.c.bf16 %v1368, %v1367
        %v1374 = vpack.c.bf16 %v1370, %v1369
        %v1376 = vsel %vm1282, %v1371, 0
        %v1379 = vsel %vm1282, %v1372, 0
        %v1382 = vsel %vm1282, %v1373, 0
        %v1385 = vsel %vm1282, %v1374, 0
        %1387 = vmatprep.subr.bf16.mxu0 0
        %1388 = vmatpush1.bf16.msra.mxu0 %v1163
        %1389 = vmatprep.subr.bf16.mxu0 0
        %1390 = vmatpush1.bf16.msra.mxu0 %v1164
        %1391 = vmatprep.subr.bf16.mxu0 0
        %1392 = vmatpush1.bf16.msra.mxu0 0
        %1393 = vmatprep.subr.bf16.mxu0 0
        %1394 = vmatpush1.bf16.msra.mxu0 0
        %1395 = vmatprep.subr.bf16.mxu0 0
        %1396 = vmatpush1.bf16.msra.mxu0 0
        %1397 = vmatprep.subr.bf16.mxu0 0
        %1398 = vmatpush1.bf16.msra.mxu0 0
        %1399 = vmatprep.subr.bf16.mxu0 0
        %1400 = vmatpush1.bf16.msra.mxu0 0
        %1401 = vmatprep.subr.bf16.mxu0 0
        %1402 = vmatpush1.bf16.msra.mxu0 0
        %1403 = vmatprep.subr.bf16.mxu0 0
        %1404 = vmatpush1.bf16.msra.mxu0 0
        %1405 = vmatprep.subr.bf16.mxu0 0
        %1406 = vmatpush1.bf16.msra.mxu0 0
        %1407 = vmatprep.subr.bf16.mxu0 0
        %1408 = vmatpush1.bf16.msra.mxu0 0
        %1409 = vmatprep.subr.bf16.mxu0 0
        %1410 = vmatpush1.bf16.msra.mxu0 0
        %1411 = vmatprep.subr.bf16.mxu0 0
        %1412 = vmatpush1.bf16.msra.mxu0 0
        %1413 = vmatprep.subr.bf16.mxu0 0
        %1414 = vmatpush1.bf16.msra.mxu0 0
        %1415 = vmatprep.subr.bf16.mxu0 0
        %1416 = vmatpush1.bf16.msra.mxu0 0
        %1417 = vmatprep.subr.bf16.mxu0 0
        %1418 = vmatpush1.bf16.msra.mxu0 0
        %1419 = vmatprep.mubr.bf16.mxu0 0
        %1420 = vmatmul.mubr.bf16.gmra.mrb[0].mxu0 %v1376
        %v1421 = vpop.f32.mrb[0].mxu0
        %v1422 = vadd.f32 0.0, %v1421
        %v1423 = vpop.f32.mrb[0].mxu0
        %v1424 = vpop.f32.mrb[0].mxu0
        %v1425 = vadd.f32 0.0, %v1424
        %v1426 = vpop.f32.mrb[0].mxu0
        %1427 = vmatprep.mubr.bf16.mxu0 0
        %1428 = vmatmul.mubr.bf16.gmra.mrb[0].mxu0 %v1379
        %v1429 = vpop.f32.mrb[0].mxu0
        %v1430 = vadd.f32 0.0, %v1429
        %v1431 = vpop.f32.mrb[0].mxu0
        %v1432 = vpop.f32.mrb[0].mxu0
        %v1433 = vadd.f32 0.0, %v1432
        %v1434 = vpop.f32.mrb[0].mxu0
        %1435 = vmatprep.mubr.bf16.mxu0 0
        %1436 = vmatmul.mubr.bf16.gmra.mrb[0].mxu0 %v1382
        %v1437 = vpop.f32.mrb[0].mxu0
        %v1438 = vadd.f32 0.0, %v1437
        %v1439 = vpop.f32.mrb[0].mxu0
        %v1440 = vpop.f32.mrb[0].mxu0
        %v1441 = vadd.f32 0.0, %v1440
        %v1442 = vpop.f32.mrb[0].mxu0
        %1443 = vmatprep.mubr.bf16.mxu0 0
        %1444 = vmatmul.mubr.bf16.gmra.mrb[0].mxu0 %v1385
        %v1445 = vpop.f32.mrb[0].mxu0
        %v1446 = vadd.f32 0.0, %v1445
        %v1447 = vpop.f32.mrb[0].mxu0
        %v1448 = vpop.f32.mrb[0].mxu0
        %v1449 = vadd.f32 0.0, %v1448
        %v1450 = vpop.f32.mrb[0].mxu0
        %1451 = vdwg.mxu0
        %1452 = vrot.lane.b32.xlu0 %v1160, 64
        %v1453 = vpop.permute.xlu0 %1452
        %1454 = vrot.lane.b32.xlu0 %v1177, 64
        %v1455 = vpop.permute.xlu0 %1454
        %1456 = vrot.lane.b32.xlu0 %v1179, 64
        %v1457 = vpop.permute.xlu0 %1456
        %1458 = vrot.lane.b32.xlu0 %v1181, 64
        %v1459 = vpop.permute.xlu0 %1458
        %1462 = vrot.lane.b32.xlu0 %v1161, 112
        %v1463 = vpop.permute.xlu0 %1462
        %1464 = vrot.lane.b32.xlu0 %v1162, 112
        %v1465 = vpop.permute.xlu0 %1464
        %v1467 = vsel %vm1182, %v1453, 0
        %v1470 = vsel %vm1182, %v1455, 0
        %v1473 = vsel %vm1182, %v1457, 0
        %v1476 = vsel %vm1182, %v1459, 0
        %v1479 = vsel %vm1182, %v1463, 0
        %v1482 = vsel %vm1182, %v1465, 0
        %1484 = vmatprep.subr.bf16.mxu0 0
        %1485 = vmatpush1.bf16.xpose.msra.mxu0 %v1479
        %1486 = vmatprep.subr.bf16.mxu0 0
        %1487 = vmatpush1.bf16.xpose.msra.mxu0 %v1482
        %1488 = vmatprep.subr.bf16.mxu0 0
        %1489 = vmatpush1.bf16.xpose.msra.mxu0 0
        %1490 = vmatprep.subr.bf16.mxu0 0
        %1491 = vmatpush1.bf16.xpose.msra.mxu0 0
        %1492 = vmatprep.subr.bf16.mxu0 0
        %1493 = vmatpush1.bf16.xpose.msra.mxu0 0
        %1494 = vmatprep.subr.bf16.mxu0 0
        %1495 = vmatpush1.bf16.xpose.msra.mxu0 0
        %1496 = vmatprep.subr.bf16.mxu0 0
        %1497 = vmatpush1.bf16.xpose.msra.mxu0 0
        %1498 = vmatprep.subr.bf16.mxu0 0
        %1499 = vmatpush1.bf16.xpose.msra.mxu0 0
        %1500 = vmatprep.subr.bf16.mxu0 0
        %1501 = vmatpush1.bf16.xpose.msra.mxu0 0
        %1502 = vmatprep.subr.bf16.mxu0 0
        %1503 = vmatpush1.bf16.xpose.msra.mxu0 0
        %1504 = vmatprep.subr.bf16.mxu0 0
        %1505 = vmatpush1.bf16.xpose.msra.mxu0 0
        %1506 = vmatprep.subr.bf16.mxu0 0
        %1507 = vmatpush1.bf16.xpose.msra.mxu0 0
        %1508 = vmatprep.subr.bf16.mxu0 0
        %1509 = vmatpush1.bf16.xpose.msra.mxu0 0
        %1510 = vmatprep.subr.bf16.mxu0 0
        %1511 = vmatpush1.bf16.xpose.msra.mxu0 0
        %1512 = vmatprep.subr.bf16.mxu0 0
        %1513 = vmatpush1.bf16.xpose.msra.mxu0 0
        %1514 = vmatprep.subr.bf16.mxu0 0
        %1515 = vmatpush1.bf16.xpose.msra.mxu0 0
        %1516 = vmatprep.mubr.bf16.mxu0 0
        %1517 = vmatmul.mubr.bf16.gmra.mrb[0].mxu0 %v1467
        %v1518 = vpop.f32.mrb[0].mxu0
        %v1519 = vadd.f32 0.0, %v1518
        %v1520 = vpop.f32.mrb[0].mxu0
        %v1521 = vpop.f32.mrb[0].mxu0
        %v1522 = vadd.f32 0.0, %v1521
        %v1523 = vpop.f32.mrb[0].mxu0
        %1524 = vmatprep.mubr.bf16.mxu0 0
        %1525 = vmatmul.mubr.bf16.gmra.mrb[0].mxu0 %v1470
        %v1526 = vpop.f32.mrb[0].mxu0
        %v1527 = vadd.f32 0.0, %v1526
        %v1528 = vpop.f32.mrb[0].mxu0
        %v1529 = vpop.f32.mrb[0].mxu0
        %v1530 = vadd.f32 0.0, %v1529
        %v1531 = vpop.f32.mrb[0].mxu0
        %1532 = vmatprep.mubr.bf16.mxu0 0
        %1533 = vmatmul.mubr.bf16.gmra.mrb[0].mxu0 %v1473
        %v1534 = vpop.f32.mrb[0].mxu0
        %v1535 = vadd.f32 0.0, %v1534
        %v1536 = vpop.f32.mrb[0].mxu0
        %v1537 = vpop.f32.mrb[0].mxu0
        %v1538 = vadd.f32 0.0, %v1537
        %v1539 = vpop.f32.mrb[0].mxu0
        %1540 = vmatprep.mubr.bf16.mxu0 0
        %1541 = vmatmul.mubr.bf16.gmra.mrb[0].mxu0 %v1476
        %v1542 = vpop.f32.mrb[0].mxu0
        %v1543 = vadd.f32 0.0, %v1542
        %v1544 = vpop.f32.mrb[0].mxu0
        %v1545 = vpop.f32.mrb[0].mxu0
        %v1546 = vadd.f32 0.0, %v1545
        %v1547 = vpop.f32.mrb[0].mxu0
        %1548 = vdwg.mxu0
        %v1549 = vmul.f32 %v1519, 0.25
        %v1550 = vmul.f32 %v1522, 0.25
        %v1551 = vmul.f32 %v1527, 0.25
        %v1552 = vmul.f32 %v1530, 0.25
        %v1553 = vmul.f32 %v1535, 0.25
        %v1554 = vmul.f32 %v1538, 0.25
        %v1555 = vmul.f32 %v1543, 0.25
        %v1556 = vmul.f32 %v1546, 0.25
        %v1557 = vsel %vm1173, %v1549, -1e+30
        %v1558 = vsel %vm1174, %v1550, -1e+30
        %v1559 = vsel %vm1173, %v1551, -1e+30
        %v1560 = vsel %vm1174, %v1552, -1e+30
        %v1561 = vsel %vm1173, %v1553, -1e+30
        %v1562 = vsel %vm1174, %v1554, -1e+30
        %v1563 = vsel %vm1173, %v1555, -1e+30
        %v1564 = vsel %vm1174, %v1556, -1e+30
        %v1565 = vsel %vm1282, %v1557, -inf
        %1566 = vmax.xlane.f32.xlu0 %v1565
        %v1567 = vpop.xlane.xlu0 %1566
        %v1568 = vsel %vm1282, %v1558, -inf
        %1569 = vmax.xlane.f32.xlu0 %v1568
        %v1570 = vpop.xlane.xlu0 %1569
        %v1571 = vsel %vm1282, %v1559, -inf
        %1572 = vmax.xlane.f32.xlu0 %v1571
        %v1573 = vpop.xlane.xlu0 %1572
        %v1574 = vsel %vm1282, %v1560, -inf
        %1575 = vmax.xlane.f32.xlu0 %v1574
        %v1576 = vpop.xlane.xlu0 %1575
        %v1577 = vsel %vm1282, %v1561, -inf
        %1578 = vmax.xlane.f32.xlu0 %v1577
        %v1579 = vpop.xlane.xlu0 %1578
        %v1580 = vsel %vm1282, %v1562, -inf
        %1581 = vmax.xlane.f32.xlu0 %v1580
        %v1582 = vpop.xlane.xlu0 %1581
        %v1583 = vsel %vm1282, %v1563, -inf
        %1584 = vmax.xlane.f32.xlu0 %v1583
        %v1585 = vpop.xlane.xlu0 %1584
        %v1586 = vsel %vm1282, %v1564, -inf
        %1587 = vmax.xlane.f32.xlu0 %v1586
        %v1588 = vpop.xlane.xlu0 %1587
        %v1589 = vsub.f32 %v1557, %v1567
        %v1590 = vsub.f32 %v1558, %v1570
        %v1591 = vsub.f32 %v1559, %v1573
        %v1592 = vsub.f32 %v1560, %v1576
        %v1593 = vsub.f32 %v1561, %v1579
        %v1594 = vsub.f32 %v1562, %v1582
        %v1595 = vsub.f32 %v1563, %v1585
        %v1596 = vsub.f32 %v1564, %v1588
        %v1597 = vmul.f32 %v1589, 1.442695
        %v1598 = vpow.pop %v1597
        %v1599 = vmul.f32 %v1590, 1.442695
        %v1600 = vpow.pop %v1599
        %v1601 = vmul.f32 %v1591, 1.442695
        %v1602 = vpow.pop %v1601
        %v1603 = vmul.f32 %v1592, 1.442695
        %v1604 = vpow.pop %v1603
        %v1605 = vmul.f32 %v1593, 1.442695
        %v1606 = vpow.pop %v1605
        %v1607 = vmul.f32 %v1594, 1.442695
        %v1608 = vpow.pop %v1607
        %v1609 = vmul.f32 %v1595, 1.442695
        %v1610 = vpow.pop %v1609
        %v1611 = vmul.f32 %v1596, 1.442695
        %v1612 = vpow.pop %v1611
        %v1613 = vsel %vm1282, %v1598, 0.0
        %1614 = vadd.xlane.f32.xlu0 %v1613
        %v1615 = vpop.xlane.xlu0 %1614
        %v1616 = vsel %vm1282, %v1600, 0.0
        %1617 = vadd.xlane.f32.xlu0 %v1616
        %v1618 = vpop.xlane.xlu0 %1617
        %v1619 = vsel %vm1282, %v1602, 0.0
        %1620 = vadd.xlane.f32.xlu0 %v1619
        %v1621 = vpop.xlane.xlu0 %1620
        %v1622 = vsel %vm1282, %v1604, 0.0
        %1623 = vadd.xlane.f32.xlu0 %v1622
        %v1624 = vpop.xlane.xlu0 %1623
        %v1625 = vsel %vm1282, %v1606, 0.0
        %1626 = vadd.xlane.f32.xlu0 %v1625
        %v1627 = vpop.xlane.xlu0 %1626
        %v1628 = vsel %vm1282, %v1608, 0.0
        %1629 = vadd.xlane.f32.xlu0 %v1628
        %v1630 = vpop.xlane.xlu0 %1629
        %v1631 = vsel %vm1282, %v1610, 0.0
        %1632 = vadd.xlane.f32.xlu0 %v1631
        %v1633 = vpop.xlane.xlu0 %1632
        %v1634 = vsel %vm1282, %v1612, 0.0
        %1635 = vadd.xlane.f32.xlu0 %v1634
        %v1636 = vpop.xlane.xlu0 %1635
        %v1637 = vrcp.pop %v1615
        %v1638 = vrcp.pop %v1618
        %v1639 = vrcp.pop %v1621
        %v1640 = vrcp.pop %v1624
        %v1641 = vrcp.pop %v1627
        %v1642 = vrcp.pop %v1630
        %v1643 = vrcp.pop %v1633
        %v1644 = vrcp.pop %v1636
        %v1645 = vmul.f32 %v1598, %v1637
        %v1646 = vmul.f32 %v1600, %v1638
        %v1647 = vmul.f32 %v1602, %v1639
        %v1648 = vmul.f32 %v1604, %v1640
        %v1649 = vmul.f32 %v1606, %v1641
        %v1650 = vmul.f32 %v1608, %v1642
        %v1651 = vmul.f32 %v1610, %v1643
        %v1652 = vmul.f32 %v1612, %v1644
        %v1653 = vpack.c.bf16 %v1646, %v1645
        %v1654 = vpack.c.bf16 %v1648, %v1647
        %v1655 = vpack.c.bf16 %v1650, %v1649
        %v1656 = vpack.c.bf16 %v1652, %v1651
        %1659 = vrot.lane.b32.xlu0 %v1163, 112
        %v1660 = vpop.permute.xlu0 %1659
        %1661 = vrot.lane.b32.xlu0 %v1164, 112
        %v1662 = vpop.permute.xlu0 %1661
        %v1666 = vsel %vm1282, %v1653, 0
        %v1669 = vsel %vm1282, %v1654, 0
        %v1672 = vsel %vm1282, %v1655, 0
        %v1675 = vsel %vm1282, %v1656, 0
        %1677 = vmatprep.subr.bf16.mxu0 0
        %1678 = vmatpush1.bf16.msra.mxu0 %v1660
        %1679 = vmatprep.subr.bf16.mxu0 0
        %1680 = vmatpush1.bf16.msra.mxu0 %v1662
        %1681 = vmatprep.subr.bf16.mxu0 0
        %1682 = vmatpush1.bf16.msra.mxu0 0
        %1683 = vmatprep.subr.bf16.mxu0 0
        %1684 = vmatpush1.bf16.msra.mxu0 0
        %1685 = vmatprep.subr.bf16.mxu0 0
        %1686 = vmatpush1.bf16.msra.mxu0 0
        %1687 = vmatprep.subr.bf16.mxu0 0
        %1688 = vmatpush1.bf16.msra.mxu0 0
        %1689 = vmatprep.subr.bf16.mxu0 0
        %1690 = vmatpush1.bf16.msra.mxu0 0
        %1691 = vmatprep.subr.bf16.mxu0 0
        %1692 = vmatpush1.bf16.msra.mxu0 0
        %1693 = vmatprep.subr.bf16.mxu0 0
        %1694 = vmatpush1.bf16.msra.mxu0 0
        %1695 = vmatprep.subr.bf16.mxu0 0
        %1696 = vmatpush1.bf16.msra.mxu0 0
        %1697 = vmatprep.subr.bf16.mxu0 0
        %1698 = vmatpush1.bf16.msra.mxu0 0
        %1699 = vmatprep.subr.bf16.mxu0 0
        %1700 = vmatpush1.bf16.msra.mxu0 0
        %1701 = vmatprep.subr.bf16.mxu0 0
        %1702 = vmatpush1.bf16.msra.mxu0 0
        %1703 = vmatprep.subr.bf16.mxu0 0
        %1704 = vmatpush1.bf16.msra.mxu0 0
        %1705 = vmatprep.subr.bf16.mxu0 0
        %1706 = vmatpush1.bf16.msra.mxu0 0
        %1707 = vmatprep.subr.bf16.mxu0 0
        %1708 = vmatpush1.bf16.msra.mxu0 0
        %1709 = vmatprep.mubr.bf16.mxu0 0
        %1710 = vmatmul.mubr.bf16.gmra.mrb[0].mxu0 %v1666
        %v1711 = vpop.f32.mrb[0].mxu0
        %v1712 = vadd.f32 0.0, %v1711
        %v1713 = vpop.f32.mrb[0].mxu0
        %v1714 = vpop.f32.mrb[0].mxu0
        %v1715 = vadd.f32 0.0, %v1714
        %v1716 = vpop.f32.mrb[0].mxu0
        %1717 = vmatprep.mubr.bf16.mxu0 0
        %1718 = vmatmul.mubr.bf16.gmra.mrb[0].mxu0 %v1669
        %v1719 = vpop.f32.mrb[0].mxu0
        %v1720 = vadd.f32 0.0, %v1719
        %v1721 = vpop.f32.mrb[0].mxu0
        %v1722 = vpop.f32.mrb[0].mxu0
        %v1723 = vadd.f32 0.0, %v1722
        %v1724 = vpop.f32.mrb[0].mxu0
        %1725 = vmatprep.mubr.bf16.mxu0 0
        %1726 = vmatmul.mubr.bf16.gmra.mrb[0].mxu0 %v1672
        %v1727 = vpop.f32.mrb[0].mxu0
        %v1728 = vadd.f32 0.0, %v1727
        %v1729 = vpop.f32.mrb[0].mxu0
        %v1730 = vpop.f32.mrb[0].mxu0
        %v1731 = vadd.f32 0.0, %v1730
        %v1732 = vpop.f32.mrb[0].mxu0
        %1733 = vmatprep.mubr.bf16.mxu0 0
        %1734 = vmatmul.mubr.bf16.gmra.mrb[0].mxu0 %v1675
        %v1735 = vpop.f32.mrb[0].mxu0
        %v1736 = vadd.f32 0.0, %v1735
        %v1737 = vpop.f32.mrb[0].mxu0
        %v1738 = vpop.f32.mrb[0].mxu0
        %v1739 = vadd.f32 0.0, %v1738
        %v1740 = vpop.f32.mrb[0].mxu0
        %1741 = vdwg.mxu0
        %1744 = vrot.lane.b32.xlu0 %v1430, 16
        %v1745 = vpop.permute.xlu0 %1744
        %1746 = vrot.lane.b32.xlu0 %v1433, 16
        %v1747 = vpop.permute.xlu0 %1746
        %1752 = vrot.lane.b32.xlu0 %v1438, 32
        %v1753 = vpop.permute.xlu0 %1752
        %1754 = vrot.lane.b32.xlu0 %v1441, 32
        %v1755 = vpop.permute.xlu0 %1754
        %1760 = vrot.lane.b32.xlu0 %v1446, 48
        %v1761 = vpop.permute.xlu0 %1760
        %1762 = vrot.lane.b32.xlu0 %v1449, 48
        %v1763 = vpop.permute.xlu0 %1762
        %1768 = vrot.lane.b32.xlu0 %v1712, 64
        %v1769 = vpop.permute.xlu0 %1768
        %1770 = vrot.lane.b32.xlu0 %v1715, 64
        %v1771 = vpop.permute.xlu0 %1770
        %1776 = vrot.lane.b32.xlu0 %v1720, 80
        %v1777 = vpop.permute.xlu0 %1776
        %1778 = vrot.lane.b32.xlu0 %v1723, 80
        %v1779 = vpop.permute.xlu0 %1778
        %1784 = vrot.lane.b32.xlu0 %v1728, 96
        %v1785 = vpop.permute.xlu0 %1784
        %1786 = vrot.lane.b32.xlu0 %v1731, 96
        %v1787 = vpop.permute.xlu0 %1786
        %1792 = vrot.lane.b32.xlu0 %v1736, 112
        %v1793 = vpop.permute.xlu0 %1792
        %1794 = vrot.lane.b32.xlu0 %v1739, 112
        %v1795 = vpop.permute.xlu0 %1794
        %v1798 = vsel %vm1182, %v1422, %v1745
        %v1799 = vsel %vm1182, %v1425, %v1747
        %v1800 = vsel %vm1282, %v1798, %v1753
        %v1801 = vsel %vm1282, %v1799, %v1755
        %vm1802 = vcmask 392192
        %v1803 = vsel %vm1802, %v1800, %v1761
        %v1804 = vsel %vm1802, %v1801, %v1763
        %vm1805 = vcmask 523264
        %v1806 = vsel %vm1805, %v1803, %v1769
        %v1807 = vsel %vm1805, %v1804, %v1771
        %vm1808 = vcmask 654336
        %v1809 = vsel %vm1808, %v1806, %v1777
        %v1810 = vsel %vm1808, %v1807, %v1779
        %vm1811 = vcmask 785408
        %v1812 = vsel %vm1811, %v1809, %v1785
        %v1813 = vsel %vm1811, %v1810, %v1787
        %vm1814 = vcmask 916480
        %v1815 = vsel %vm1814, %v1812, %v1793
        %v1816 = vsel %vm1814, %v1813, %v1795
        %v1817 = vpack.c.bf16 %v1816, %v1815
        %v1818 = vld [vmem:[#allocation12] sm:$0xf]
        %v1819 = vld [vmem:[#allocation12 + $0x4] sm:$0xf]
        %v1820 = vld [vmem:[#allocation12 + $0x8] sm:$0xf]
        %v1821 = vld [vmem:[#allocation12 + $0xc] sm:$0xf]
        %v1822 = vld [vmem:[#allocation12 + $0x10] sm:$0xf]
        %v1823 = vld [vmem:[#allocation12 + $0x14] sm:$0xf]
        %v1824 = vld [vmem:[#allocation12 + $0x18] sm:$0xf]
        %v1825 = vld [vmem:[#allocation12 + $0x1c] sm:$0xf]
        %v1826 = vld [vmem:[#allocation12 + $0x20] sm:$0xf]
        %v1827 = vld [vmem:[#allocation12 + $0x24] sm:$0xf]
        %v1828 = vld [vmem:[#allocation12 + $0x28] sm:$0xf]
        %v1829 = vld [vmem:[#allocation12 + $0x2c] sm:$0xf]
        %v1830 = vld [vmem:[#allocation12 + $0x30] sm:$0xf]
        %v1831 = vld [vmem:[#allocation12 + $0x34] sm:$0xf]
        %v1832 = vld [vmem:[#allocation12 + $0x38] sm:$0xf]
        %v1833 = vld [vmem:[#allocation12 + $0x3c] sm:$0xf]
        %v1850 = vunpack.c.l.b16 %v1818
        %v1851 = vunpack.c.l.b16 %v1819
        %v1852 = vunpack.c.l.b16 %v1820
        %v1853 = vunpack.c.l.b16 %v1821
        %v1854 = vunpack.c.l.b16 %v1822
        %v1855 = vunpack.c.l.b16 %v1823
        %v1856 = vunpack.c.l.b16 %v1824
        %v1857 = vunpack.c.l.b16 %v1825
        %v1858 = vunpack.c.l.b16 %v1826
        %v1859 = vunpack.c.l.b16 %v1827
        %v1860 = vunpack.c.l.b16 %v1828
        %v1861 = vunpack.c.l.b16 %v1829
        %v1862 = vunpack.c.l.b16 %v1830
        %v1863 = vunpack.c.l.b16 %v1831
        %v1864 = vunpack.c.l.b16 %v1832
        %v1865 = vunpack.c.l.b16 %v1833
        %v1866 = vpack.c.b16 %v1851, %v1850
        %v1867 = vpack.c.b16 %v1853, %v1852
        %v1868 = vpack.c.b16 %v1855, %v1854
        %v1869 = vpack.c.b16 %v1857, %v1856
        %v1870 = vpack.c.b16 %v1859, %v1858
        %v1871 = vpack.c.b16 %v1861, %v1860
        %v1872 = vpack.c.b16 %v1863, %v1862
        %v1873 = vpack.c.b16 %v1865, %v1864
        %1882 = vmatprep.subr.bf16.mxu0 0
        %1883 = vmatpush1.bf16.msra.mxu0 %v1866
        %1884 = vmatprep.subr.bf16.mxu0 0
        %1885 = vmatpush1.bf16.msra.mxu0 %v1867
        %1886 = vmatprep.subr.bf16.mxu0 0
        %1887 = vmatpush1.bf16.msra.mxu0 %v1868
        %1888 = vmatprep.subr.bf16.mxu0 0
        %1889 = vmatpush1.bf16.msra.mxu0 %v1869
        %1890 = vmatprep.subr.bf16.mxu0 0
        %1891 = vmatpush1.bf16.msra.mxu0 %v1870
        %1892 = vmatprep.subr.bf16.mxu0 0
        %1893 = vmatpush1.bf16.msra.mxu0 %v1871
        %1894 = vmatprep.subr.bf16.mxu0 0
        %1895 = vmatpush1.bf16.msra.mxu0 %v1872
        %1896 = vmatprep.subr.bf16.mxu0 0
        %1897 = vmatpush1.bf16.msra.mxu0 %v1873
        %1898 = vmatprep.subr.bf16.mxu0 0
        %1899 = vmatpush1.bf16.msra.mxu0 0
        %1900 = vmatprep.subr.bf16.mxu0 0
        %1901 = vmatpush1.bf16.msra.mxu0 0
        %1902 = vmatprep.subr.bf16.mxu0 0
        %1903 = vmatpush1.bf16.msra.mxu0 0
        %1904 = vmatprep.subr.bf16.mxu0 0
        %1905 = vmatpush1.bf16.msra.mxu0 0
        %1906 = vmatprep.subr.bf16.mxu0 0
        %1907 = vmatpush1.bf16.msra.mxu0 0
        %1908 = vmatprep.subr.bf16.mxu0 0
        %1909 = vmatpush1.bf16.msra.mxu0 0
        %1910 = vmatprep.subr.bf16.mxu0 0
        %1911 = vmatpush1.bf16.msra.mxu0 0
        %1912 = vmatprep.subr.bf16.mxu0 0
        %1913 = vmatpush1.bf16.msra.mxu0 0
        %1914 = vmatprep.mubr.bf16.mxu0 0
        %1915 = vmatmul.mubr.bf16.gmra.mrb[0].mxu0 %v1817
        %v1916 = vpop.f32.mrb[0].mxu0
        %v1917 = vadd.f32 0.0, %v1916
        %v1918 = vpop.f32.mrb[0].mxu0
        %v1919 = vpop.f32.mrb[0].mxu0
        %v1920 = vadd.f32 0.0, %v1919
        %v1921 = vpop.f32.mrb[0].mxu0
        %1922 = vdwg.mxu0
        %v1923 = vadd.f32 %v995, %v1917
        %v1924 = vadd.f32 %v996, %v1920
        %v1925 = vld [vmem:[%s9] sm:$0x1]
        %v1926 = vmul.f32 %v1923, %v1923
        %v1927 = vmul.f32 %v1924, %v1924
        %1928 = vadd.xlane.f32.xlu0 %v1926
        %v1929 = vpop.xlane.xlu0 %1928
        %1930 = vadd.xlane.f32.xlu0 %v1927
        %v1931 = vpop.xlane.xlu0 %1930
        %v1932 = vmul.f32 %v1929, %v1013
        %v1933 = vmul.f32 %v1931, %v1013
        %v1934 = vadd.f32 %v1932, 1e-06
        %v1935 = vadd.f32 %v1933, 1e-06
        %v1936 = vrsqrt.pop %v1934
        %v1937 = vrsqrt.pop %v1935
        %v1938 = vmul.f32 %v1923, %v1936
        %v1939 = vmul.f32 %v1924, %v1937
        %v1941 = vlaneseq
        %v1942 = vshrl.u32 %v1941, 7
        %v1943 = vsub.s32 0, %v1942
        %v1944 = vrot.slane %v1925, %v1943
        %v1946 = vmul.f32 %v1938, %v1944
        %v1947 = vmul.f32 %v1939, %v1944
        %v1948 = vpack.c.bf16 %v1947, %v1946
        %v1949 = vld [vmem:[#allocation14] sm:$0xf]
        %v1950 = vld [vmem:[#allocation14 + $0x4] sm:$0xf]
        %v1951 = vld [vmem:[#allocation14 + $0x8] sm:$0xf]
        %v1952 = vld [vmem:[#allocation14 + $0xc] sm:$0xf]
        %v1953 = vld [vmem:[#allocation14 + $0x10] sm:$0xf]
        %v1954 = vld [vmem:[#allocation14 + $0x14] sm:$0xf]
        %v1955 = vld [vmem:[#allocation14 + $0x18] sm:$0xf]
        %v1956 = vld [vmem:[#allocation14 + $0x1c] sm:$0xf]
        %v1957 = vld [vmem:[#allocation14 + $0x20] sm:$0xf]
        %v1958 = vld [vmem:[#allocation14 + $0x24] sm:$0xf]
        %v1959 = vld [vmem:[#allocation14 + $0x28] sm:$0xf]
        %v1960 = vld [vmem:[#allocation14 + $0x2c] sm:$0xf]
        %v1961 = vld [vmem:[#allocation14 + $0x30] sm:$0xf]
        %v1962 = vld [vmem:[#allocation14 + $0x34] sm:$0xf]
        %v1963 = vld [vmem:[#allocation14 + $0x38] sm:$0xf]
        %v1964 = vld [vmem:[#allocation14 + $0x3c] sm:$0xf]
        %v1981 = vunpack.c.l.b16 %v1949
        %v1982 = vunpack.c.l.b16 %v1950
        %v1983 = vunpack.c.l.b16 %v1951
        %v1984 = vunpack.c.l.b16 %v1952
        %v1985 = vunpack.c.l.b16 %v1953
        %v1986 = vunpack.c.l.b16 %v1954
        %v1987 = vunpack.c.l.b16 %v1955
        %v1988 = vunpack.c.l.b16 %v1956
        %v1989 = vunpack.c.l.b16 %v1957
        %v1990 = vunpack.c.l.b16 %v1958
        %v1991 = vunpack.c.l.b16 %v1959
        %v1992 = vunpack.c.l.b16 %v1960
        %v1993 = vunpack.c.l.b16 %v1961
        %v1994 = vunpack.c.l.b16 %v1962
        %v1995 = vunpack.c.l.b16 %v1963
        %v1996 = vunpack.c.l.b16 %v1964
        %v1997 = vpack.c.b16 %v1982, %v1981
        %v1998 = vpack.c.b16 %v1984, %v1983
        %v1999 = vpack.c.b16 %v1986, %v1985
        %v2000 = vpack.c.b16 %v1988, %v1987
        %v2001 = vpack.c.b16 %v1990, %v1989
        %v2002 = vpack.c.b16 %v1992, %v1991
        %v2003 = vpack.c.b16 %v1994, %v1993
        %v2004 = vpack.c.b16 %v1996, %v1995
        %2013 = vmatprep.subr.bf16.mxu0 0
        %2014 = vmatpush1.bf16.msra.mxu0 %v1997
        %2015 = vmatprep.subr.bf16.mxu0 0
        %2016 = vmatpush1.bf16.msra.mxu0 %v1998
        %2017 = vmatprep.subr.bf16.mxu0 0
        %2018 = vmatpush1.bf16.msra.mxu0 %v1999
        %2019 = vmatprep.subr.bf16.mxu0 0
        %2020 = vmatpush1.bf16.msra.mxu0 %v2000
        %2021 = vmatprep.subr.bf16.mxu0 0
        %2022 = vmatpush1.bf16.msra.mxu0 %v2001
        %2023 = vmatprep.subr.bf16.mxu0 0
        %2024 = vmatpush1.bf16.msra.mxu0 %v2002
        %2025 = vmatprep.subr.bf16.mxu0 0
        %2026 = vmatpush1.bf16.msra.mxu0 %v2003
        %2027 = vmatprep.subr.bf16.mxu0 0
        %2028 = vmatpush1.bf16.msra.mxu0 %v2004
        %2029 = vmatprep.subr.bf16.mxu0 0
        %2030 = vmatpush1.bf16.msra.mxu0 0
        %2031 = vmatprep.subr.bf16.mxu0 0
        %2032 = vmatpush1.bf16.msra.mxu0 0
        %2033 = vmatprep.subr.bf16.mxu0 0
        %2034 = vmatpush1.bf16.msra.mxu0 0
        %2035 = vmatprep.subr.bf16.mxu0 0
        %2036 = vmatpush1.bf16.msra.mxu0 0
        %2037 = vmatprep.subr.bf16.mxu0 0
        %2038 = vmatpush1.bf16.msra.mxu0 0
        %2039 = vmatprep.subr.bf16.mxu0 0
        %2040 = vmatpush1.bf16.msra.mxu0 0
        %2041 = vmatprep.subr.bf16.mxu0 0
        %2042 = vmatpush1.bf16.msra.mxu0 0
        %2043 = vmatprep.subr.bf16.mxu0 0
        %2044 = vmatpush1.bf16.msra.mxu0 0
        %2045 = vmatprep.mubr.bf16.mxu0 0
        %2046 = vmatmul.mubr.bf16.gmra.mrb[0].mxu0 %v1948
        %v2047 = vpop.f32.mrb[0].mxu0
        %v2048 = vadd.f32 0.0, %v2047
        %v2049 = vpop.f32.mrb[0].mxu0
        %v2050 = vpop.f32.mrb[0].mxu0
        %v2051 = vadd.f32 0.0, %v2050
        %v2052 = vpop.f32.mrb[0].mxu0
        %2053 = vdwg.mxu0
        %v2054 = vpack.c.bf16 %v2051, %v2048
        %v2055 = vld [vmem:[#allocation4] sm:$0xff]
        %v2056 = vld [vmem:[#allocation5] sm:$0xff]
        %2058 = vrot.lane.b32.xlu0 %v2054, 112
        %v2059 = vpop.permute.xlu0 %2058
        %2060 = vrot.lane.b32.xlu0 %v2054, 96
        %v2061 = vpop.permute.xlu0 %2060
        %2062 = vrot.lane.b32.xlu0 %v2054, 80
        %v2063 = vpop.permute.xlu0 %2062
        %v2065 = vsel %vm1182, %v2054, 0
        %v2068 = vsel %vm1182, %v2059, 0
        %v2071 = vsel %vm1182, %v2061, 0
        %v2074 = vsel %vm1182, %v2063, 0
        %v2077 = vsel %vm1182, %v2055, 0
        %2079 = vmatprep.subr.bf16.mxu0 0
        %2080 = vmatpush1.bf16.xpose.msra.mxu0 %v2077
        %2081 = vmatprep.subr.bf16.mxu0 0
        %2082 = vmatpush1.bf16.xpose.msra.mxu0 0
        %2083 = vmatprep.subr.bf16.mxu0 0
        %2084 = vmatpush1.bf16.xpose.msra.mxu0 0
        %2085 = vmatprep.subr.bf16.mxu0 0
        %2086 = vmatpush1.bf16.xpose.msra.mxu0 0
        %2087 = vmatprep.subr.bf16.mxu0 0
        %2088 = vmatpush1.bf16.xpose.msra.mxu0 0
        %2089 = vmatprep.subr.bf16.mxu0 0
        %2090 = vmatpush1.bf16.xpose.msra.mxu0 0
        %2091 = vmatprep.subr.bf16.mxu0 0
        %2092 = vmatpush1.bf16.xpose.msra.mxu0 0
        %2093 = vmatprep.subr.bf16.mxu0 0
        %2094 = vmatpush1.bf16.xpose.msra.mxu0 0
        %2095 = vmatprep.subr.bf16.mxu0 0
        %2096 = vmatpush1.bf16.xpose.msra.mxu0 0
        %2097 = vmatprep.subr.bf16.mxu0 0
        %2098 = vmatpush1.bf16.xpose.msra.mxu0 0
        %2099 = vmatprep.subr.bf16.mxu0 0
        %2100 = vmatpush1.bf16.xpose.msra.mxu0 0
        %2101 = vmatprep.subr.bf16.mxu0 0
        %2102 = vmatpush1.bf16.xpose.msra.mxu0 0
        %2103 = vmatprep.subr.bf16.mxu0 0
        %2104 = vmatpush1.bf16.xpose.msra.mxu0 0
        %2105 = vmatprep.subr.bf16.mxu0 0
        %2106 = vmatpush1.bf16.xpose.msra.mxu0 0
        %2107 = vmatprep.subr.bf16.mxu0 0
        %2108 = vmatpush1.bf16.xpose.msra.mxu0 0
        %2109 = vmatprep.subr.bf16.mxu0 0
        %2110 = vmatpush1.bf16.xpose.msra.mxu0 0
        %2111 = vmatprep.mubr.bf16.mxu0 0
        %2112 = vmatmul.mubr.bf16.gmra.mrb[0].mxu0 %v2065
        %v2113 = vpop.f32.mrb[0].mxu0
        %v2114 = vadd.f32 0.0, %v2113
        %v2115 = vpop.f32.mrb[0].mxu0
        %v2116 = vpop.f32.mrb[0].mxu0
        %v2117 = vadd.f32 0.0, %v2116
        %v2118 = vpop.f32.mrb[0].mxu0
        %2119 = vmatprep.mubr.bf16.mxu0 0
        %2120 = vmatmul.mubr.bf16.gmra.mrb[0].mxu0 %v2068
        %v2121 = vpop.f32.mrb[0].mxu0
        %v2122 = vadd.f32 0.0, %v2121
        %v2123 = vpop.f32.mrb[0].mxu0
        %v2124 = vpop.f32.mrb[0].mxu0
        %v2125 = vadd.f32 0.0, %v2124
        %v2126 = vpop.f32.mrb[0].mxu0
        %2127 = vmatprep.mubr.bf16.mxu0 0
        %2128 = vmatmul.mubr.bf16.gmra.mrb[0].mxu0 %v2071
        %v2129 = vpop.f32.mrb[0].mxu0
        %v2130 = vadd.f32 0.0, %v2129
        %v2131 = vpop.f32.mrb[0].mxu0
        %v2132 = vpop.f32.mrb[0].mxu0
        %v2133 = vadd.f32 0.0, %v2132
        %v2134 = vpop.f32.mrb[0].mxu0
        %2135 = vmatprep.mubr.bf16.mxu0 0
        %2136 = vmatmul.mubr.bf16.gmra.mrb[0].mxu0 %v2074
        %v2137 = vpop.f32.mrb[0].mxu0
        %v2138 = vadd.f32 0.0, %v2137
        %v2139 = vpop.f32.mrb[0].mxu0
        %v2140 = vpop.f32.mrb[0].mxu0
        %v2141 = vadd.f32 0.0, %v2140
        %v2142 = vpop.f32.mrb[0].mxu0
        %2143 = vdwg.mxu0
        %v2144 = vmul.f32 %v2114, 0.25
        %v2145 = vmul.f32 %v2117, 0.25
        %v2146 = vmul.f32 %v2122, 0.25
        %v2147 = vmul.f32 %v2125, 0.25
        %v2148 = vmul.f32 %v2130, 0.25
        %v2149 = vmul.f32 %v2133, 0.25
        %v2150 = vmul.f32 %v2138, 0.25
        %v2151 = vmul.f32 %v2141, 0.25
        %v2152 = vsel %vm1182, %v2144, -inf
        %2153 = vmax.xlane.f32.xlu0 %v2152
        %v2154 = vpop.xlane.xlu0 %2153
        %v2155 = vsel %vm1182, %v2145, -inf
        %2156 = vmax.xlane.f32.xlu0 %v2155
        %v2157 = vpop.xlane.xlu0 %2156
        %v2158 = vsel %vm1182, %v2146, -inf
        %2159 = vmax.xlane.f32.xlu0 %v2158
        %v2160 = vpop.xlane.xlu0 %2159
        %v2161 = vsel %vm1182, %v2147, -inf
        %2162 = vmax.xlane.f32.xlu0 %v2161
        %v2163 = vpop.xlane.xlu0 %2162
        %v2164 = vsel %vm1182, %v2148, -inf
        %2165 = vmax.xlane.f32.xlu0 %v2164
        %v2166 = vpop.xlane.xlu0 %2165
        %v2167 = vsel %vm1182, %v2149, -inf
        %2168 = vmax.xlane.f32.xlu0 %v2167
        %v2169 = vpop.xlane.xlu0 %2168
        %v2170 = vsel %vm1182, %v2150, -inf
        %2171 = vmax.xlane.f32.xlu0 %v2170
        %v2172 = vpop.xlane.xlu0 %2171
        %v2173 = vsel %vm1182, %v2151, -inf
        %2174 = vmax.xlane.f32.xlu0 %v2173
        %v2175 = vpop.xlane.xlu0 %2174
        %v2176 = vsub.f32 %v2144, %v2154
        %v2177 = vsub.f32 %v2145, %v2157
        %v2178 = vsub.f32 %v2146, %v2160
        %v2179 = vsub.f32 %v2147, %v2163
        %v2180 = vsub.f32 %v2148, %v2166
        %v2181 = vsub.f32 %v2149, %v2169
        %v2182 = vsub.f32 %v2150, %v2172
        %v2183 = vsub.f32 %v2151, %v2175
        %v2184 = vmul.f32 %v2176, 1.442695
        %v2185 = vpow.pop %v2184
        %v2186 = vmul.f32 %v2177, 1.442695
        %v2187 = vpow.pop %v2186
        %v2188 = vmul.f32 %v2178, 1.442695
        %v2189 = vpow.pop %v2188
        %v2190 = vmul.f32 %v2179, 1.442695
        %v2191 = vpow.pop %v2190
        %v2192 = vmul.f32 %v2180, 1.442695
        %v2193 = vpow.pop %v2192
        %v2194 = vmul.f32 %v2181, 1.442695
        %v2195 = vpow.pop %v2194
        %v2196 = vmul.f32 %v2182, 1.442695
        %v2197 = vpow.pop %v2196
        %v2198 = vmul.f32 %v2183, 1.442695
        %v2199 = vpow.pop %v2198
        %v2200 = vsel %vm1182, %v2185, 0.0
        %2201 = vadd.xlane.f32.xlu0 %v2200
        %v2202 = vpop.xlane.xlu0 %2201
        %v2203 = vsel %vm1182, %v2187, 0.0
        %2204 = vadd.xlane.f32.xlu0 %v2203
        %v2205 = vpop.xlane.xlu0 %2204
        %v2206 = vsel %vm1182, %v2189, 0.0
        %2207 = vadd.xlane.f32.xlu0 %v2206
        %v2208 = vpop.xlane.xlu0 %2207
        %v2209 = vsel %vm1182, %v2191, 0.0
        %2210 = vadd.xlane.f32.xlu0 %v2209
        %v2211 = vpop.xlane.xlu0 %2210
        %v2212 = vsel %vm1182, %v2193, 0.0
        %2213 = vadd.xlane.f32.xlu0 %v2212
        %v2214 = vpop.xlane.xlu0 %2213
        %v2215 = vsel %vm1182, %v2195, 0.0
        %2216 = vadd.xlane.f32.xlu0 %v2215
        %v2217 = vpop.xlane.xlu0 %2216
        %v2218 = vsel %vm1182, %v2197, 0.0
        %2219 = vadd.xlane.f32.xlu0 %v2218
        %v2220 = vpop.xlane.xlu0 %2219
        %v2221 = vsel %vm1182, %v2199, 0.0
        %2222 = vadd.xlane.f32.xlu0 %v2221
        %v2223 = vpop.xlane.xlu0 %2222
        %v2224 = vrcp.pop %v2202
        %v2225 = vrcp.pop %v2205
        %v2226 = vrcp.pop %v2208
        %v2227 = vrcp.pop %v2211
        %v2228 = vrcp.pop %v2214
        %v2229 = vrcp.pop %v2217
        %v2230 = vrcp.pop %v2220
        %v2231 = vrcp.pop %v2223
        %v2232 = vmul.f32 %v2185, %v2224
        %v2233 = vmul.f32 %v2187, %v2225
        %v2234 = vmul.f32 %v2189, %v2226
        %v2235 = vmul.f32 %v2191, %v2227
        %v2236 = vmul.f32 %v2193, %v2228
        %v2237 = vmul.f32 %v2195, %v2229
        %v2238 = vmul.f32 %v2197, %v2230
        %v2239 = vmul.f32 %v2199, %v2231
        %v2240 = vpack.c.bf16 %v2233, %v2232
        %v2241 = vpack.c.bf16 %v2235, %v2234
        %v2242 = vpack.c.bf16 %v2237, %v2236
        %v2243 = vpack.c.bf16 %v2239, %v2238
        %v2245 = vsel %vm1182, %v2240, 0
        %v2248 = vsel %vm1182, %v2241, 0
        %v2251 = vsel %vm1182, %v2242, 0
        %v2254 = vsel %vm1182, %v2243, 0
        %2256 = vmatprep.subr.bf16.mxu0 0
        %2257 = vmatpush1.bf16.msra.mxu0 %v2056
        %2258 = vmatprep.subr.bf16.mxu0 0
        %2259 = vmatpush1.bf16.msra.mxu0 0
        %2260 = vmatprep.subr.bf16.mxu0 0
        %2261 = vmatpush1.bf16.msra.mxu0 0
        %2262 = vmatprep.subr.bf16.mxu0 0
        %2263 = vmatpush1.bf16.msra.mxu0 0
        %2264 = vmatprep.subr.bf16.mxu0 0
        %2265 = vmatpush1.bf16.msra.mxu0 0
        %2266 = vmatprep.subr.bf16.mxu0 0
        %2267 = vmatpush1.bf16.msra.mxu0 0
        %2268 = vmatprep.subr.bf16.mxu0 0
        %2269 = vmatpush1.bf16.msra.mxu0 0
        %2270 = vmatprep.subr.bf16.mxu0 0
        %2271 = vmatpush1.bf16.msra.mxu0 0
        %2272 = vmatprep.subr.bf16.mxu0 0
        %2273 = vmatpush1.bf16.msra.mxu0 0
        %2274 = vmatprep.subr.bf16.mxu0 0
        %2275 = vmatpush1.bf16.msra.mxu0 0
        %2276 = vmatprep.subr.bf16.mxu0 0
        %2277 = vmatpush1.bf16.msra.mxu0 0
        %2278 = vmatprep.subr.bf16.mxu0 0
        %2279 = vmatpush1.bf16.msra.mxu0 0
        %2280 = vmatprep.subr.bf16.mxu0 0
        %2281 = vmatpush1.bf16.msra.mxu0 0
        %2282 = vmatprep.subr.bf16.mxu0 0
        %2283 = vmatpush1.bf16.msra.mxu0 0
        %2284 = vmatprep.subr.bf16.mxu0 0
        %2285 = vmatpush1.bf16.msra.mxu0 0
        %2286 = vmatprep.subr.bf16.mxu0 0
        %2287 = vmatpush1.bf16.msra.mxu0 0
        %2288 = vmatprep.mubr.bf16.mxu0 0
        %2289 = vmatmul.mubr.bf16.gmra.mrb[0].mxu0 %v2245
        %v2290 = vpop.f32.mrb[0].mxu0
        %v2291 = vadd.f32 0.0, %v2290
        %v2292 = vpop.f32.mrb[0].mxu0
        %v2293 = vpop.f32.mrb[0].mxu0
        %v2294 = vadd.f32 0.0, %v2293
        %v2295 = vpop.f32.mrb[0].mxu0
        %2296 = vmatprep.mubr.bf16.mxu0 0
        %2297 = vmatmul.mubr.bf16.gmra.mrb[0].mxu0 %v2248
        %v2298 = vpop.f32.mrb[0].mxu0
        %v2299 = vadd.f32 0.0, %v2298
        %v2300 = vpop.f32.mrb[0].mxu0
        %v2301 = vpop.f32.mrb[0].mxu0
        %v2302 = vadd.f32 0.0, %v2301
        %v2303 = vpop.f32.mrb[0].mxu0
        %2304 = vmatprep.mubr.bf16.mxu0 0
        %2305 = vmatmul.mubr.bf16.gmra.mrb[0].mxu0 %v2251
        %v2306 = vpop.f32.mrb[0].mxu0
        %v2307 = vadd.f32 0.0, %v2306
        %v2308 = vpop.f32.mrb[0].mxu0
        %v2309 = vpop.f32.mrb[0].mxu0
        %v2310 = vadd.f32 0.0, %v2309
        %v2311 = vpop.f32.mrb[0].mxu0
        %2312 = vmatprep.mubr.bf16.mxu0 0
        %2313 = vmatmul.mubr.bf16.gmra.mrb[0].mxu0 %v2254
        %v2314 = vpop.f32.mrb[0].mxu0
        %v2315 = vadd.f32 0.0, %v2314
        %v2316 = vpop.f32.mrb[0].mxu0
        %v2317 = vpop.f32.mrb[0].mxu0
        %v2318 = vadd.f32 0.0, %v2317
        %v2319 = vpop.f32.mrb[0].mxu0
        %2320 = vdwg.mxu0
        %2321 = vrot.lane.b32.xlu0 %v2054, 64
        %v2322 = vpop.permute.xlu0 %2321
        %2323 = vrot.lane.b32.xlu0 %v2059, 64
        %v2324 = vpop.permute.xlu0 %2323
        %2325 = vrot.lane.b32.xlu0 %v2061, 64
        %v2326 = vpop.permute.xlu0 %2325
        %2327 = vrot.lane.b32.xlu0 %v2063, 64
        %v2328 = vpop.permute.xlu0 %2327
        %2330 = vrot.lane.b32.xlu0 %v2055, 112
        %v2331 = vpop.permute.xlu0 %2330
        %v2333 = vsel %vm1182, %v2322, 0
        %v2336 = vsel %vm1182, %v2324, 0
        %v2339 = vsel %vm1182, %v2326, 0
        %v2342 = vsel %vm1182, %v2328, 0
        %v2345 = vsel %vm1182, %v2331, 0
        %2347 = vmatprep.subr.bf16.mxu0 0
        %2348 = vmatpush1.bf16.xpose.msra.mxu0 %v2345
        %2349 = vmatprep.subr.bf16.mxu0 0
        %2350 = vmatpush1.bf16.xpose.msra.mxu0 0
        %2351 = vmatprep.subr.bf16.mxu0 0
        %2352 = vmatpush1.bf16.xpose.msra.mxu0 0
        %2353 = vmatprep.subr.bf16.mxu0 0
        %2354 = vmatpush1.bf16.xpose.msra.mxu0 0
        %2355 = vmatprep.subr.bf16.mxu0 0
        %2356 = vmatpush1.bf16.xpose.msra.mxu0 0
        %2357 = vmatprep.subr.bf16.mxu0 0
        %2358 = vmatpush1.bf16.xpose.msra.mxu0 0
        %2359 = vmatprep.subr.bf16.mxu0 0
        %2360 = vmatpush1.bf16.xpose.msra.mxu0 0
        %2361 = vmatprep.subr.bf16.mxu0 0
        %2362 = vmatpush1.bf16.xpose.msra.mxu0 0
        %2363 = vmatprep.subr.bf16.mxu0 0
        %2364 = vmatpush1.bf16.xpose.msra.mxu0 0
        %2365 = vmatprep.subr.bf16.mxu0 0
        %2366 = vmatpush1.bf16.xpose.msra.mxu0 0
        %2367 = vmatprep.subr.bf16.mxu0 0
        %2368 = vmatpush1.bf16.xpose.msra.mxu0 0
        %2369 = vmatprep.subr.bf16.mxu0 0
        %2370 = vmatpush1.bf16.xpose.msra.mxu0 0
        %2371 = vmatprep.subr.bf16.mxu0 0
        %2372 = vmatpush1.bf16.xpose.msra.mxu0 0
        %2373 = vmatprep.subr.bf16.mxu0 0
        %2374 = vmatpush1.bf16.xpose.msra.mxu0 0
        %2375 = vmatprep.subr.bf16.mxu0 0
        %2376 = vmatpush1.bf16.xpose.msra.mxu0 0
        %2377 = vmatprep.subr.bf16.mxu0 0
        %2378 = vmatpush1.bf16.xpose.msra.mxu0 0
        %2379 = vmatprep.mubr.bf16.mxu0 0
        %2380 = vmatmul.mubr.bf16.gmra.mrb[0].mxu0 %v2333
        %v2381 = vpop.f32.mrb[0].mxu0
        %v2382 = vadd.f32 0.0, %v2381
        %v2383 = vpop.f32.mrb[0].mxu0
        %v2384 = vpop.f32.mrb[0].mxu0
        %v2385 = vadd.f32 0.0, %v2384
        %v2386 = vpop.f32.mrb[0].mxu0
        %2387 = vmatprep.mubr.bf16.mxu0 0
        %2388 = vmatmul.mubr.bf16.gmra.mrb[0].mxu0 %v2336
        %v2389 = vpop.f32.mrb[0].mxu0
        %v2390 = vadd.f32 0.0, %v2389
        %v2391 = vpop.f32.mrb[0].mxu0
        %v2392 = vpop.f32.mrb[0].mxu0
        %v2393 = vadd.f32 0.0, %v2392
        %v2394 = vpop.f32.mrb[0].mxu0
        %2395 = vmatprep.mubr.bf16.mxu0 0
        %2396 = vmatmul.mubr.bf16.gmra.mrb[0].mxu0 %v2339
        %v2397 = vpop.f32.mrb[0].mxu0
        %v2398 = vadd.f32 0.0, %v2397
        %v2399 = vpop.f32.mrb[0].mxu0
        %v2400 = vpop.f32.mrb[0].mxu0
        %v2401 = vadd.f32 0.0, %v2400
        %v2402 = vpop.f32.mrb[0].mxu0
        %2403 = vmatprep.mubr.bf16.mxu0 0
        %2404 = vmatmul.mubr.bf16.gmra.mrb[0].mxu0 %v2342
        %v2405 = vpop.f32.mrb[0].mxu0
        %v2406 = vadd.f32 0.0, %v2405
        %v2407 = vpop.f32.mrb[0].mxu0
        %v2408 = vpop.f32.mrb[0].mxu0
        %v2409 = vadd.f32 0.0, %v2408
        %v2410 = vpop.f32.mrb[0].mxu0
        %2411 = vdwg.mxu0
        %v2412 = vmul.f32 %v2382, 0.25
        %v2413 = vmul.f32 %v2385, 0.25
        %v2414 = vmul.f32 %v2390, 0.25
        %v2415 = vmul.f32 %v2393, 0.25
        %v2416 = vmul.f32 %v2398, 0.25
        %v2417 = vmul.f32 %v2401, 0.25
        %v2418 = vmul.f32 %v2406, 0.25
        %v2419 = vmul.f32 %v2409, 0.25
        %v2420 = vsel %vm1182, %v2412, -inf
        %2421 = vmax.xlane.f32.xlu0 %v2420
        %v2422 = vpop.xlane.xlu0 %2421
        %v2423 = vsel %vm1182, %v2413, -inf
        %2424 = vmax.xlane.f32.xlu0 %v2423
        %v2425 = vpop.xlane.xlu0 %2424
        %v2426 = vsel %vm1182, %v2414, -inf
        %2427 = vmax.xlane.f32.xlu0 %v2426
        %v2428 = vpop.xlane.xlu0 %2427
        %v2429 = vsel %vm1182, %v2415, -inf
        %2430 = vmax.xlane.f32.xlu0 %v2429
        %v2431 = vpop.xlane.xlu0 %2430
        %v2432 = vsel %vm1182, %v2416, -inf
        %2433 = vmax.xlane.f32.xlu0 %v2432
        %v2434 = vpop.xlane.xlu0 %2433
        %v2435 = vsel %vm1182, %v2417, -inf
        %2436 = vmax.xlane.f32.xlu0 %v2435
        %v2437 = vpop.xlane.xlu0 %2436
        %v2438 = vsel %vm1182, %v2418, -inf
        %2439 = vmax.xlane.f32.xlu0 %v2438
        %v2440 = vpop.xlane.xlu0 %2439
        %v2441 = vsel %vm1182, %v2419, -inf
        %2442 = vmax.xlane.f32.xlu0 %v2441
        %v2443 = vpop.xlane.xlu0 %2442
        %v2444 = vsub.f32 %v2412, %v2422
        %v2445 = vsub.f32 %v2413, %v2425
        %v2446 = vsub.f32 %v2414, %v2428
        %v2447 = vsub.f32 %v2415, %v2431
        %v2448 = vsub.f32 %v2416, %v2434
        %v2449 = vsub.f32 %v2417, %v2437
        %v2450 = vsub.f32 %v2418, %v2440
        %v2451 = vsub.f32 %v2419, %v2443
        %v2452 = vmul.f32 %v2444, 1.442695
        %v2453 = vpow.pop %v2452
        %v2454 = vmul.f32 %v2445, 1.442695
        %v2455 = vpow.pop %v2454
        %v2456 = vmul.f32 %v2446, 1.442695
        %v2457 = vpow.pop %v2456
        %v2458 = vmul.f32 %v2447, 1.442695
        %v2459 = vpow.pop %v2458
        %v2460 = vmul.f32 %v2448, 1.442695
        %v2461 = vpow.pop %v2460
        %v2462 = vmul.f32 %v2449, 1.442695
        %v2463 = vpow.pop %v2462
        %v2464 = vmul.f32 %v2450, 1.442695
        %v2465 = vpow.pop %v2464
        %v2466 = vmul.f32 %v2451, 1.442695
        %v2467 = vpow.pop %v2466
        %v2468 = vsel %vm1182, %v2453, 0.0
        %2469 = vadd.xlane.f32.xlu0 %v2468
        %v2470 = vpop.xlane.xlu0 %2469
        %v2471 = vsel %vm1182, %v2455, 0.0
        %2472 = vadd.xlane.f32.xlu0 %v2471
        %v2473 = vpop.xlane.xlu0 %2472
        %v2474 = vsel %vm1182, %v2457, 0.0
        %2475 = vadd.xlane.f32.xlu0 %v2474
        %v2476 = vpop.xlane.xlu0 %2475
        %v2477 = vsel %vm1182, %v2459, 0.0
        %2478 = vadd.xlane.f32.xlu0 %v2477
        %v2479 = vpop.xlane.xlu0 %2478
        %v2480 = vsel %vm1182, %v2461, 0.0
        %2481 = vadd.xlane.f32.xlu0 %v2480
        %v2482 = vpop.xlane.xlu0 %2481
        %v2483 = vsel %vm1182, %v2463, 0.0
        %2484 = vadd.xlane.f32.xlu0 %v2483
        %v2485 = vpop.xlane.xlu0 %2484
        %v2486 = vsel %vm1182, %v2465, 0.0
        %2487 = vadd.xlane.f32.xlu0 %v2486
        %v2488 = vpop.xlane.xlu0 %2487
        %v2489 = vsel %vm1182, %v2467, 0.0
        %2490 = vadd.xlane.f32.xlu0 %v2489
        %v2491 = vpop.xlane.xlu0 %2490
        %v2492 = vrcp.pop %v2470
        %v2493 = vrcp.pop %v2473
        %v2494 = vrcp.pop %v2476
        %v2495 = vrcp.pop %v2479
        %v2496 = vrcp.pop %v2482
        %v2497 = vrcp.pop %v2485
        %v2498 = vrcp.pop %v2488
        %v2499 = vrcp.pop %v2491
        %v2500 = vmul.f32 %v2453, %v2492
        %v2501 = vmul.f32 %v2455, %v2493
        %v2502 = vmul.f32 %v2457, %v2494
        %v2503 = vmul.f32 %v2459, %v2495
        %v2504 = vmul.f32 %v2461, %v2496
        %v2505 = vmul.f32 %v2463, %v2497
        %v2506 = vmul.f32 %v2465, %v2498
        %v2507 = vmul.f32 %v2467, %v2499
        %v2508 = vpack.c.bf16 %v2501, %v2500
        %v2509 = vpack.c.bf16 %v2503, %v2502
        %v2510 = vpack.c.bf16 %v2505, %v2504
        %v2511 = vpack.c.bf16 %v2507, %v2506
        %2513 = vrot.lane.b32.xlu0 %v2056, 112
        %v2514 = vpop.permute.xlu0 %2513
        %v2517 = vsel %vm1182, %v2508, 0
        %v2520 = vsel %vm1182, %v2509, 0
        %v2523 = vsel %vm1182, %v2510, 0
        %v2526 = vsel %vm1182, %v2511, 0
        %2528 = vmatprep.subr.bf16.mxu0 0
        %2529 = vmatpush1.bf16.msra.mxu0 %v2514
        %2530 = vmatprep.subr.bf16.mxu0 0
        %2531 = vmatpush1.bf16.msra.mxu0 0
        %2532 = vmatprep.subr.bf16.mxu0 0
        %2533 = vmatpush1.bf16.msra.mxu0 0
        %2534 = vmatprep.subr.bf16.mxu0 0
        %2535 = vmatpush1.bf16.msra.mxu0 0
        %2536 = vmatprep.subr.bf16.mxu0 0
        %2537 = vmatpush1.bf16.msra.mxu0 0
        %2538 = vmatprep.subr.bf16.mxu0 0
        %2539 = vmatpush1.bf16.msra.mxu0 0
        %2540 = vmatprep.subr.bf16.mxu0 0
        %2541 = vmatpush1.bf16.msra.mxu0 0
        %2542 = vmatprep.subr.bf16.mxu0 0
        %2543 = vmatpush1.bf16.msra.mxu0 0
        %2544 = vmatprep.subr.bf16.mxu0 0
        %2545 = vmatpush1.bf16.msra.mxu0 0
        %2546 = vmatprep.subr.bf16.mxu0 0
        %2547 = vmatpush1.bf16.msra.mxu0 0
        %2548 = vmatprep.subr.bf16.mxu0 0
        %2549 = vmatpush1.bf16.msra.mxu0 0
        %2550 = vmatprep.subr.bf16.mxu0 0
        %2551 = vmatpush1.bf16.msra.mxu0 0
        %2552 = vmatprep.subr.bf16.mxu0 0
        %2553 = vmatpush1.bf16.msra.mxu0 0
        %2554 = vmatprep.subr.bf16.mxu0 0
        %2555 = vmatpush1.bf16.msra.mxu0 0
        %2556 = vmatprep.subr.bf16.mxu0 0
        %2557 = vmatpush1.bf16.msra.mxu0 0
        %2558 = vmatprep.subr.bf16.mxu0 0
        %2559 = vmatpush1.bf16.msra.mxu0 0
        %2560 = vmatprep.mubr.bf16.mxu0 0
        %2561 = vmatmul.mubr.bf16.gmra.mrb[0].mxu0 %v2517
        %v2562 = vpop.f32.mrb[0].mxu0
        %v2563 = vadd.f32 0.0, %v2562
        %v2564 = vpop.f32.mrb[0].mxu0
        %v2565 = vpop.f32.mrb[0].mxu0
        %v2566 = vadd.f32 0.0, %v2565
        %v2567 = vpop.f32.mrb[0].mxu0
        %2568 = vmatprep.mubr.bf16.mxu0 0
        %2569 = vmatmul.mubr.bf16.gmra.mrb[0].mxu0 %v2520
        %v2570 = vpop.f32.mrb[0].mxu0
        %v2571 = vadd.f32 0.0, %v2570
        %v2572 = vpop.f32.mrb[0].mxu0
        %v2573 = vpop.f32.mrb[0].mxu0
        %v2574 = vadd.f32 0.0, %v2573
        %v2575 = vpop.f32.mrb[0].mxu0
        %2576 = vmatprep.mubr.bf16.mxu0 0
        %2577 = vmatmul.mubr.bf16.gmra.mrb[0].mxu0 %v2523
        %v2578 = vpop.f32.mrb[0].mxu0
        %v2579 = vadd.f32 0.0, %v2578
        %v2580 = vpop.f32.mrb[0].mxu0
        %v2581 = vpop.f32.mrb[0].mxu0
        %v2582 = vadd.f32 0.0, %v2581
        %v2583 = vpop.f32.mrb[0].mxu0
        %2584 = vmatprep.mubr.bf16.mxu0 0
        %2585 = vmatmul.mubr.bf16.gmra.mrb[0].mxu0 %v2526
        %v2586 = vpop.f32.mrb[0].mxu0
        %v2587 = vadd.f32 0.0, %v2586
        %v2588 = vpop.f32.mrb[0].mxu0
        %v2589 = vpop.f32.mrb[0].mxu0
        %v2590 = vadd.f32 0.0, %v2589
        %v2591 = vpop.f32.mrb[0].mxu0
        %2592 = vdwg.mxu0
        %2595 = vrot.lane.b32.xlu0 %v2299, 16
        %v2596 = vpop.permute.xlu0 %2595
        %2597 = vrot.lane.b32.xlu0 %v2302, 16
        %v2598 = vpop.permute.xlu0 %2597
        %2603 = vrot.lane.b32.xlu0 %v2307, 32
        %v2604 = vpop.permute.xlu0 %2603
        %2605 = vrot.lane.b32.xlu0 %v2310, 32
        %v2606 = vpop.permute.xlu0 %2605
        %2611 = vrot.lane.b32.xlu0 %v2315, 48
        %v2612 = vpop.permute.xlu0 %2611
        %2613 = vrot.lane.b32.xlu0 %v2318, 48
        %v2614 = vpop.permute.xlu0 %2613
        %2619 = vrot.lane.b32.xlu0 %v2563, 64
        %v2620 = vpop.permute.xlu0 %2619
        %2621 = vrot.lane.b32.xlu0 %v2566, 64
        %v2622 = vpop.permute.xlu0 %2621
        %2627 = vrot.lane.b32.xlu0 %v2571, 80
        %v2628 = vpop.permute.xlu0 %2627
        %2629 = vrot.lane.b32.xlu0 %v2574, 80
        %v2630 = vpop.permute.xlu0 %2629
        %2635 = vrot.lane.b32.xlu0 %v2579, 96
        %v2636 = vpop.permute.xlu0 %2635
        %2637 = vrot.lane.b32.xlu0 %v2582, 96
        %v2638 = vpop.permute.xlu0 %2637
        %2643 = vrot.lane.b32.xlu0 %v2587, 112
        %v2644 = vpop.permute.xlu0 %2643
        %2645 = vrot.lane.b32.xlu0 %v2590, 112
        %v2646 = vpop.permute.xlu0 %2645
        %v2649 = vsel %vm1182, %v2291, %v2596
        %v2650 = vsel %vm1182, %v2294, %v2598
        %v2651 = vsel %vm1282, %v2649, %v2604
        %v2652 = vsel %vm1282, %v2650, %v2606
        %v2653 = vsel %vm1802, %v2651, %v2612
        %v2654 = vsel %vm1802, %v2652, %v2614
        %v2655 = vsel %vm1805, %v2653, %v2620
        %v2656 = vsel %vm1805, %v2654, %v2622
        %v2657 = vsel %vm1808, %v2655, %v2628
        %v2658 = vsel %vm1808, %v2656, %v2630
        %v2659 = vsel %vm1811, %v2657, %v2636
        %v2660 = vsel %vm1811, %v2658, %v2638
        %v2661 = vsel %vm1814, %v2659, %v2644
        %v2662 = vsel %vm1814, %v2660, %v2646
        %v2663 = vpack.c.bf16 %v2662, %v2661
        %v2664 = vld [vmem:[#allocation15] sm:$0xf]
        %v2665 = vld [vmem:[#allocation15 + $0x4] sm:$0xf]
        %v2666 = vld [vmem:[#allocation15 + $0x8] sm:$0xf]
        %v2667 = vld [vmem:[#allocation15 + $0xc] sm:$0xf]
        %v2668 = vld [vmem:[#allocation15 + $0x10] sm:$0xf]
        %v2669 = vld [vmem:[#allocation15 + $0x14] sm:$0xf]
        %v2670 = vld [vmem:[#allocation15 + $0x18] sm:$0xf]
        %v2671 = vld [vmem:[#allocation15 + $0x1c] sm:$0xf]
        %v2672 = vld [vmem:[#allocation15 + $0x20] sm:$0xf]
        %v2673 = vld [vmem:[#allocation15 + $0x24] sm:$0xf]
        %v2674 = vld [vmem:[#allocation15 + $0x28] sm:$0xf]
        %v2675 = vld [vmem:[#allocation15 + $0x2c] sm:$0xf]
        %v2676 = vld [vmem:[#allocation15 + $0x30] sm:$0xf]
        %v2677 = vld [vmem:[#allocation15 + $0x34] sm:$0xf]
        %v2678 = vld [vmem:[#allocation15 + $0x38] sm:$0xf]
        %v2679 = vld [vmem:[#allocation15 + $0x3c] sm:$0xf]
        %v2696 = vunpack.c.l.b16 %v2664
        %v2697 = vunpack.c.l.b16 %v2665
        %v2698 = vunpack.c.l.b16 %v2666
        %v2699 = vunpack.c.l.b16 %v2667
        %v2700 = vunpack.c.l.b16 %v2668
        %v2701 = vunpack.c.l.b16 %v2669
        %v2702 = vunpack.c.l.b16 %v2670
        %v2703 = vunpack.c.l.b16 %v2671
        %v2704 = vunpack.c.l.b16 %v2672
        %v2705 = vunpack.c.l.b16 %v2673
        %v2706 = vunpack.c.l.b16 %v2674
        %v2707 = vunpack.c.l.b16 %v2675
        %v2708 = vunpack.c.l.b16 %v2676
        %v2709 = vunpack.c.l.b16 %v2677
        %v2710 = vunpack.c.l.b16 %v2678
        %v2711 = vunpack.c.l.b16 %v2679
        %v2712 = vpack.c.b16 %v2697, %v2696
        %v2713 = vpack.c.b16 %v2699, %v2698
        %v2714 = vpack.c.b16 %v2701, %v2700
        %v2715 = vpack.c.b16 %v2703, %v2702
        %v2716 = vpack.c.b16 %v2705, %v2704
        %v2717 = vpack.c.b16 %v2707, %v2706
        %v2718 = vpack.c.b16 %v2709, %v2708
        %v2719 = vpack.c.b16 %v2711, %v2710
        %2728 = vmatprep.subr.bf16.mxu0 0
        %2729 = vmatpush1.bf16.msra.mxu0 %v2712
        %2730 = vmatprep.subr.bf16.mxu0 0
        %2731 = vmatpush1.bf16.msra.mxu0 %v2713
        %2732 = vmatprep.subr.bf16.mxu0 0
        %2733 = vmatpush1.bf16.msra.mxu0 %v2714
        %2734 = vmatprep.subr.bf16.mxu0 0
        %2735 = vmatpush1.bf16.msra.mxu0 %v2715
        %2736 = vmatprep.subr.bf16.mxu0 0
        %2737 = vmatpush1.bf16.msra.mxu0 %v2716
        %2738 = vmatprep.subr.bf16.mxu0 0
        %2739 = vmatpush1.bf16.msra.mxu0 %v2717
        %2740 = vmatprep.subr.bf16.mxu0 0
        %2741 = vmatpush1.bf16.msra.mxu0 %v2718
        %2742 = vmatprep.subr.bf16.mxu0 0
        %2743 = vmatpush1.bf16.msra.mxu0 %v2719
        %2744 = vmatprep.subr.bf16.mxu0 0
        %2745 = vmatpush1.bf16.msra.mxu0 0
        %2746 = vmatprep.subr.bf16.mxu0 0
        %2747 = vmatpush1.bf16.msra.mxu0 0
        %2748 = vmatprep.subr.bf16.mxu0 0
        %2749 = vmatpush1.bf16.msra.mxu0 0
        %2750 = vmatprep.subr.bf16.mxu0 0
        %2751 = vmatpush1.bf16.msra.mxu0 0
        %2752 = vmatprep.subr.bf16.mxu0 0
        %2753 = vmatpush1.bf16.msra.mxu0 0
        %2754 = vmatprep.subr.bf16.mxu0 0
        %2755 = vmatpush1.bf16.msra.mxu0 0
        %2756 = vmatprep.subr.bf16.mxu0 0
        %2757 = vmatpush1.bf16.msra.mxu0 0
        %2758 = vmatprep.subr.bf16.mxu0 0
        %2759 = vmatpush1.bf16.msra.mxu0 0
        %2760 = vmatprep.mubr.bf16.mxu0 0
        %2761 = vmatmul.mubr.bf16.gmra.mrb[0].mxu0 %v2663
        %v2762 = vpop.f32.mrb[0].mxu0
        %v2763 = vadd.f32 0.0, %v2762
        %v2764 = vpop.f32.mrb[0].mxu0
        %v2765 = vpop.f32.mrb[0].mxu0
        %v2766 = vadd.f32 0.0, %v2765
        %v2767 = vpop.f32.mrb[0].mxu0
        %2768 = vdwg.mxu0
        %v2769 = vadd.f32 %v1923, %v2763
        %v2770 = vadd.f32 %v1924, %v2766
        %v2771 = vld [vmem:[%s13] sm:$0x1]
        %v2772 = vmul.f32 %v2769, %v2769
        %v2773 = vmul.f32 %v2770, %v2770
        %2774 = vadd.xlane.f32.xlu0 %v2772
        %v2775 = vpop.xlane.xlu0 %2774
        %2776 = vadd.xlane.f32.xlu0 %v2773
        %v2777 = vpop.xlane.xlu0 %2776
        %v2778 = vmul.f32 %v2775, %v1013
        %v2779 = vmul.f32 %v2777, %v1013
        %v2780 = vadd.f32 %v2778, 1e-06
        %v2781 = vadd.f32 %v2779, 1e-06
        %v2782 = vrsqrt.pop %v2780
        %v2783 = vrsqrt.pop %v2781
        %v2784 = vmul.f32 %v2769, %v2782
        %v2785 = vmul.f32 %v2770, %v2783
        %v2787 = vlaneseq
        %v2788 = vshrl.u32 %v2787, 7
        %v2789 = vsub.s32 0, %v2788
        %v2790 = vrot.slane %v2771, %v2789
        %v2792 = vmul.f32 %v2784, %v2790
        %v2793 = vmul.f32 %v2785, %v2790
        %v2794 = vpack.c.bf16 %v2793, %v2792
        %v2795 = vld [vmem:[#allocation17] sm:$0xff]
        %v2796 = vld [vmem:[#allocation17 + $0x8] sm:$0xff]
        %v2797 = vld [vmem:[#allocation17 + $0x10] sm:$0xff]
        %v2798 = vld [vmem:[#allocation17 + $0x18] sm:$0xff]
        %v2799 = vld [vmem:[#allocation17 + $0x20] sm:$0xff]
        %v2800 = vld [vmem:[#allocation17 + $0x28] sm:$0xff]
        %v2801 = vld [vmem:[#allocation17 + $0x30] sm:$0xff]
        %v2802 = vld [vmem:[#allocation17 + $0x38] sm:$0xff]
        %v2803 = vld [vmem:[#allocation17 + $0x40] sm:$0xff]
        %v2804 = vld [vmem:[#allocation17 + $0x48] sm:$0xff]
        %v2805 = vld [vmem:[#allocation17 + $0x50] sm:$0xff]
        %v2806 = vld [vmem:[#allocation17 + $0x58] sm:$0xff]
        %v2807 = vld [vmem:[#allocation17 + $0x60] sm:$0xff]
        %v2808 = vld [vmem:[#allocation17 + $0x68] sm:$0xff]
        %v2809 = vld [vmem:[#allocation17 + $0x70] sm:$0xff]
        %v2810 = vld [vmem:[#allocation17 + $0x78] sm:$0xff]
        %v2811 = vld [vmem:[#allocation17 + $0x80] sm:$0xff]
        %v2812 = vld [vmem:[#allocation17 + $0x88] sm:$0xff]
        %v2813 = vld [vmem:[#allocation17 + $0x90] sm:$0xff]
        %v2814 = vld [vmem:[#allocation17 + $0x98] sm:$0xff]
        %v2815 = vld [vmem:[#allocation17 + $0xa0] sm:$0xff]
        %v2816 = vld [vmem:[#allocation17 + $0xa8] sm:$0xff]
        %v2817 = vld [vmem:[#allocation17 + $0xb0] sm:$0xff]
        %v2818 = vld [vmem:[#allocation17 + $0xb8] sm:$0xff]
        %v2819 = vld [vmem:[#allocation17 + $0xc0] sm:$0xff]
        %v2820 = vld [vmem:[#allocation17 + $0xc8] sm:$0xff]
        %v2821 = vld [vmem:[#allocation17 + $0xd0] sm:$0xff]
        %v2822 = vld [vmem:[#allocation17 + $0xd8] sm:$0xff]
        %v2823 = vld [vmem:[#allocation17 + $0xe0] sm:$0xff]
        %v2824 = vld [vmem:[#allocation17 + $0xe8] sm:$0xff]
        %v2825 = vld [vmem:[#allocation17 + $0xf0] sm:$0xff]
        %v2826 = vld [vmem:[#allocation17 + $0xf8] sm:$0xff]
        %v2859 = vunpack.c.l.b16 %v2795
        %v2860 = vunpack.c.h.b16 %v2795
        %v2861 = vunpack.c.l.b16 %v2796
        %v2862 = vunpack.c.h.b16 %v2796
        %v2863 = vunpack.c.l.b16 %v2797
        %v2864 = vunpack.c.h.b16 %v2797
        %v2865 = vunpack.c.l.b16 %v2798
        %v2866 = vunpack.c.h.b16 %v2798
        %v2867 = vunpack.c.l.b16 %v2799
        %v2868 = vunpack.c.h.b16 %v2799
        %v2869 = vunpack.c.l.b16 %v2800
        %v2870 = vunpack.c.h.b16 %v2800
        %v2871 = vunpack.c.l.b16 %v2801
        %v2872 = vunpack.c.h.b16 %v2801
        %v2873 = vunpack.c.l.b16 %v2802
        %v2874 = vunpack.c.h.b16 %v2802
        %v2875 = vunpack.c.l.b16 %v2803
        %v2876 = vunpack.c.h.b16 %v2803
        %v2877 = vunpack.c.l.b16 %v2804
        %v2878 = vunpack.c.h.b16 %v2804
        %v2879 = vunpack.c.l.b16 %v2805
        %v2880 = vunpack.c.h.b16 %v2805
        %v2881 = vunpack.c.l.b16 %v2806
        %v2882 = vunpack.c.h.b16 %v2806
        %v2883 = vunpack.c.l.b16 %v2807
        %v2884 = vunpack.c.h.b16 %v2807
        %v2885 = vunpack.c.l.b16 %v2808
        %v2886 = vunpack.c.h.b16 %v2808
        %v2887 = vunpack.c.l.b16 %v2809
        %v2888 = vunpack.c.h.b16 %v2809
        %v2889 = vunpack.c.l.b16 %v2810
        %v2890 = vunpack.c.h.b16 %v2810
        %v2891 = vunpack.c.l.b16 %v2811
        %v2892 = vunpack.c.h.b16 %v2811
        %v2893 = vunpack.c.l.b16 %v2812
        %v2894 = vunpack.c.h.b16 %v2812
        %v2895 = vunpack.c.l.b16 %v2813
        %v2896 = vunpack.c.h.b16 %v2813
        %v2897 = vunpack.c.l.b16 %v2814
        %v2898 = vunpack.c.h.b16 %v2814
        %v2899 = vunpack.c.l.b16 %v2815
        %v2900 = vunpack.c.h.b16 %v2815
        %v2901 = vunpack.c.l.b16 %v2816
        %v2902 = vunpack.c.h.b16 %v2816
        %v2903 = vunpack.c.l.b16 %v2817
        %v2904 = vunpack.c.h.b16 %v2817
        %v2905 = vunpack.c.l.b16 %v2818
        %v2906 = vunpack.c.h.b16 %v2818
        %v2907 = vunpack.c.l.b16 %v2819
        %v2908 = vunpack.c.h.b16 %v2819
        %v2909 = vunpack.c.l.b16 %v2820
        %v2910 = vunpack.c.h.b16 %v2820
        %v2911 = vunpack.c.l.b16 %v2821
        %v2912 = vunpack.c.h.b16 %v2821
        %v2913 = vunpack.c.l.b16 %v2822
        %v2914 = vunpack.c.h.b16 %v2822
        %v2915 = vunpack.c.l.b16 %v2823
        %v2916 = vunpack.c.h.b16 %v2823
        %v2917 = vunpack.c.l.b16 %v2824
        %v2918 = vunpack.c.h.b16 %v2824
        %v2919 = vunpack.c.l.b16 %v2825
        %v2920 = vunpack.c.h.b16 %v2825
        %v2921 = vunpack.c.l.b16 %v2826
        %v2922 = vunpack.c.h.b16 %v2826
        %v2923 = vpack.c.b16 %v2863, %v2859
        %v2924 = vpack.c.b16 %v2864, %v2860
        %v2925 = vpack.c.b16 %v2865, %v2861
        %v2926 = vpack.c.b16 %v2866, %v2862
        %v2927 = vpack.c.b16 %v2871, %v2867
        %v2928 = vpack.c.b16 %v2872, %v2868
        %v2929 = vpack.c.b16 %v2873, %v2869
        %v2930 = vpack.c.b16 %v2874, %v2870
        %v2931 = vpack.c.b16 %v2879, %v2875
        %v2932 = vpack.c.b16 %v2880, %v2876
        %v2933 = vpack.c.b16 %v2881, %v2877
        %v2934 = vpack.c.b16 %v2882, %v2878
        %v2935 = vpack.c.b16 %v2887, %v2883
        %v2936 = vpack.c.b16 %v2888, %v2884
        %v2937 = vpack.c.b16 %v2889, %v2885
        %v2938 = vpack.c.b16 %v2890, %v2886
        %v2939 = vpack.c.b16 %v2895, %v2891
        %v2940 = vpack.c.b16 %v2896, %v2892
        %v2941 = vpack.c.b16 %v2897, %v2893
        %v2942 = vpack.c.b16 %v2898, %v2894
        %v2943 = vpack.c.b16 %v2903, %v2899
        %v2944 = vpack.c.b16 %v2904, %v2900
        %v2945 = vpack.c.b16 %v2905, %v2901
        %v2946 = vpack.c.b16 %v2906, %v2902
        %v2947 = vpack.c.b16 %v2911, %v2907
        %v2948 = vpack.c.b16 %v2912, %v2908
        %v2949 = vpack.c.b16 %v2913, %v2909
        %v2950 = vpack.c.b16 %v2914, %v2910
        %v2951 = vpack.c.b16 %v2919, %v2915
        %v2952 = vpack.c.b16 %v2920, %v2916
        %v2953 = vpack.c.b16 %v2921, %v2917
        %v2954 = vpack.c.b16 %v2922, %v2918
        %2987 = vmatprep.subr.bf16.mxu0 %v2924
        %2988 = vmatpush1.bf16.msra.mxu0 %v2923
        %2989 = vmatprep.subr.bf16.mxu0 %v2928
        %2990 = vmatpush1.bf16.msra.mxu0 %v2927
        %2991 = vmatprep.subr.bf16.mxu0 %v2932
        %2992 = vmatpush1.bf16.msra.mxu0 %v2931
        %2993 = vmatprep.subr.bf16.mxu0 %v2936
        %2994 = vmatpush1.bf16.msra.mxu0 %v2935
        %2995 = vmatprep.subr.bf16.mxu0 %v2940
        %2996 = vmatpush1.bf16.msra.mxu0 %v2939
        %2997 = vmatprep.subr.bf16.mxu0 %v2944
        %2998 = vmatpush1.bf16.msra.mxu0 %v2943
        %2999 = vmatprep.subr.bf16.mxu0 %v2948
        %3000 = vmatpush1.bf16.msra.mxu0 %v2947
        %3001 = vmatprep.subr.bf16.mxu0 %v2952
        %3002 = vmatpush1.bf16.msra.mxu0 %v2951
        %3003 = vmatprep.subr.bf16.mxu0 0
        %3004 = vmatpush1.bf16.msra.mxu0 0
        %3005 = vmatprep.subr.bf16.mxu0 0
        %3006 = vmatpush1.bf16.msra.mxu0 0
        %3007 = vmatprep.subr.bf16.mxu0 0
        %3008 = vmatpush1.bf16.msra.mxu0 0
        %3009 = vmatprep.subr.bf16.mxu0 0
        %3010 = vmatpush1.bf16.msra.mxu0 0
        %3011 = vmatprep.subr.bf16.mxu0 0
        %3012 = vmatpush1.bf16.msra.mxu0 0
        %3013 = vmatprep.subr.bf16.mxu0 0
        %3014 = vmatpush1.bf16.msra.mxu0 0
        %3015 = vmatprep.subr.bf16.mxu0 0
        %3016 = vmatpush1.bf16.msra.mxu0 0
        %3017 = vmatprep.subr.bf16.mxu0 0
        %3018 = vmatpush1.bf16.msra.mxu0 0
        %3019 = vmatprep.mubr.bf16.mxu0 0
        %3020 = vmatmul.mubr.bf16.gmra.mrb[0].mxu0 %v2794
        %v3021 = vpop.f32.mrb[0].mxu0
        %v3022 = vadd.f32 0.0, %v3021
        %v3023 = vpop.f32.mrb[0].mxu0
        %v3024 = vadd.f32 0.0, %v3023
        %v3025 = vpop.f32.mrb[0].mxu0
        %v3026 = vadd.f32 0.0, %v3025
        %v3027 = vpop.f32.mrb[0].mxu0
        %v3028 = vadd.f32 0.0, %v3027
        %3029 = vdwg.mxu0
        %3030 = vmatprep.subr.bf16.mxu0 %v2926
        %3031 = vmatpush1.bf16.msra.mxu0 %v2925
        %3032 = vmatprep.subr.bf16.mxu0 %v2930
        %3033 = vmatpush1.bf16.msra.mxu0 %v2929
        %3034 = vmatprep.subr.bf16.mxu0 %v2934
        %3035 = vmatpush1.bf16.msra.mxu0 %v2933
        %3036 = vmatprep.subr.bf16.mxu0 %v2938
        %3037 = vmatpush1.bf16.msra.mxu0 %v2937
        %3038 = vmatprep.subr.bf16.mxu0 %v2942
        %3039 = vmatpush1.bf16.msra.mxu0 %v2941
        %3040 = vmatprep.subr.bf16.mxu0 %v2946
        %3041 = vmatpush1.bf16.msra.mxu0 %v2945
        %3042 = vmatprep.subr.bf16.mxu0 %v2950
        %3043 = vmatpush1.bf16.msra.mxu0 %v2949
        %3044 = vmatprep.subr.bf16.mxu0 %v2954
        %3045 = vmatpush1.bf16.msra.mxu0 %v2953
        %3046 = vmatprep.subr.bf16.mxu0 0
        %3047 = vmatpush1.bf16.msra.mxu0 0
        %3048 = vmatprep.subr.bf16.mxu0 0
        %3049 = vmatpush1.bf16.msra.mxu0 0
        %3050 = vmatprep.subr.bf16.mxu0 0
        %3051 = vmatpush1.bf16.msra.mxu0 0
        %3052 = vmatprep.subr.bf16.mxu0 0
        %3053 = vmatpush1.bf16.msra.mxu0 0
        %3054 = vmatprep.subr.bf16.mxu0 0
        %3055 = vmatpush1.bf16.msra.mxu0 0
        %3056 = vmatprep.subr.bf16.mxu0 0
        %3057 = vmatpush1.bf16.msra.mxu0 0
        %3058 = vmatprep.subr.bf16.mxu0 0
        %3059 = vmatpush1.bf16.msra.mxu0 0
        %3060 = vmatprep.subr.bf16.mxu0 0
        %3061 = vmatpush1.bf16.msra.mxu0 0
        %3062 = vmatprep.mubr.bf16.mxu0 0
        %3063 = vmatmul.mubr.bf16.gmra.mrb[0].mxu0 %v2794
        %v3064 = vpop.f32.mrb[0].mxu0
        %v3065 = vadd.f32 0.0, %v3064
        %v3066 = vpop.f32.mrb[0].mxu0
        %v3067 = vadd.f32 0.0, %v3066
        %v3068 = vpop.f32.mrb[0].mxu0
        %v3069 = vadd.f32 0.0, %v3068
        %v3070 = vpop.f32.mrb[0].mxu0
        %v3071 = vadd.f32 0.0, %v3070
        %3072 = vdwg.mxu0
        %v3073 = vxor.u32 %v3022, 2147483648
        %v3074 = vxor.u32 %v3024, 2147483648
        %v3075 = vxor.u32 %v3026, 2147483648
        %v3076 = vxor.u32 %v3028, 2147483648
        %v3077 = vmul.f32 %v3073, 1.442695
        %v3078 = vpow.pop %v3077
        %v3079 = vmul.f32 %v3074, 1.442695
        %v3080 = vpow.pop %v3079
        %v3081 = vmul.f32 %v3075, 1.442695
        %v3082 = vpow.pop %v3081
        %v3083 = vmul.f32 %v3076, 1.442695
        %v3084 = vpow.pop %v3083
        %v3085 = vadd.f32 %v3078, 1.0
        %v3086 = vadd.f32 %v3080, 1.0
        %v3087 = vadd.f32 %v3082, 1.0
        %v3088 = vadd.f32 %v3084, 1.0
        %v3089 = vrcp.pop %v3085
        %v3090 = vmul.f32 1.0, %v3089
        %v3091 = vrcp.pop %v3086
        %v3092 = vmul.f32 1.0, %v3091
        %v3093 = vrcp.pop %v3087
        %v3094 = vmul.f32 1.0, %v3093
        %v3095 = vrcp.pop %v3088
        %v3096 = vmul.f32 1.0, %v3095
        %v3097 = vmul.f32 %v3022, %v3090
        %v3098 = vmul.f32 %v3024, %v3092
        %v3099 = vmul.f32 %v3026, %v3094
        %v3100 = vmul.f32 %v3028, %v3096
        %v3101 = vmul.f32 %v3097, %v3065
        %v3102 = vmul.f32 %v3098, %v3067
        %v3103 = vmul.f32 %v3099, %v3069
        %v3104 = vmul.f32 %v3100, %v3071
        %v3105 = vpack.c.bf16 %v3103, %v3101
        %v3106 = vpack.c.bf16 %v3104, %v3102
        %v3107 = vld [vmem:[%s15] sm:$0xf]
        %v3108 = vld [vmem:[%s15 + $0x4] sm:$0xf]
        %v3109 = vld [vmem:[%s15 + $0x8] sm:$0xf]
        %v3110 = vld [vmem:[%s15 + $0xc] sm:$0xf]
        %v3111 = vld [vmem:[%s15 + $0x10] sm:$0xf]
        %v3112 = vld [vmem:[%s15 + $0x14] sm:$0xf]
        %v3113 = vld [vmem:[%s15 + $0x18] sm:$0xf]
        %v3114 = vld [vmem:[%s15 + $0x1c] sm:$0xf]
        %v3115 = vld [vmem:[%s15 + $0x20] sm:$0xf]
        %v3116 = vld [vmem:[%s15 + $0x24] sm:$0xf]
        %v3117 = vld [vmem:[%s15 + $0x28] sm:$0xf]
        %v3118 = vld [vmem:[%s15 + $0x2c] sm:$0xf]
        %v3119 = vld [vmem:[%s15 + $0x30] sm:$0xf]
        %v3120 = vld [vmem:[%s15 + $0x34] sm:$0xf]
        %v3121 = vld [vmem:[%s15 + $0x38] sm:$0xf]
        %v3122 = vld [vmem:[%s15 + $0x3c] sm:$0xf]
        %v3123 = vld [vmem:[%s15 + $0x40] sm:$0xf]
        %v3124 = vld [vmem:[%s15 + $0x44] sm:$0xf]
        %v3125 = vld [vmem:[%s15 + $0x48] sm:$0xf]
        %v3126 = vld [vmem:[%s15 + $0x4c] sm:$0xf]
        %v3127 = vld [vmem:[%s15 + $0x50] sm:$0xf]
        %v3128 = vld [vmem:[%s15 + $0x54] sm:$0xf]
        %v3129 = vld [vmem:[%s15 + $0x58] sm:$0xf]
        %v3130 = vld [vmem:[%s15 + $0x5c] sm:$0xf]
        %v3131 = vld [vmem:[%s15 + $0x60] sm:$0xf]
        %v3132 = vld [vmem:[%s15 + $0x64] sm:$0xf]
        %v3133 = vld [vmem:[%s15 + $0x68] sm:$0xf]
        %v3134 = vld [vmem:[%s15 + $0x6c] sm:$0xf]
        %v3135 = vld [vmem:[%s15 + $0x70] sm:$0xf]
        %v3136 = vld [vmem:[%s15 + $0x74] sm:$0xf]
        %v3137 = vld [vmem:[%s15 + $0x78] sm:$0xf]
        %v3138 = vld [vmem:[%s15 + $0x7c] sm:$0xf]
        %v3171 = vunpack.c.l.b16 %v3107
        %v3172 = vunpack.c.l.b16 %v3108
        %v3173 = vunpack.c.l.b16 %v3109
        %v3174 = vunpack.c.l.b16 %v3110
        %v3175 = vunpack.c.l.b16 %v3111
        %v3176 = vunpack.c.l.b16 %v3112
        %v3177 = vunpack.c.l.b16 %v3113
        %v3178 = vunpack.c.l.b16 %v3114
        %v3179 = vunpack.c.l.b16 %v3115
        %v3180 = vunpack.c.l.b16 %v3116
        %v3181 = vunpack.c.l.b16 %v3117
        %v3182 = vunpack.c.l.b16 %v3118
        %v3183 = vunpack.c.l.b16 %v3119
        %v3184 = vunpack.c.l.b16 %v3120
        %v3185 = vunpack.c.l.b16 %v3121
        %v3186 = vunpack.c.l.b16 %v3122
        %v3187 = vunpack.c.l.b16 %v3123
        %v3188 = vunpack.c.l.b16 %v3124
        %v3189 = vunpack.c.l.b16 %v3125
        %v3190 = vunpack.c.l.b16 %v3126
        %v3191 = vunpack.c.l.b16 %v3127
        %v3192 = vunpack.c.l.b16 %v3128
        %v3193 = vunpack.c.l.b16 %v3129
        %v3194 = vunpack.c.l.b16 %v3130
        %v3195 = vunpack.c.l.b16 %v3131
        %v3196 = vunpack.c.l.b16 %v3132
        %v3197 = vunpack.c.l.b16 %v3133
        %v3198 = vunpack.c.l.b16 %v3134
        %v3199 = vunpack.c.l.b16 %v3135
        %v3200 = vunpack.c.l.b16 %v3136
        %v3201 = vunpack.c.l.b16 %v3137
        %v3202 = vunpack.c.l.b16 %v3138
        %v3203 = vpack.c.b16 %v3172, %v3171
        %v3204 = vpack.c.b16 %v3174, %v3173
        %v3205 = vpack.c.b16 %v3176, %v3175
        %v3206 = vpack.c.b16 %v3178, %v3177
        %v3207 = vpack.c.b16 %v3180, %v3179
        %v3208 = vpack.c.b16 %v3182, %v3181
        %v3209 = vpack.c.b16 %v3184, %v3183
        %v3210 = vpack.c.b16 %v3186, %v3185
        %v3211 = vpack.c.b16 %v3188, %v3187
        %v3212 = vpack.c.b16 %v3190, %v3189
        %v3213 = vpack.c.b16 %v3192, %v3191
        %v3214 = vpack.c.b16 %v3194, %v3193
        %v3215 = vpack.c.b16 %v3196, %v3195
        %v3216 = vpack.c.b16 %v3198, %v3197
        %v3217 = vpack.c.b16 %v3200, %v3199
        %v3218 = vpack.c.b16 %v3202, %v3201
        %3235 = vmatprep.subr.bf16.mxu0 0
        %3236 = vmatpush1.bf16.msra.mxu0 %v3203
        %3237 = vmatprep.subr.bf16.mxu0 0
        %3238 = vmatpush1.bf16.msra.mxu0 %v3204
        %3239 = vmatprep.subr.bf16.mxu0 0
        %3240 = vmatpush1.bf16.msra.mxu0 %v3205
        %3241 = vmatprep.subr.bf16.mxu0 0
        %3242 = vmatpush1.bf16.msra.mxu0 %v3206
        %3243 = vmatprep.subr.bf16.mxu0 0
        %3244 = vmatpush1.bf16.msra.mxu0 %v3207
        %3245 = vmatprep.subr.bf16.mxu0 0
        %3246 = vmatpush1.bf16.msra.mxu0 %v3208
        %3247 = vmatprep.subr.bf16.mxu0 0
        %3248 = vmatpush1.bf16.msra.mxu0 %v3209
        %3249 = vmatprep.subr.bf16.mxu0 0
        %3250 = vmatpush1.bf16.msra.mxu0 %v3210
        %3251 = vmatprep.subr.bf16.mxu0 0
        %3252 = vmatpush1.bf16.msra.mxu0 %v3211
        %3253 = vmatprep.subr.bf16.mxu0 0
        %3254 = vmatpush1.bf16.msra.mxu0 %v3212
        %3255 = vmatprep.subr.bf16.mxu0 0
        %3256 = vmatpush1.bf16.msra.mxu0 %v3213
        %3257 = vmatprep.subr.bf16.mxu0 0
        %3258 = vmatpush1.bf16.msra.mxu0 %v3214
        %3259 = vmatprep.subr.bf16.mxu0 0
        %3260 = vmatpush1.bf16.msra.mxu0 %v3215
        %3261 = vmatprep.subr.bf16.mxu0 0
        %3262 = vmatpush1.bf16.msra.mxu0 %v3216
        %3263 = vmatprep.subr.bf16.mxu0 0
        %3264 = vmatpush1.bf16.msra.mxu0 %v3217
        %3265 = vmatprep.subr.bf16.mxu0 0
        %3266 = vmatpush1.bf16.msra.mxu0 %v3218
        %3267 = vmatprep.mubr.bf16.mxu0 %v3106
        %3268 = vmatmul.mubr.bf16.gmra.mrb[0].mxu0 %v3105
        %v3269 = vpop.f32.mrb[0].mxu0
        %v3270 = vadd.f32 0.0, %v3269
        %v3271 = vpop.f32.mrb[0].mxu0
        %v3272 = vpop.f32.mrb[0].mxu0
        %v3273 = vadd.f32 0.0, %v3272
        %v3274 = vpop.f32.mrb[0].mxu0
        %3275 = vdwg.mxu0
        %v3276 = vadd.f32 %v2769, %v3270
        %v3277 = vadd.f32 %v2770, %v3273
        %3278 = vst [vmem:[%s601] sm:$0xff] %v3276
        %3279 = vst [vmem:[%s601 + $0x8] sm:$0xff] %v3277
        %s3280 = sand.u32 %s378, 1
        %s3281 = scalar_lea.sflag [#allocation8], %s3280
        %s3282 = sand.u32 %s378, 1
        %s3283 = smul.addr %s3282, 16
        %s3284 = scalar_lea.vmem [#allocation18], %s3283
        // Predicated region
        $region117: #{tpu_custom_call.1} parent=83 // pred_check
          %p3285 = pneg %p388
        $region118: #{tpu_custom_call.1} parent=83 // pred_check_branch
          %3287 = sbr.rel (%p3285) target = $region120
        $region119: #{tpu_custom_call.1} parent=83 // pred_region
          %s3288 = smul.u32 2, %s34
          %s3290 = ssub.s32 256, 256
          %3291 = vsyncadd %s3281, %s3290
          %s3292 = smul.addr %s3288, 128
          %s3293 = scalar_lea.hbm %s16, %s3292
          %s3294 = sshll.u32 %s3284, 4
          %s3295 = int_to_ptr.vmem [resolvable:$true] %s3294
          %3300 = dma.vmem_to_hbm [thread:$0]  %s3295, 256, %s3293, %s3281, 128, 128, 8
        $region120: #{tpu_custom_call.1} parent=83 // pred_fallthru
          _
      $region84: #{tpu_custom_call.1} parent=5 // pred_fallthru
        _
      %p3301 = scmp.le.s32.totalorder 2, %s29
      // Predicated region
      $region121: #{tpu_custom_call.1} parent=5 // pred_check
        %p3302 = pneg %p3301
      $region122: #{tpu_custom_call.1} parent=5 // pred_check_branch
        %3304 = sbr.rel (%p3302) target = $region124
      $region123: #{tpu_custom_call.1} parent=5 // pred_region
        %s3305 = ssub.s32 %s29, 2
        // Predicated region
        $region125: #{tpu_custom_call.1} parent=123 // pred_check
          %p3306 = pneg %p394
        $region126: #{tpu_custom_call.1} parent=123 // pred_check_branch
          %3308 = sbr.rel (%p3306) target = $region128
        $region127: #{tpu_custom_call.1} parent=123 // pred_region
          %s3309 = sand.u32 %s379, 1
          %s3310 = scalar_lea.sflag [#allocation8], %s3309
          %s3311 = sand.u32 %s379, 1
          %s3312 = smul.addr %s3311, 16
          %s3313 = scalar_lea.vmem [#allocation18], %s3312
          %3314 = dma.done %s3310, 256
        $region128: #{tpu_custom_call.1} parent=123 // pred_fallthru
          _
      $region124: #{tpu_custom_call.1} parent=5 // pred_fallthru
        _
    $region6: #{tpu_custom_call.1} parent=1 // loop_footer
      %s33 = sadd.s32 1, %s29
    $region7: #{tpu_custom_call.1} parent=1 // loop_footer_branch
      %28 = sbr.rel target = $region3
    $region8: #{tpu_custom_call.1} parent=1 // loop_exit
      _
    %3315 = vsyncpa [#allocation7], 1
    %s3316 = scalar_lea.sflag [#allocation7], 1
    %3317 = vsyncpa %s3316, 1
    %3318 = vsyncpa [#allocation10], 1
    %3319 = vsyncpa [#allocation13], 1
    %3320 = vsyncpa [#allocation16], 1
    %3321 = vsyncpa [#allocation8], 1
    %s3322 = scalar_lea.sflag [#allocation8], 1
    %3323 = vsyncpa %s3322, 1

</llo_original>
